<compile_context>
chip_gen: v7x
topology: tpu7x:2x2x1
jax: 0.10.0
libtpu: 0.0.40
codegen_flags: <defaults>
</compile_context>

<pallas_src>
import functools

import jax
import jax.numpy as jnp
from jax import lax
from jax.experimental import pallas as pl
from jax.experimental.pallas import tpu as pltpu

EPS = 1e-5


def _residual_block_kernel(x_ref, b_ref, bias_ref, g_ref, be_ref,
                           fold_ref, expand_ref, o_ref,
                           h_scr, pad_scr, *, N, H, W, C, Hp):
    """Grid = (2,) over the conv index.  Refs (all lane-dense):
         x_ref       : (N*H, W*C)  f32   residual input (resident both steps)
         b_ref       : (1, 3*W*C, W*C) bf16  banded weights for this conv (dy-stacked)
         bias_ref    : (1, 1, W*C) f32   conv bias tiled over w
         g_ref/be_ref: (1, 1, C)   f32   BN gamma / beta
         fold_ref    : (W*C, C)    f32   per-channel column-fold selector
         expand_ref  : (C, W*C)    f32   per-channel column-expand selector
         o_ref       : (N*H, W*C)  f32   output (written at the last step only)
         h_scr       : (N*H, W*C)  f32   activation carried between the 2 steps
         pad_scr     : (8 + N*Hp, W*C) f32 row-padded activations, Hp % 8 == 0
    """
    i = pl.program_id(0)
    WC = W * C
    inv_cnt = 1.0 / float(N * H * W)
    Mfull = (N - 1) * Hp + H          # rows of the full-batch banded matmul

    @pl.when(i == 0)
    def _init():
        # Zero only the halo / gap rows (they stay zero for both convs; the
        # interior data rows are fully overwritten before every conv).
        pad_scr[0:8, :] = jnp.zeros((8, WC), jnp.float32)
        for n in range(N):
            pad_scr[8 + n * Hp + H:8 + (n + 1) * Hp, :] = (
                jnp.zeros((Hp - H, WC), jnp.float32))
        # Step 0 consumes x; step 1 consumes the carried activation.
        h_scr[...] = x_ref[...]

    # ---- 3x3 conv: write data rows (8-aligned offsets), then 3 full-batch
    #      row-shifted banded matmuls, bf16 x bf16 -> f32 accumulation.
    for n in range(N):
        pad_scr[8 + n * Hp:8 + n * Hp + H, :] = h_scr[n * H:(n + 1) * H, :]

    lhs0 = pad_scr[7:7 + Mfull, :].astype(jnp.bfloat16)   # dy = 0 (top tap)
    lhs1 = pad_scr[8:8 + Mfull, :].astype(jnp.bfloat16)   # dy = 1 (center, aligned)
    lhs2 = pad_scr[9:9 + Mfull, :].astype(jnp.bfloat16)   # dy = 2 (bottom tap)
    acc = jnp.dot(lhs0, b_ref[0, 0 * WC:1 * WC, :],
                  preferred_element_type=jnp.float32)
    acc = acc + jnp.dot(lhs1, b_ref[0, 1 * WC:2 * WC, :],
                        preferred_element_type=jnp.float32)
    acc = acc + jnp.dot(lhs2, b_ref[0, 2 * WC:3 * WC, :],
                        preferred_element_type=jnp.float32)

    # Extract the valid rows per image (8-aligned slices) and add the bias.
    parts = [acc[n * Hp:n * Hp + H, :] for n in range(N)]
    z = parts[0] if N == 1 else jnp.concatenate(parts, axis=0)   # (N*H, WC)
    z = z + bias_ref[0]                                          # f32

    # ---- training-mode BatchNorm (fused stats pass, f32) + ReLU.
    s_row = jnp.sum(z, axis=0, keepdims=True)        # (1, WC)
    q_row = jnp.sum(z * z, axis=0, keepdims=True)    # (1, WC)
    sq = jnp.concatenate([s_row, q_row], axis=0)     # (2, WC) — batched fold
    sq_c = jnp.dot(sq, fold_ref[...], preferred_element_type=jnp.float32)  # (2, C)
    mean_c = sq_c[0:1, :] * inv_cnt
    var_c = sq_c[1:2, :] * inv_cnt - mean_c * mean_c            # biased variance
    scale_c = g_ref[0] * lax.rsqrt(var_c + EPS)                 # (1, C)
    shift_c = be_ref[0] - mean_c * scale_c                      # (1, C)
    ss = jnp.concatenate([scale_c, shift_c], axis=0)            # (2, C) — batched expand
    ss_row = jnp.dot(ss, expand_ref[...], preferred_element_type=jnp.float32)  # (2, WC)
    res = jnp.maximum(z * ss_row[0:1, :] + ss_row[1:2, :], 0.0)

    last = pl.num_programs(0) - 1

    @pl.when(i != last)
    def _carry():
        h_scr[...] = res

    @pl.when(i == last)
    def _finalize():
        o_ref[...] = (res + x_ref[...]).astype(o_ref.dtype)     # residual in f32


def _make_banded(w_hwio, W_dim):
    """Build the 3 banded weight matrices B[dy] with
       B[dy][u*C + ci, w*Cout + co] = W[dy, u-w+1, ci, co] if |u-w| <= 1 else 0.
    Width zero-padding is realized by dropping out-of-range taps."""
    C, Co = w_hwio.shape[2], w_hwio.shape[3]
    u = jnp.arange(W_dim)[:, None]           # source width index
    w = jnp.arange(W_dim)[None, :]           # output width index
    dx = u - w + 1                           # (W, W)
    valid = ((dx >= 0) & (dx <= 2)).astype(w_hwio.dtype)
    dx_c = jnp.clip(dx, 0, 2)
    taps = w_hwio[:, dx_c, :, :]             # (3, W, W, C, Co) indexed (dy, u, w)
    taps = taps * valid[None, :, :, None, None]
    band = jnp.transpose(taps, (0, 1, 3, 2, 4)).reshape(3, W_dim * C, W_dim * Co)
    return band


def prepare_residual_block_params(params, H, W):
    """One-time (per parameter change) construction of the kernel-side weights.
    Hoisted out of the per-call path so the ~3 MiB of gathered/transposed banded
    weights is not rebuilt on every forward call."""
    w1, b1, g1, be1, w2, b2, g2, be2 = params
    C = w1.shape[1]
    WC = W * C

    def hwio(w_oihw):
        return jnp.transpose(w_oihw, (2, 3, 1, 0)).astype(jnp.float32)

    B1 = _make_banded(hwio(w1), W).reshape(3 * WC, WC)
    B2 = _make_banded(hwio(w2), W).reshape(3 * WC, WC)
    B_all = jnp.stack([B1, B2]).astype(jnp.bfloat16)          # (2, 3*WC, WC) bf16
    bias_all = jnp.stack([jnp.tile(b1.astype(jnp.float32), W).reshape(1, WC),
                          jnp.tile(b2.astype(jnp.float32), W).reshape(1, WC)])
    g_all = jnp.stack([g1.astype(jnp.float32).reshape(1, C),
                       g2.astype(jnp.float32).reshape(1, C)])
    be_all = jnp.stack([be1.astype(jnp.float32).reshape(1, C),
                        be2.astype(jnp.float32).reshape(1, C)])
    eye = jnp.eye(C, dtype=jnp.float32)
    fold = jnp.tile(eye, (W, 1))                              # (W*C, C)
    expand = jnp.tile(eye, (1, W))                            # (C, W*C)
    return (B_all, bias_all, g_all, be_all, fold, expand)


@jax.jit
def residual_block(x_nchw, prepared):
    """x_nchw: (N, 32, H, W) float32; `prepared` from prepare_residual_block_params."""
    B_all, bias_all, g_all, be_all, fold, expand = prepared
    N, C, H, W = x_nchw.shape
    WC = W * C
    Hp = ((H + 1 + 7) // 8) * 8          # 8-aligned per-image stride (>= H + 1)

    # NCHW -> lane-dense 2-D (N*H, W*C) (layout plumbing only).
    x2d = jnp.transpose(x_nchw, (0, 2, 3, 1)).reshape(N * H, WC)

    kernel = functools.partial(_residual_block_kernel, N=N, H=H, W=W, C=C, Hp=Hp)

    out2d = pl.pallas_call(
        kernel,
        out_shape=jax.ShapeDtypeStruct((N * H, WC), jnp.float32),
        grid_spec=pltpu.PrefetchScalarGridSpec(
            num_scalar_prefetch=0,
            grid=(2,),                                   # one step per conv
            in_specs=[
                pl.BlockSpec((N * H, WC), lambda i: (0, 0)),       # x (resident)
                pl.BlockSpec((1, 3 * WC, WC), lambda i: (i, 0, 0)),  # banded W (prefetched)
                pl.BlockSpec((1, 1, WC), lambda i: (i, 0, 0)),     # bias
                pl.BlockSpec((1, 1, C), lambda i: (i, 0, 0)),      # gamma
                pl.BlockSpec((1, 1, C), lambda i: (i, 0, 0)),      # beta
                pl.BlockSpec((WC, C), lambda i: (0, 0)),           # fold (resident)
                pl.BlockSpec((C, WC), lambda i: (0, 0)),           # expand (resident)
            ],
            out_specs=pl.BlockSpec((N * H, WC), lambda i: (0, 0)),
            scratch_shapes=[
                pltpu.VMEM((N * H, WC), jnp.float32),        # carried activation
                pltpu.VMEM((8 + N * Hp, WC), jnp.float32),   # row-padded scratch
            ],
        ),
        compiler_params=pltpu.CompilerParams(
            dimension_semantics=("arbitrary",),
            vmem_limit_bytes=32 * 1024 * 1024,
        ),
    )(x2d, B_all, bias_all, g_all, be_all, fold, expand)

    out = out2d.reshape(N, H, W, C)
    return jnp.transpose(out, (0, 3, 1, 2))


def reference(x_nchw, params, conv_dtype=jnp.float32):
    """Pure-JAX reference (NHWC conv + training-mode BN).  With
    conv_dtype=bfloat16 the conv operands are rounded the same way the kernel
    rounds them (weights + conv inputs bf16, f32 accumulation, BN/bias/residual
    in f32), which isolates quantization effects from kernel bugs."""
    w1, b1, g1, be1, w2, b2, g2, be2 = params
    x = jnp.transpose(x_nchw, (0, 2, 3, 1)).astype(jnp.float32)

    def conv(z, w_oihw, b):
        w = jnp.transpose(w_oihw, (2, 3, 1, 0)).astype(conv_dtype)   # OIHW -> HWIO
        y = lax.conv_general_dilated(
            z.astype(conv_dtype), w, window_strides=(1, 1), padding='SAME',
            dimension_numbers=('NHWC', 'HWIO', 'NHWC'),
            preferred_element_type=jnp.float32)
        return y + b.reshape(1, 1, 1, -1).astype(jnp.float32)

    def bn_relu(z, g, be):
        mean = jnp.mean(z, axis=(0, 1, 2), keepdims=True)
        var = jnp.mean(z * z, axis=(0, 1, 2), keepdims=True) - mean * mean
        y = (z - mean) * lax.rsqrt(var + EPS) * g.reshape(1, 1, 1, -1) \
            + be.reshape(1, 1, 1, -1)
        return jnp.maximum(y, 0.0)

    h = bn_relu(conv(x, w1, b1), g1, be1)
    h = bn_relu(conv(h, w2, b2), g2, be2)
    return jnp.transpose(h + x, (0, 3, 1, 2))


if __name__ == "__main__":
    key = jax.random.PRNGKey(0)
    ks = jax.random.split(key, 9)

    N, C, H, W = 2, 32, 16, 16            # C=32 fixed by the module definition
    x = jax.random.normal(ks[0], (N, C, H, W), jnp.float32)

    fan_in = 3 * 3 * C
    # PyTorch OIHW conv weights, per-channel bias / gamma / beta.
    w1 = jax.random.normal(ks[1], (C, C, 3, 3), jnp.float32) / jnp.sqrt(fan_in)
    b1 = 0.1 * jax.random.normal(ks[2], (C,), jnp.float32)
    g1 = 1.0 + 0.1 * jax.random.normal(ks[3], (C,), jnp.float32)
    be1 = 0.1 * jax.random.normal(ks[4], (C,), jnp.float32)
    w2 = jax.random.normal(ks[5], (C, C, 3, 3), jnp.float32) / jnp.sqrt(fan_in)
    b2 = 0.1 * jax.random.normal(ks[6], (C,), jnp.float32)
    g2 = 1.0 + 0.1 * jax.random.normal(ks[7], (C,), jnp.float32)
    be2 = 0.1 * jax.random.normal(ks[8], (C,), jnp.float32)
    params = (w1, b1, g1, be1, w2, b2, g2, be2)

    # One-time weight preparation (hoisted out of the per-call path).
    prepared = prepare_residual_block_params(params, H, W)

    out = jax.block_until_ready(residual_block(x, prepared))
    assert out.shape == (N, C, H, W)

    # (1) tight check vs a reference that quantizes the conv operands to bf16
    #     exactly like the kernel does (validates the kernel math itself);
    # (2) loose check vs the pure-f32 reference (bounds the bf16-weight
    #     quantization effect, which the perf review sanctioned).
    ref_bf16 = reference(x, params, conv_dtype=jnp.bfloat16)
    ref_f32 = reference(x, params, conv_dtype=jnp.float32)
    err_bf16 = float(jnp.max(jnp.abs(out - ref_bf16)))
    err_f32 = float(jnp.max(jnp.abs(out - ref_f32)))
    if err_bf16 > 3e-3:
        raise AssertionError(f"kernel mismatch vs bf16-matched reference: {err_bf16}")
    if err_f32 > 4e-2:
        raise AssertionError(f"kernel mismatch vs f32 reference: {err_f32}")
    print("KERNEL_OK")
</pallas_src>

<mosaic_0001>
module attributes {stable_mosaic.version = 11 : i64} {
  func.func @_residual_block_kernel(%arg0: i32, %arg1: memref<32x512xf32, #tpu.memory_space<vmem>>, %arg2: memref<1x1536x512xbf16, #tpu.memory_space<vmem>>, %arg3: memref<1x1x512xf32, #tpu.memory_space<vmem>>, %arg4: memref<1x1x32xf32, #tpu.memory_space<vmem>>, %arg5: memref<1x1x32xf32, #tpu.memory_space<vmem>>, %arg6: memref<512x32xf32, #tpu.memory_space<vmem>>, %arg7: memref<32x512xf32, #tpu.memory_space<vmem>>, %arg8: memref<32x512xf32, #tpu.memory_space<vmem>>, %arg9: memref<32x512xf32, #tpu.memory_space<vmem>>, %arg10: memref<56x512xf32, #tpu.memory_space<vmem>>) attributes {dimension_semantics = [#tpu.dimension_semantics<arbitrary>], iteration_bounds = array<i64: 2>, scalar_prefetch = 0 : i64, scratch_operands = 2 : i64, tpu.core_type = #tpu.core_type<tc>, window_params = [{pipeline_mode = #tpu.pipeline_mode<synchronous>, transform_indices = @transform_0, window_bounds = array<i64: 32, 512>}, {transform_indices = @transform_1, window_bounds = array<i64: 1, 1536, 512>}, {transform_indices = @transform_2, window_bounds = array<i64: 1, 1, 512>}, {transform_indices = @transform_3, window_bounds = array<i64: 1, 1, 32>}, {transform_indices = @transform_4, window_bounds = array<i64: 1, 1, 32>}, {pipeline_mode = #tpu.pipeline_mode<synchronous>, transform_indices = @transform_5, window_bounds = array<i64: 512, 32>}, {pipeline_mode = #tpu.pipeline_mode<synchronous>, transform_indices = @transform_6, window_bounds = array<i64: 32, 512>}, {pipeline_mode = #tpu.pipeline_mode<synchronous>, transform_indices = @transform_7, window_bounds = array<i64: 32, 512>}]} {
    %c0_i32 = arith.constant 0 : i32
    %0 = arith.cmpi eq, %arg0, %c0_i32 : i32
    %1 = arith.extui %0 : i1 to i32
    %c0_i32_0 = arith.constant 0 : i32
    %2 = arith.cmpi ne, %1, %c0_i32_0 : i32
    scf.if %2 {
      %cst_42 = arith.constant 0.000000e+00 : f32
      %74 = vector.broadcast %cst_42 : f32 to vector<8x512xf32>
      %c0_43 = arith.constant 0 : index
      %c0_44 = arith.constant 0 : index
      %75 = vector.load %arg10[%c0_43, %c0_44] : memref<56x512xf32, #tpu.memory_space<vmem>>, vector<8x512xf32>
      tpu.vector_store %arg10[%c0_43, %c0_44], %74 {strides = array<i32>} : memref<56x512xf32, #tpu.memory_space<vmem>>, vector<8x512xf32>,
      %cst_45 = arith.constant 0.000000e+00 : f32
      %76 = vector.broadcast %cst_45 : f32 to vector<8x512xf32>
      %c24 = arith.constant 24 : index
      %c0_46 = arith.constant 0 : index
      %77 = vector.load %arg10[%c24, %c0_46] : memref<56x512xf32, #tpu.memory_space<vmem>>, vector<8x512xf32>
      tpu.vector_store %arg10[%c24, %c0_46], %76 {strides = array<i32>} : memref<56x512xf32, #tpu.memory_space<vmem>>, vector<8x512xf32>,
      %cst_47 = arith.constant 0.000000e+00 : f32
      %78 = vector.broadcast %cst_47 : f32 to vector<8x512xf32>
      %c48 = arith.constant 48 : index
      %c0_48 = arith.constant 0 : index
      %79 = vector.load %arg10[%c48, %c0_48] : memref<56x512xf32, #tpu.memory_space<vmem>>, vector<8x512xf32>
      tpu.vector_store %arg10[%c48, %c0_48], %78 {strides = array<i32>} : memref<56x512xf32, #tpu.memory_space<vmem>>, vector<8x512xf32>,
      %c0_49 = arith.constant 0 : index
      %c0_50 = arith.constant 0 : index
      %80 = vector.load %arg1[%c0_49, %c0_50] : memref<32x512xf32, #tpu.memory_space<vmem>>, vector<32x512xf32>
      %c0_51 = arith.constant 0 : index
      %c0_52 = arith.constant 0 : index
      %81 = vector.load %arg9[%c0_51, %c0_52] : memref<32x512xf32, #tpu.memory_space<vmem>>, vector<32x512xf32>
      tpu.vector_store %arg9[%c0_51, %c0_52], %80 {strides = array<i32>} : memref<32x512xf32, #tpu.memory_space<vmem>>, vector<32x512xf32>,
    } else {
    }
    %c0 = arith.constant 0 : index
    %c0_1 = arith.constant 0 : index
    %3 = vector.load %arg9[%c0, %c0_1] : memref<32x512xf32, #tpu.memory_space<vmem>>, vector<16x512xf32>
    %c8 = arith.constant 8 : index
    %c0_2 = arith.constant 0 : index
    %4 = vector.load %arg10[%c8, %c0_2] : memref<56x512xf32, #tpu.memory_space<vmem>>, vector<16x512xf32>
    tpu.vector_store %arg10[%c8, %c0_2], %3 {strides = array<i32>} : memref<56x512xf32, #tpu.memory_space<vmem>>, vector<16x512xf32>,
    %c16 = arith.constant 16 : index
    %c0_3 = arith.constant 0 : index
    %5 = vector.load %arg9[%c16, %c0_3] : memref<32x512xf32, #tpu.memory_space<vmem>>, vector<16x512xf32>
    %c32 = arith.constant 32 : index
    %c0_4 = arith.constant 0 : index
    %6 = vector.load %arg10[%c32, %c0_4] : memref<56x512xf32, #tpu.memory_space<vmem>>, vector<16x512xf32>
    tpu.vector_store %arg10[%c32, %c0_4], %5 {strides = array<i32>} : memref<56x512xf32, #tpu.memory_space<vmem>>, vector<16x512xf32>,
    %c7 = arith.constant 7 : index
    %c0_5 = arith.constant 0 : index
    %7 = vector.load %arg10[%c7, %c0_5] : memref<56x512xf32, #tpu.memory_space<vmem>>, vector<40x512xf32>
    %8 = arith.truncf %7 : vector<40x512xf32> to vector<40x512xbf16>
    %c8_6 = arith.constant 8 : index
    %c0_7 = arith.constant 0 : index
    %9 = vector.load %arg10[%c8_6, %c0_7] : memref<56x512xf32, #tpu.memory_space<vmem>>, vector<40x512xf32>
    %10 = arith.truncf %9 : vector<40x512xf32> to vector<40x512xbf16>
    %c9 = arith.constant 9 : index
    %c0_8 = arith.constant 0 : index
    %11 = vector.load %arg10[%c9, %c0_8] : memref<56x512xf32, #tpu.memory_space<vmem>>, vector<40x512xf32>
    %12 = arith.truncf %11 : vector<40x512xf32> to vector<40x512xbf16>
    %c0_9 = arith.constant 0 : index
    %c0_10 = arith.constant 0 : index
    %c0_11 = arith.constant 0 : index
    %13 = vector.load %arg2[%c0_9, %c0_10, %c0_11] : memref<1x1536x512xbf16, #tpu.memory_space<vmem>>, vector<1x512x512xbf16>
    %14 = vector.shape_cast %13 : vector<1x512x512xbf16> to vector<512x512xbf16>
    %cst = arith.constant dense<0.000000e+00> : vector<40x512xf32>
    %15 = tpu.matmul %8, %14, %cst {dimension_numbers = #tpu.dot_dimension_numbers<[1], [0], [0], [1], [0, 0, 1, 1], [], []>} : vector<40x512xbf16>, vector<512x512xbf16>, vector<40x512xf32> -> vector<40x512xf32>
    %c0_12 = arith.constant 0 : index
    %c512 = arith.constant 512 : index
    %c0_13 = arith.constant 0 : index
    %16 = vector.load %arg2[%c0_12, %c512, %c0_13] : memref<1x1536x512xbf16, #tpu.memory_space<vmem>>, vector<1x512x512xbf16>
    %17 = vector.shape_cast %16 : vector<1x512x512xbf16> to vector<512x512xbf16>
    %cst_14 = arith.constant dense<0.000000e+00> : vector<40x512xf32>
    %18 = tpu.matmul %10, %17, %cst_14 {dimension_numbers = #tpu.dot_dimension_numbers<[1], [0], [0], [1], [0, 0, 1, 1], [], []>} : vector<40x512xbf16>, vector<512x512xbf16>, vector<40x512xf32> -> vector<40x512xf32>
    %19 = arith.addf %15, %18 : vector<40x512xf32>
    %c0_15 = arith.constant 0 : index
    %c1024 = arith.constant 1024 : index
    %c0_16 = arith.constant 0 : index
    %20 = vector.load %arg2[%c0_15, %c1024, %c0_16] : memref<1x1536x512xbf16, #tpu.memory_space<vmem>>, vector<1x512x512xbf16>
    %21 = vector.shape_cast %20 : vector<1x512x512xbf16> to vector<512x512xbf16>
    %cst_17 = arith.constant dense<0.000000e+00> : vector<40x512xf32>
    %22 = tpu.matmul %12, %21, %cst_17 {dimension_numbers = #tpu.dot_dimension_numbers<[1], [0], [0], [1], [0, 0, 1, 1], [], []>} : vector<40x512xbf16>, vector<512x512xbf16>, vector<40x512xf32> -> vector<40x512xf32>
    %23 = arith.addf %19, %22 : vector<40x512xf32>
    %24 = vector.extract_strided_slice %23 {offsets = [0, 0], sizes = [16, 512], strides = [1, 1]} : vector<40x512xf32> to vector<16x512xf32>
    %25 = vector.extract_strided_slice %23 {offsets = [24, 0], sizes = [16, 512], strides = [1, 1]} : vector<40x512xf32> to vector<16x512xf32>
    %26 = tpu.concatenate %24, %25 in 0 : vector<16x512xf32>, vector<16x512xf32> -> vector<32x512xf32>
    %c0_18 = arith.constant 0 : index
    %c0_19 = arith.constant 0 : index
    %c0_20 = arith.constant 0 : index
    %27 = vector.load %arg3[%c0_18, %c0_19, %c0_20] : memref<1x1x512xf32, #tpu.memory_space<vmem>>, vector<1x1x512xf32>
    %28 = vector.shape_cast %27 : vector<1x1x512xf32> to vector<1x512xf32>
    %29 = vector.broadcast %28 : vector<1x512xf32> to vector<32x512xf32>
    %30 = arith.addf %26, %29 : vector<32x512xf32>
    %cst_21 = arith.constant dense<0.000000e+00> : vector<512xf32>
    %31 = vector.multi_reduction <add>, %30, %cst_21 [0] : vector<32x512xf32> to vector<512xf32>
    %32 = vector.shape_cast %31 : vector<512xf32> to vector<1x512xf32>
    %33 = arith.mulf %30, %30 : vector<32x512xf32>
    %cst_22 = arith.constant dense<0.000000e+00> : vector<512xf32>
    %34 = vector.multi_reduction <add>, %33, %cst_22 [0] : vector<32x512xf32> to vector<512xf32>
    %35 = vector.shape_cast %34 : vector<512xf32> to vector<1x512xf32>
    %36 = tpu.concatenate %32, %35 in 0 : vector<1x512xf32>, vector<1x512xf32> -> vector<2x512xf32>
    %c0_23 = arith.constant 0 : index
    %c0_24 = arith.constant 0 : index
    %37 = vector.load %arg6[%c0_23, %c0_24] : memref<512x32xf32, #tpu.memory_space<vmem>>, vector<512x32xf32>
    %cst_25 = arith.constant dense<0.000000e+00> : vector<2x32xf32>
    %38 = tpu.matmul %36, %37, %cst_25 {dimension_numbers = #tpu.dot_dimension_numbers<[1], [0], [0], [1], [0, 0, 1, 1], [], []>} : vector<2x512xf32>, vector<512x32xf32>, vector<2x32xf32> -> vector<2x32xf32>
    %39 = vector.extract_strided_slice %38 {offsets = [0, 0], sizes = [1, 32], strides = [1, 1]} : vector<2x32xf32> to vector<1x32xf32>
    %cst_26 = arith.constant 0.001953125 : f32
    %40 = vector.broadcast %cst_26 : f32 to vector<1x32xf32>
    %41 = arith.mulf %39, %40 : vector<1x32xf32>
    %42 = vector.extract_strided_slice %38 {offsets = [1, 0], sizes = [1, 32], strides = [1, 1]} : vector<2x32xf32> to vector<1x32xf32>
    %cst_27 = arith.constant 0.001953125 : f32
    %43 = vector.broadcast %cst_27 : f32 to vector<1x32xf32>
    %44 = arith.mulf %42, %43 : vector<1x32xf32>
    %45 = arith.mulf %41, %41 : vector<1x32xf32>
    %46 = arith.subf %44, %45 : vector<1x32xf32>
    %c0_28 = arith.constant 0 : index
    %c0_29 = arith.constant 0 : index
    %c0_30 = arith.constant 0 : index
    %47 = vector.load %arg4[%c0_28, %c0_29, %c0_30] : memref<1x1x32xf32, #tpu.memory_space<vmem>>, vector<1x1x32xf32>
    %48 = vector.shape_cast %47 : vector<1x1x32xf32> to vector<1x32xf32>
    %cst_31 = arith.constant 9.99999974E-6 : f32
    %49 = vector.broadcast %cst_31 : f32 to vector<1x32xf32>
    %50 = arith.addf %46, %49 : vector<1x32xf32>
    %51 = math.rsqrt %50 : vector<1x32xf32>
    %52 = arith.mulf %48, %51 : vector<1x32xf32>
    %c0_32 = arith.constant 0 : index
    %c0_33 = arith.constant 0 : index
    %c0_34 = arith.constant 0 : index
    %53 = vector.load %arg5[%c0_32, %c0_33, %c0_34] : memref<1x1x32xf32, #tpu.memory_space<vmem>>, vector<1x1x32xf32>
    %54 = vector.shape_cast %53 : vector<1x1x32xf32> to vector<1x32xf32>
    %55 = arith.mulf %41, %52 : vector<1x32xf32>
    %56 = arith.subf %54, %55 : vector<1x32xf32>
    %57 = tpu.concatenate %52, %56 in 0 : vector<1x32xf32>, vector<1x32xf32> -> vector<2x32xf32>
    %c0_35 = arith.constant 0 : index
    %c0_36 = arith.constant 0 : index
    %58 = vector.load %arg7[%c0_35, %c0_36] : memref<32x512xf32, #tpu.memory_space<vmem>>, vector<32x512xf32>
    %cst_37 = arith.constant dense<0.000000e+00> : vector<2x512xf32>
    %59 = tpu.matmul %57, %58, %cst_37 {dimension_numbers = #tpu.dot_dimension_numbers<[1], [0], [0], [1], [0, 0, 1, 1], [], []>} : vector<2x32xf32>, vector<32x512xf32>, vector<2x512xf32> -> vector<2x512xf32>
    %60 = vector.extract_strided_slice %59 {offsets = [0, 0], sizes = [1, 512], strides = [1, 1]} : vector<2x512xf32> to vector<1x512xf32>
    %61 = vector.broadcast %60 : vector<1x512xf32> to vector<32x512xf32>
    %62 = arith.mulf %30, %61 : vector<32x512xf32>
    %63 = vector.extract_strided_slice %59 {offsets = [1, 0], sizes = [1, 512], strides = [1, 1]} : vector<2x512xf32> to vector<1x512xf32>
    %64 = vector.broadcast %63 : vector<1x512xf32> to vector<32x512xf32>
    %65 = arith.addf %62, %64 : vector<32x512xf32>
    %cst_38 = arith.constant 0.000000e+00 : f32
    %66 = vector.broadcast %cst_38 : f32 to vector<32x512xf32>
    %67 = arith.maximumf %65, %66 : vector<32x512xf32>
    %c1_i32 = arith.constant 1 : i32
    %68 = arith.cmpi ne, %arg0, %c1_i32 : i32
    %69 = arith.extui %68 : i1 to i32
    %c0_i32_39 = arith.constant 0 : i32
    %70 = arith.cmpi ne, %69, %c0_i32_39 : i32
    scf.if %70 {
      %c0_42 = arith.constant 0 : index
      %c0_43 = arith.constant 0 : index
      %74 = vector.load %arg9[%c0_42, %c0_43] : memref<32x512xf32, #tpu.memory_space<vmem>>, vector<32x512xf32>
      tpu.vector_store %arg9[%c0_42, %c0_43], %67 {strides = array<i32>} : memref<32x512xf32, #tpu.memory_space<vmem>>, vector<32x512xf32>,
    } else {
    }
    %c1_i32_40 = arith.constant 1 : i32
    %71 = arith.cmpi eq, %arg0, %c1_i32_40 : i32
    %72 = arith.extui %71 : i1 to i32
    %c0_i32_41 = arith.constant 0 : i32
    %73 = arith.cmpi ne, %72, %c0_i32_41 : i32
    scf.if %73 {
      %c0_42 = arith.constant 0 : index
      %c0_43 = arith.constant 0 : index
      %74 = vector.load %arg1[%c0_42, %c0_43] : memref<32x512xf32, #tpu.memory_space<vmem>>, vector<32x512xf32>
      %75 = arith.addf %67, %74 : vector<32x512xf32>
      %c0_44 = arith.constant 0 : index
      %c0_45 = arith.constant 0 : index
      %76 = vector.load %arg8[%c0_44, %c0_45] : memref<32x512xf32, #tpu.memory_space<vmem>>, vector<32x512xf32>
      tpu.vector_store %arg8[%c0_44, %c0_45], %75 {strides = array<i32>} : memref<32x512xf32, #tpu.memory_space<vmem>>, vector<32x512xf32>,
    } else {
    }
    return
  }
  func.func @transform_0(%arg0: i32) -> (i32, i32) {
    %c0_i32 = arith.constant 0 : i32
    %c0_i32_0 = arith.constant 0 : i32
    %c0_i32_1 = arith.constant 0 : i32
    return %c0_i32, %c0_i32_0 : i32, i32
  }
  func.func @transform_1(%arg0: i32) -> (i32, i32, i32) {
    %c0_i32 = arith.constant 0 : i32
    %c0_i32_0 = arith.constant 0 : i32
    %c0_i32_1 = arith.constant 0 : i32
    return %arg0, %c0_i32, %c0_i32_0 : i32, i32, i32
  }
  func.func @transform_2(%arg0: i32) -> (i32, i32, i32) {
    %c0_i32 = arith.constant 0 : i32
    %c0_i32_0 = arith.constant 0 : i32
    %c0_i32_1 = arith.constant 0 : i32
    return %arg0, %c0_i32, %c0_i32_0 : i32, i32, i32
  }
  func.func @transform_3(%arg0: i32) -> (i32, i32, i32) {
    %c0_i32 = arith.constant 0 : i32
    %c0_i32_0 = arith.constant 0 : i32
    %c0_i32_1 = arith.constant 0 : i32
    return %arg0, %c0_i32, %c0_i32_0 : i32, i32, i32
  }
  func.func @transform_4(%arg0: i32) -> (i32, i32, i32) {
    %c0_i32 = arith.constant 0 : i32
    %c0_i32_0 = arith.constant 0 : i32
    %c0_i32_1 = arith.constant 0 : i32
    return %arg0, %c0_i32, %c0_i32_0 : i32, i32, i32
  }
  func.func @transform_5(%arg0: i32) -> (i32, i32) {
    %c0_i32 = arith.constant 0 : i32
    %c0_i32_0 = arith.constant 0 : i32
    %c0_i32_1 = arith.constant 0 : i32
    return %c0_i32, %c0_i32_0 : i32, i32
  }
  func.func @transform_6(%arg0: i32) -> (i32, i32) {
    %c0_i32 = arith.constant 0 : i32
    %c0_i32_0 = arith.constant 0 : i32
    %c0_i32_1 = arith.constant 0 : i32
    return %c0_i32, %c0_i32_0 : i32, i32
  }
  func.func @transform_7(%arg0: i32) -> (i32, i32) {
    %c0_i32 = arith.constant 0 : i32
    %c0_i32_0 = arith.constant 0 : i32
    %c0_i32_1 = arith.constant 0 : i32
    return %c0_i32, %c0_i32_0 : i32, i32
  }
}

</mosaic_0001>

<llo_original>
// kernel: residual_block.1
$region0: #{residual_block.1}
  #allocation0 [shape = 'u32[]', space=smem, size = 0x4, offset = 0x4, fixed_abs, tag = 'smem constant byte address 0x4 - core index']
  #allocation1 [shape = 'u32[144,128]{1,0:T(1,128)}', space=vmem, size = 0x12000, scoped, tag = 'internal scratch']
  #allocation2 [shape = 'f32[32,512]{1,0:T(8,128)}', space=vmem, size = 0x10000, scoped, tag = 'scratch operand']
  #allocation3 [shape = 'f32[56,512]{1,0:T(8,128)}', space=vmem, size = 0x1c000, scoped, tag = 'scratch operand']
  %s0 = inlined_call_operand.vmem [shape: f32[32,512], index: 0, kind: input, shape index: {}]
  %s1 = inlined_call_operand.hbm [shape: bf16[2,1536,512], index: 1, kind: input, shape index: {}]
  %s2 = inlined_call_operand.hbm [shape: f32[2,1,512], index: 2, kind: input, shape index: {}]
  %s3 = inlined_call_operand.hbm [shape: f32[2,1,32], index: 3, kind: input, shape index: {}]
  %s4 = inlined_call_operand.hbm [shape: f32[2,1,32], index: 4, kind: input, shape index: {}]
  %s5 = inlined_call_operand.vmem [shape: f32[512,32], index: 5, kind: input, shape index: {}]
  %s6 = inlined_call_operand.hbm [shape: f32[32,512], index: 6, kind: input, shape index: {}]
  %s7 = inlined_call_operand.vmem [shape: f32[32,512], index: 7, kind: output, shape index: {}]
  %s8 = sld [smem:[#allocation0]]
  $region93: #{residual_block.1} parent=0
    _
  %s10 = ssub.s32 1, %s8
  %s11 = scalar_select 0, %s10, %s8
  $region1: #{residual_block.1} parent=0
    #allocation4 [shape = 'u8[3145728]{0}', space=vmem, size = 0x300000, scoped, tag = 'input window, operand 1']
    #allocation5 [shape = 's32[2]{0}', space=sflag, size = 0x8, scoped, tag = 'scoped memory for residual_block.1']
    #allocation6 [shape = 'u8[4096]{0}', space=vmem, size = 0x1000, scoped, tag = 'input window, operand 2']
    #allocation7 [shape = 's32[2]{0}', space=sflag, size = 0x8, scoped, tag = 'scoped memory for residual_block.1']
    #allocation8 [shape = 'u8[1024]{0}', space=vmem, size = 0x400, scoped, tag = 'input window, operand 3']
    #allocation9 [shape = 'u8[1024]{0}', space=vmem, size = 0x400, scoped, tag = 'input window, operand 4']
    #allocation10 [shape = 's32[2]{0}', space=sflag, size = 0x8, scoped, tag = 'scoped memory for residual_block.1']
    #allocation11 [shape = 'u8[65536]{0}', space=vmem, size = 0x10000, scoped, tag = 'input window, operand 6, single buffered']
    %12 = vsyncpa [#allocation5], 0
    %s13 = scalar_lea.sflag [#allocation5], 1
    %14 = vsyncpa %s13, 0
    %15 = vsyncpa [#allocation7], 0
    %s16 = scalar_lea.sflag [#allocation7], 1
    %17 = vsyncpa %s16, 0
    %18 = vsyncpa [#allocation10], 0
    %s19 = scalar_lea.sflag [#allocation10], 1
    %20 = vsyncpa %s19, 0
    loop: start=0, step=1, limit=4
    $region2: #{residual_block.1} parent=1 // loop_pre_header
      _
    $region3: #{residual_block.1} parent=1 // loop_header
      %s22 = sphi 0, %s26
      %p23 = scmp.ge.s32.totalorder %s22, 4
      %s30 = sphi 0, %s30
      %s32 = sphi 0, %s30
      %s33 = sphi 0, %s32
      %s47 = sphi 0, %s33
      %s53 = sphi 0, %s55
      %s56 = sphi 0, %s53
      %s57 = sphi 0, %s56
      %s73 = sphi 0, %s57
      %s79 = sphi 0, %s81
      %s82 = sphi 0, %s79
      %s83 = sphi 0, %s82
      %s99 = sphi 0, %s83
      %s105 = sphi 0, %s107
      %s108 = sphi 0, %s105
      %s109 = sphi 0, %s108
      %s125 = sphi 0, %s109
      %s131 = sphi 0, %s133
      %s134 = sphi 0, %s131
      %s135 = sphi 0, %s134
      %s151 = sphi 0, %s135
      %s155 = sphi 0, %s155
      %s157 = sphi 0, %s155
      %s158 = sphi 0, %s157
      %s172 = sphi 0, %s158
      %s176 = sphi 0, %s176
      %s178 = sphi 0, %s176
      %s179 = sphi 0, %s178
      %s193 = sphi 0, %s179
      %s197 = sphi 0, %s197
      %s199 = sphi 0, %s197
      %s200 = sphi 0, %s199
      %s214 = sphi 0, %s200
    $region4: #{residual_block.1} parent=1 // loop_header_branch
      %25 = sbr.rel (%p23) target = $region8
    $region5: #{residual_block.1} parent=1 // loop_body
      %s27 = ssub.s32 %s22, 1
      %s28 = ssub.s32 %s22, 2
      %s29 = sadd.s32 %s22, 1
      %s31 = sadd.s32 %s30, 1
      %p34 = scmp.eq.s32.totalorder %s22, 1
      %p35 = scmp.ne.s32.totalorder %s30, %s32
      %p36 = scmp.eq.s32.totalorder %s22, 0
      %p37 = por %p35, %p36
      %p38 = scmp.ne.s32.totalorder %s30, %s32
      %p39 = scmp.eq.s32.totalorder %s27, 1
      %p40 = por %p38, %p39
      %p41 = scmp.ne.s32.totalorder %s32, %s33
      %p42 = scmp.eq.s32.totalorder %s27, 0
      %p43 = por %p41, %p42
      %p44 = scmp.ne.s32.totalorder %s32, %s33
      %p45 = scmp.eq.s32.totalorder %s28, 1
      %p46 = por %p44, %p45
      %p48 = scmp.ne.s32.totalorder %s33, %s47
      %p49 = scmp.eq.s32.totalorder %s28, 0
      %p50 = por %p48, %p49
      %s51 = ssub.s32 %s22, %s29
      %p52 = scmp.eq.s32.totalorder %s51, 0
      %s54 = sadd.s32 %s53, 1
      %s55 = scalar_select %p52, %s53, %s54
      %p58 = pneg %p52
      %p59 = scmp.eq.s32.totalorder %s22, 1
      %p60 = por %p58, %p59
      %p61 = scmp.ne.s32.totalorder %s53, %s56
      %p62 = scmp.eq.s32.totalorder %s22, 0
      %p63 = por %p61, %p62
      %p64 = scmp.ne.s32.totalorder %s53, %s56
      %p65 = scmp.eq.s32.totalorder %s27, 1
      %p66 = por %p64, %p65
      %p67 = scmp.ne.s32.totalorder %s56, %s57
      %p68 = scmp.eq.s32.totalorder %s27, 0
      %p69 = por %p67, %p68
      %p70 = scmp.ne.s32.totalorder %s56, %s57
      %p71 = scmp.eq.s32.totalorder %s28, 1
      %p72 = por %p70, %p71
      %p74 = scmp.ne.s32.totalorder %s57, %s73
      %p75 = scmp.eq.s32.totalorder %s28, 0
      %p76 = por %p74, %p75
      %s77 = ssub.s32 %s22, %s29
      %p78 = scmp.eq.s32.totalorder %s77, 0
      %s80 = sadd.s32 %s79, 1
      %s81 = scalar_select %p78, %s79, %s80
      %p84 = pneg %p78
      %p85 = scmp.eq.s32.totalorder %s22, 1
      %p86 = por %p84, %p85
      %p87 = scmp.ne.s32.totalorder %s79, %s82
      %p88 = scmp.eq.s32.totalorder %s22, 0
      %p89 = por %p87, %p88
      %p90 = scmp.ne.s32.totalorder %s79, %s82
      %p91 = scmp.eq.s32.totalorder %s27, 1
      %p92 = por %p90, %p91
      %p93 = scmp.ne.s32.totalorder %s82, %s83
      %p94 = scmp.eq.s32.totalorder %s27, 0
      %p95 = por %p93, %p94
      %p96 = scmp.ne.s32.totalorder %s82, %s83
      %p97 = scmp.eq.s32.totalorder %s28, 1
      %p98 = por %p96, %p97
      %p100 = scmp.ne.s32.totalorder %s83, %s99
      %p101 = scmp.eq.s32.totalorder %s28, 0
      %p102 = por %p100, %p101
      %s103 = ssub.s32 %s22, %s29
      %p104 = scmp.eq.s32.totalorder %s103, 0
      %s106 = sadd.s32 %s105, 1
      %s107 = scalar_select %p104, %s105, %s106
      %p110 = pneg %p104
      %p111 = scmp.eq.s32.totalorder %s22, 1
      %p112 = por %p110, %p111
      %p113 = scmp.ne.s32.totalorder %s105, %s108
      %p114 = scmp.eq.s32.totalorder %s22, 0
      %p115 = por %p113, %p114
      %p116 = scmp.ne.s32.totalorder %s105, %s108
      %p117 = scmp.eq.s32.totalorder %s27, 1
      %p118 = por %p116, %p117
      %p119 = scmp.ne.s32.totalorder %s108, %s109
      %p120 = scmp.eq.s32.totalorder %s27, 0
      %p121 = por %p119, %p120
      %p122 = scmp.ne.s32.totalorder %s108, %s109
      %p123 = scmp.eq.s32.totalorder %s28, 1
      %p124 = por %p122, %p123
      %p126 = scmp.ne.s32.totalorder %s109, %s125
      %p127 = scmp.eq.s32.totalorder %s28, 0
      %p128 = por %p126, %p127
      %s129 = ssub.s32 %s22, %s29
      %p130 = scmp.eq.s32.totalorder %s129, 0
      %s132 = sadd.s32 %s131, 1
      %s133 = scalar_select %p130, %s131, %s132
      %p136 = pneg %p130
      %p137 = scmp.eq.s32.totalorder %s22, 1
      %p138 = por %p136, %p137
      %p139 = scmp.ne.s32.totalorder %s131, %s134
      %p140 = scmp.eq.s32.totalorder %s22, 0
      %p141 = por %p139, %p140
      %p142 = scmp.ne.s32.totalorder %s131, %s134
      %p143 = scmp.eq.s32.totalorder %s27, 1
      %p144 = por %p142, %p143
      %p145 = scmp.ne.s32.totalorder %s134, %s135
      %p146 = scmp.eq.s32.totalorder %s27, 0
      %p147 = por %p145, %p146
      %p148 = scmp.ne.s32.totalorder %s134, %s135
      %p149 = scmp.eq.s32.totalorder %s28, 1
      %p150 = por %p148, %p149
      %p152 = scmp.ne.s32.totalorder %s135, %s151
      %p153 = scmp.eq.s32.totalorder %s28, 0
      %p154 = por %p152, %p153
      %s156 = sadd.s32 %s155, 1
      %p159 = scmp.eq.s32.totalorder %s22, 1
      %p160 = scmp.ne.s32.totalorder %s155, %s157
      %p161 = scmp.eq.s32.totalorder %s22, 0
      %p162 = por %p160, %p161
      %p163 = scmp.ne.s32.totalorder %s155, %s157
      %p164 = scmp.eq.s32.totalorder %s27, 1
      %p165 = por %p163, %p164
      %p166 = scmp.ne.s32.totalorder %s157, %s158
      %p167 = scmp.eq.s32.totalorder %s27, 0
      %p168 = por %p166, %p167
      %p169 = scmp.ne.s32.totalorder %s157, %s158
      %p170 = scmp.eq.s32.totalorder %s28, 1
      %p171 = por %p169, %p170
      %p173 = scmp.ne.s32.totalorder %s158, %s172
      %p174 = scmp.eq.s32.totalorder %s28, 0
      %p175 = por %p173, %p174
      %s177 = sadd.s32 %s176, 1
      %p180 = scmp.eq.s32.totalorder %s22, 1
      %p181 = scmp.ne.s32.totalorder %s176, %s178
      %p182 = scmp.eq.s32.totalorder %s22, 0
      %p183 = por %p181, %p182
      %p184 = scmp.ne.s32.totalorder %s176, %s178
      %p185 = scmp.eq.s32.totalorder %s27, 1
      %p186 = por %p184, %p185
      %p187 = scmp.ne.s32.totalorder %s178, %s179
      %p188 = scmp.eq.s32.totalorder %s27, 0
      %p189 = por %p187, %p188
      %p190 = scmp.ne.s32.totalorder %s178, %s179
      %p191 = scmp.eq.s32.totalorder %s28, 1
      %p192 = por %p190, %p191
      %p194 = scmp.ne.s32.totalorder %s179, %s193
      %p195 = scmp.eq.s32.totalorder %s28, 0
      %p196 = por %p194, %p195
      %s198 = sadd.s32 %s197, 1
      %p201 = scmp.eq.s32.totalorder %s22, 1
      %p202 = scmp.ne.s32.totalorder %s197, %s199
      %p203 = scmp.eq.s32.totalorder %s22, 0
      %p204 = por %p202, %p203
      %p205 = scmp.ne.s32.totalorder %s197, %s199
      %p206 = scmp.eq.s32.totalorder %s27, 1
      %p207 = por %p205, %p206
      %p208 = scmp.ne.s32.totalorder %s199, %s200
      %p209 = scmp.eq.s32.totalorder %s27, 0
      %p210 = por %p208, %p209
      %p211 = scmp.ne.s32.totalorder %s199, %s200
      %p212 = scmp.eq.s32.totalorder %s28, 1
      %p213 = por %p211, %p212
      %p215 = scmp.ne.s32.totalorder %s200, %s214
      %p216 = scmp.eq.s32.totalorder %s28, 0
      %p217 = por %p215, %p216
      %p218 = scmp.le.s32.totalorder 1, %s22
      %p219 = scmp.lt.s32.totalorder %s22, 3
      %p220 = pnand %p218, %p219
      %p221 = pneg %p220
      // Predicated region
      $region9: #{residual_block.1} parent=5 // pred_check
        _
      $region10: #{residual_block.1} parent=5 // pred_check_branch
        %223 = sbr.rel (%p220) target = $region12
      $region11: #{residual_block.1} parent=5 // pred_region
        %s224 = ssub.s32 %s22, 1
        // Predicated region
        $region13: #{residual_block.1} parent=11 // pred_check
          %p225 = pneg %p43
        $region14: #{residual_block.1} parent=11 // pred_check_branch
          %227 = sbr.rel (%p225) target = $region16
        $region15: #{residual_block.1} parent=11 // pred_region
          _
        $region16: #{residual_block.1} parent=11 // pred_fallthru
          _
        // Predicated region
        $region17: #{residual_block.1} parent=11 // pred_check
          %p228 = pneg %p168
        $region18: #{residual_block.1} parent=11 // pred_check_branch
          %230 = sbr.rel (%p228) target = $region20
        $region19: #{residual_block.1} parent=11 // pred_region
          _
        $region20: #{residual_block.1} parent=11 // pred_fallthru
          _
        // Predicated region
        $region21: #{residual_block.1} parent=11 // pred_check
          %p231 = pneg %p189
        $region22: #{residual_block.1} parent=11 // pred_check_branch
          %233 = sbr.rel (%p231) target = $region24
        $region23: #{residual_block.1} parent=11 // pred_region
          %s235 = ssub.s32 2048, 2048
          %236 = vsyncadd [#allocation10], %s235
          %s237 = sshll.u32 [#allocation11], 4
          %s238 = int_to_ptr.vmem [resolvable:$true] %s237
          %243 = dma.hbm_to_vmem [thread:$0]  %s6, 2048, %s238, [#allocation10], 512, 512, 32
        $region24: #{residual_block.1} parent=11 // pred_fallthru
          _
      $region12: #{residual_block.1} parent=5 // pred_fallthru
        _
      %p244 = scmp.lt.s32.totalorder %s22, 2
      // Predicated region
      $region25: #{residual_block.1} parent=5 // pred_check
        %p245 = pneg %p244
      $region26: #{residual_block.1} parent=5 // pred_check_branch
        %247 = sbr.rel (%p245) target = $region28
      $region27: #{residual_block.1} parent=5 // pred_region
        // Predicated region
        $region29: #{residual_block.1} parent=27 // pred_check
          %p248 = pneg %p63
        $region30: #{residual_block.1} parent=27 // pred_check_branch
          %250 = sbr.rel (%p248) target = $region32
        $region31: #{residual_block.1} parent=27 // pred_region
          %s251 = sand.u32 %s53, 1
          %s252 = scalar_lea.sflag [#allocation5], %s251
          %s253 = sand.u32 %s53, 1
          %s254 = smul.addr %s253, 3072
          %s255 = scalar_lea.vmem [#allocation4], %s254
          %s257 = ssub.s32 49152, 49152
          %258 = vsyncadd %s252, %s257
          %s259 = smul.addr %s22, 768
          %s260 = smul.addr %s259, 64
          %s261 = scalar_lea.hbm %s1, %s260
          %s262 = sshll.u32 %s255, 4
          %s263 = int_to_ptr.vmem [resolvable:$true] %s262
          %268 = dma.hbm_to_vmem [thread:$0]  %s261, 49152, %s263, %s252, 256, 256, 16
        $region32: #{residual_block.1} parent=27 // pred_fallthru
          _
        // Predicated region
        $region33: #{residual_block.1} parent=27 // pred_check
          %p269 = pneg %p89
        $region34: #{residual_block.1} parent=27 // pred_check_branch
          %271 = sbr.rel (%p269) target = $region36
        $region35: #{residual_block.1} parent=27 // pred_region
          %s272 = sand.u32 %s22, 1
          %s273 = scalar_lea.sflag [#allocation7], %s272
          %s274 = sand.u32 %s79, 1
          %s275 = smul.addr %s274, 4
          %s276 = scalar_lea.vmem [#allocation6], %s275
          %s278 = ssub.s32 64, 64
          %279 = vsyncadd %s273, %s278
          %s280 = smul.addr %s22, 4
          %s281 = smul.addr %s280, 16
          %s282 = scalar_lea.hbm %s2, %s281
          %s284 = sshll.u32 %s276, 4
          %s285 = int_to_ptr.vmem [resolvable:$true] %s284
          %287 = dma.hbm_to_vmem [thread:$0]  %s282, 64, %s285, %s273
        $region36: #{residual_block.1} parent=27 // pred_fallthru
          _
        // Predicated region
        $region37: #{residual_block.1} parent=27 // pred_check
          %p288 = pneg %p115
        $region38: #{residual_block.1} parent=27 // pred_check_branch
          %290 = sbr.rel (%p288) target = $region40
        $region39: #{residual_block.1} parent=27 // pred_region
          %s291 = sand.u32 %s22, 1
          %s292 = scalar_lea.sflag [#allocation7], %s291
          %s293 = sand.u32 %s105, 1
          %s294 = scalar_lea.vmem [#allocation8], %s293
          %s296 = ssub.s32 16, 16
          %297 = vsyncadd %s292, %s296
          %s298 = smul.addr %s22, 16
          %s299 = scalar_lea.hbm %s3, %s298
          %s301 = sshll.u32 %s294, 4
          %s302 = int_to_ptr.vmem [resolvable:$true] %s301
          %304 = dma.hbm_to_vmem [thread:$0]  %s299, 16, %s302, %s292
        $region40: #{residual_block.1} parent=27 // pred_fallthru
          _
        // Predicated region
        $region41: #{residual_block.1} parent=27 // pred_check
          %p305 = pneg %p141
        $region42: #{residual_block.1} parent=27 // pred_check_branch
          %307 = sbr.rel (%p305) target = $region44
        $region43: #{residual_block.1} parent=27 // pred_region
          %s308 = sand.u32 %s22, 1
          %s309 = scalar_lea.sflag [#allocation10], %s308
          %s310 = sand.u32 %s131, 1
          %s311 = scalar_lea.vmem [#allocation9], %s310
          %s313 = ssub.s32 16, 16
          %314 = vsyncadd %s309, %s313
          %s315 = smul.addr %s22, 16
          %s316 = scalar_lea.hbm %s4, %s315
          %s318 = sshll.u32 %s311, 4
          %s319 = int_to_ptr.vmem [resolvable:$true] %s318
          %321 = dma.hbm_to_vmem [thread:$0]  %s316, 16, %s319, %s309
        $region44: #{residual_block.1} parent=27 // pred_fallthru
          _
      $region28: #{residual_block.1} parent=5 // pred_fallthru
        _
      %p322 = scmp.le.s32.totalorder 1, %s22
      %p323 = scmp.lt.s32.totalorder %s22, 3
      %p324 = pnand %p322, %p323
      %p325 = pneg %p324
      // Predicated region
      $region45: #{residual_block.1} parent=5 // pred_check
        _
      $region46: #{residual_block.1} parent=5 // pred_check_branch
        %327 = sbr.rel (%p324) target = $region48
      $region47: #{residual_block.1} parent=5 // pred_region
        %s328 = ssub.s32 %s22, 1
        %s329 = sand.u32 %s56, 1
        %s330 = scalar_lea.sflag [#allocation5], %s329
        %s331 = sand.u32 %s56, 1
        %s332 = smul.addr %s331, 3072
        %s333 = scalar_lea.vmem [#allocation4], %s332
        // Predicated region
        $region49: #{residual_block.1} parent=47 // pred_check
          %p334 = pneg %p69
        $region50: #{residual_block.1} parent=47 // pred_check_branch
          %336 = sbr.rel (%p334) target = $region52
        $region51: #{residual_block.1} parent=47 // pred_region
          %337 = dma.done %s330, 49152
        $region52: #{residual_block.1} parent=47 // pred_fallthru
          _
        %s338 = sand.u32 %s27, 1
        %s339 = scalar_lea.sflag [#allocation7], %s338
        %s340 = sand.u32 %s82, 1
        %s341 = smul.addr %s340, 4
        %s342 = scalar_lea.vmem [#allocation6], %s341
        // Predicated region
        $region53: #{residual_block.1} parent=47 // pred_check
          %p343 = pneg %p95
        $region54: #{residual_block.1} parent=47 // pred_check_branch
          %345 = sbr.rel (%p343) target = $region56
        $region55: #{residual_block.1} parent=47 // pred_region
          %346 = dma.done %s339, 64
        $region56: #{residual_block.1} parent=47 // pred_fallthru
          _
        %s347 = sand.u32 %s27, 1
        %s348 = scalar_lea.sflag [#allocation7], %s347
        %s349 = sand.u32 %s108, 1
        %s350 = scalar_lea.vmem [#allocation8], %s349
        // Predicated region
        $region57: #{residual_block.1} parent=47 // pred_check
          %p351 = pneg %p121
        $region58: #{residual_block.1} parent=47 // pred_check_branch
          %353 = sbr.rel (%p351) target = $region60
        $region59: #{residual_block.1} parent=47 // pred_region
          %354 = dma.done %s348, 16
        $region60: #{residual_block.1} parent=47 // pred_fallthru
          _
        %s355 = sand.u32 %s27, 1
        %s356 = scalar_lea.sflag [#allocation10], %s355
        %s357 = sand.u32 %s134, 1
        %s358 = scalar_lea.vmem [#allocation9], %s357
        // Predicated region
        $region61: #{residual_block.1} parent=47 // pred_check
          %p359 = pneg %p147
        $region62: #{residual_block.1} parent=47 // pred_check_branch
          %361 = sbr.rel (%p359) target = $region64
        $region63: #{residual_block.1} parent=47 // pred_region
          %362 = dma.done %s356, 16
        $region64: #{residual_block.1} parent=47 // pred_fallthru
          _
        // Predicated region
        $region65: #{residual_block.1} parent=47 // pred_check
          %p363 = pneg %p189
        $region66: #{residual_block.1} parent=47 // pred_check_branch
          %365 = sbr.rel (%p363) target = $region68
        $region67: #{residual_block.1} parent=47 // pred_region
          %366 = dma.done [#allocation10], 2048
        $region68: #{residual_block.1} parent=47 // pred_fallthru
          _
        %p367 = pneg %p43
        %p368 = pneg %p40
        %s369 = sand.u32 %s56, 1
        %s370 = scalar_lea.sflag [#allocation5], %s369
        %s371 = sand.u32 %s56, 1
        %s372 = smul.addr %s371, 3072
        %s373 = scalar_lea.vmem [#allocation4], %s372
        %p374 = pneg %p69
        %p375 = pneg %p66
        %s376 = sand.u32 %s27, 1
        %s377 = scalar_lea.sflag [#allocation7], %s376
        %s378 = sand.u32 %s82, 1
        %s379 = smul.addr %s378, 4
        %s380 = scalar_lea.vmem [#allocation6], %s379
        %p381 = pneg %p95
        %p382 = pneg %p92
        %s383 = sand.u32 %s27, 1
        %s384 = scalar_lea.sflag [#allocation7], %s383
        %s385 = sand.u32 %s108, 1
        %s386 = scalar_lea.vmem [#allocation8], %s385
        %p387 = pneg %p121
        %p388 = pneg %p118
        %s389 = sand.u32 %s27, 1
        %s390 = scalar_lea.sflag [#allocation10], %s389
        %s391 = sand.u32 %s134, 1
        %s392 = scalar_lea.vmem [#allocation9], %s391
        %p393 = pneg %p147
        %p394 = pneg %p144
        %p395 = pneg %p168
        %p396 = pneg %p165
        %p397 = pneg %p189
        %p398 = pneg %p186
        %p399 = pneg %p210
        %p400 = pneg %p207
        %p401 = scmp.eq.s32.totalorder %s27, 0
        // Predicated region
        $region69: #{residual_block.1} parent=47 // pred_check
          %p402 = pneg %p401
        $region70: #{residual_block.1} parent=47 // pred_check_branch
          %404 = sbr.rel (%p402) target = $region72
        $region71: #{residual_block.1} parent=47 // pred_region
          %405 = vst [vmem:[#allocation3] sm:$0xff] 0.0
          %406 = vst [vmem:[#allocation3 + $0x8] sm:$0xff] 0.0
          %407 = vst [vmem:[#allocation3 + $0x10] sm:$0xff] 0.0
          %408 = vst [vmem:[#allocation3 + $0x18] sm:$0xff] 0.0
          %409 = vst [vmem:[#allocation3 + $0x60] sm:$0xff] 0.0
          %410 = vst [vmem:[#allocation3 + $0x68] sm:$0xff] 0.0
          %411 = vst [vmem:[#allocation3 + $0x70] sm:$0xff] 0.0
          %412 = vst [vmem:[#allocation3 + $0x78] sm:$0xff] 0.0
          %413 = vst [vmem:[#allocation3 + $0xc0] sm:$0xff] 0.0
          %414 = vst [vmem:[#allocation3 + $0xc8] sm:$0xff] 0.0
          %415 = vst [vmem:[#allocation3 + $0xd0] sm:$0xff] 0.0
          %416 = vst [vmem:[#allocation3 + $0xd8] sm:$0xff] 0.0
          %v417 = vld [vmem:[%s0] sm:$0xff]
          %v418 = vld [vmem:[%s0 + $0x8] sm:$0xff]
          %v419 = vld [vmem:[%s0 + $0x10] sm:$0xff]
          %v420 = vld [vmem:[%s0 + $0x18] sm:$0xff]
          %v421 = vld [vmem:[%s0 + $0x20] sm:$0xff]
          %v422 = vld [vmem:[%s0 + $0x28] sm:$0xff]
          %v423 = vld [vmem:[%s0 + $0x30] sm:$0xff]
          %v424 = vld [vmem:[%s0 + $0x38] sm:$0xff]
          %v425 = vld [vmem:[%s0 + $0x40] sm:$0xff]
          %v426 = vld [vmem:[%s0 + $0x48] sm:$0xff]
          %v427 = vld [vmem:[%s0 + $0x50] sm:$0xff]
          %v428 = vld [vmem:[%s0 + $0x58] sm:$0xff]
          %v429 = vld [vmem:[%s0 + $0x60] sm:$0xff]
          %v430 = vld [vmem:[%s0 + $0x68] sm:$0xff]
          %v431 = vld [vmem:[%s0 + $0x70] sm:$0xff]
          %v432 = vld [vmem:[%s0 + $0x78] sm:$0xff]
          %433 = vst [vmem:[#allocation2] sm:$0xff] %v417
          %434 = vst [vmem:[#allocation2 + $0x8] sm:$0xff] %v418
          %435 = vst [vmem:[#allocation2 + $0x10] sm:$0xff] %v419
          %436 = vst [vmem:[#allocation2 + $0x18] sm:$0xff] %v420
          %437 = vst [vmem:[#allocation2 + $0x20] sm:$0xff] %v421
          %438 = vst [vmem:[#allocation2 + $0x28] sm:$0xff] %v422
          %439 = vst [vmem:[#allocation2 + $0x30] sm:$0xff] %v423
          %440 = vst [vmem:[#allocation2 + $0x38] sm:$0xff] %v424
          %441 = vst [vmem:[#allocation2 + $0x40] sm:$0xff] %v425
          %442 = vst [vmem:[#allocation2 + $0x48] sm:$0xff] %v426
          %443 = vst [vmem:[#allocation2 + $0x50] sm:$0xff] %v427
          %444 = vst [vmem:[#allocation2 + $0x58] sm:$0xff] %v428
          %445 = vst [vmem:[#allocation2 + $0x60] sm:$0xff] %v429
          %446 = vst [vmem:[#allocation2 + $0x68] sm:$0xff] %v430
          %447 = vst [vmem:[#allocation2 + $0x70] sm:$0xff] %v431
          %448 = vst [vmem:[#allocation2 + $0x78] sm:$0xff] %v432
        $region72: #{residual_block.1} parent=47 // pred_fallthru
          _
        %v449 = vld [vmem:[#allocation2] sm:$0xff]
        %v450 = vld [vmem:[#allocation2 + $0x8] sm:$0xff]
        %v451 = vld [vmem:[#allocation2 + $0x10] sm:$0xff]
        %v452 = vld [vmem:[#allocation2 + $0x18] sm:$0xff]
        %v453 = vld [vmem:[#allocation2 + $0x20] sm:$0xff]
        %v454 = vld [vmem:[#allocation2 + $0x28] sm:$0xff]
        %v455 = vld [vmem:[#allocation2 + $0x30] sm:$0xff]
        %v456 = vld [vmem:[#allocation2 + $0x38] sm:$0xff]
        %457 = vst [vmem:[#allocation3 + $0x20] sm:$0xff] %v449
        %458 = vst [vmem:[#allocation3 + $0x28] sm:$0xff] %v450
        %459 = vst [vmem:[#allocation3 + $0x30] sm:$0xff] %v451
        %460 = vst [vmem:[#allocation3 + $0x38] sm:$0xff] %v452
        %461 = vst [vmem:[#allocation3 + $0x40] sm:$0xff] %v453
        %462 = vst [vmem:[#allocation3 + $0x48] sm:$0xff] %v454
        %463 = vst [vmem:[#allocation3 + $0x50] sm:$0xff] %v455
        %464 = vst [vmem:[#allocation3 + $0x58] sm:$0xff] %v456
        %v465 = vld [vmem:[#allocation2 + $0x40] sm:$0xff]
        %v466 = vld [vmem:[#allocation2 + $0x48] sm:$0xff]
        %v467 = vld [vmem:[#allocation2 + $0x50] sm:$0xff]
        %v468 = vld [vmem:[#allocation2 + $0x58] sm:$0xff]
        %v469 = vld [vmem:[#allocation2 + $0x60] sm:$0xff]
        %v470 = vld [vmem:[#allocation2 + $0x68] sm:$0xff]
        %v471 = vld [vmem:[#allocation2 + $0x70] sm:$0xff]
        %v472 = vld [vmem:[#allocation2 + $0x78] sm:$0xff]
        %473 = vst [vmem:[#allocation3 + $0x80] sm:$0xff] %v465
        %474 = vst [vmem:[#allocation3 + $0x88] sm:$0xff] %v466
        %475 = vst [vmem:[#allocation3 + $0x90] sm:$0xff] %v467
        %476 = vst [vmem:[#allocation3 + $0x98] sm:$0xff] %v468
        %477 = vst [vmem:[#allocation3 + $0xa0] sm:$0xff] %v469
        %478 = vst [vmem:[#allocation3 + $0xa8] sm:$0xff] %v470
        %479 = vst [vmem:[#allocation3 + $0xb0] sm:$0xff] %v471
        %480 = vst [vmem:[#allocation3 + $0xb8] sm:$0xff] %v472
        %v481 = vld [vmem:[#allocation3] sm:$0x80]
        %v482 = vld [vmem:[#allocation3 + $0x8] sm:$0x80]
        %v483 = vld [vmem:[#allocation3 + $0x10] sm:$0x80]
        %v484 = vld [vmem:[#allocation3 + $0x18] sm:$0x80]
        %v485 = vld [vmem:[#allocation3 + $0x20] sm:$0xff]
        %v486 = vld [vmem:[#allocation3 + $0x28] sm:$0xff]
        %v487 = vld [vmem:[#allocation3 + $0x30] sm:$0xff]
        %v488 = vld [vmem:[#allocation3 + $0x38] sm:$0xff]
        %v489 = vld [vmem:[#allocation3 + $0x40] sm:$0xff]
        %v490 = vld [vmem:[#allocation3 + $0x48] sm:$0xff]
        %v491 = vld [vmem:[#allocation3 + $0x50] sm:$0xff]
        %v492 = vld [vmem:[#allocation3 + $0x58] sm:$0xff]
        %v493 = vld [vmem:[#allocation3 + $0x60] sm:$0xff]
        %v494 = vld [vmem:[#allocation3 + $0x68] sm:$0xff]
        %v495 = vld [vmem:[#allocation3 + $0x70] sm:$0xff]
        %v496 = vld [vmem:[#allocation3 + $0x78] sm:$0xff]
        %v497 = vld [vmem:[#allocation3 + $0x80] sm:$0xff]
        %v498 = vld [vmem:[#allocation3 + $0x88] sm:$0xff]
        %v499 = vld [vmem:[#allocation3 + $0x90] sm:$0xff]
        %v500 = vld [vmem:[#allocation3 + $0x98] sm:$0xff]
        %v501 = vld [vmem:[#allocation3 + $0xa0] sm:$0x7f]
        %v502 = vld [vmem:[#allocation3 + $0xa8] sm:$0x7f]
        %v503 = vld [vmem:[#allocation3 + $0xb0] sm:$0x7f]
        %v504 = vld [vmem:[#allocation3 + $0xb8] sm:$0x7f]
        %v505 = vpack.c.bf16 %v485, %v481
        %v506 = vpack.c.bf16 %v486, %v482
        %v507 = vpack.c.bf16 %v487, %v483
        %v508 = vpack.c.bf16 %v488, %v484
        %v509 = vpack.c.bf16 %v493, %v489
        %v510 = vpack.c.bf16 %v494, %v490
        %v511 = vpack.c.bf16 %v495, %v491
        %v512 = vpack.c.bf16 %v496, %v492
        %v513 = vpack.c.bf16 %v501, %v497
        %v514 = vpack.c.bf16 %v502, %v498
        %v515 = vpack.c.bf16 %v503, %v499
        %v516 = vpack.c.bf16 %v504, %v500
        %v517 = vld [vmem:[#allocation3 + $0xa0] sm:$0xff]
        %v518 = vld [vmem:[#allocation3 + $0xa8] sm:$0xff]
        %v519 = vld [vmem:[#allocation3 + $0xb0] sm:$0xff]
        %v520 = vld [vmem:[#allocation3 + $0xb8] sm:$0xff]
        %v521 = vpack.c.bf16 %v489, %v485
        %v522 = vpack.c.bf16 %v490, %v486
        %v523 = vpack.c.bf16 %v491, %v487
        %v524 = vpack.c.bf16 %v492, %v488
        %v525 = vpack.c.bf16 %v497, %v493
        %v526 = vpack.c.bf16 %v498, %v494
        %v527 = vpack.c.bf16 %v499, %v495
        %v528 = vpack.c.bf16 %v500, %v496
        %v529 = vpack.c.bf16 %v517, %v517
        %v530 = vpack.c.bf16 %v518, %v518
        %v531 = vpack.c.bf16 %v519, %v519
        %v532 = vpack.c.bf16 %v520, %v520
        %v533 = vld [vmem:[#allocation3 + $0x20] sm:$0xfe]
        %v534 = vld [vmem:[#allocation3 + $0x28] sm:$0xfe]
        %v535 = vld [vmem:[#allocation3 + $0x30] sm:$0xfe]
        %v536 = vld [vmem:[#allocation3 + $0x38] sm:$0xfe]
        %v537 = vld [vmem:[#allocation3 + $0x40] sm:$0xff]
        %v538 = vld [vmem:[#allocation3 + $0x48] sm:$0xff]
        %v539 = vld [vmem:[#allocation3 + $0x50] sm:$0xff]
        %v540 = vld [vmem:[#allocation3 + $0x58] sm:$0xff]
        %v541 = vld [vmem:[#allocation3 + $0x60] sm:$0xff]
        %v542 = vld [vmem:[#allocation3 + $0x68] sm:$0xff]
        %v543 = vld [vmem:[#allocation3 + $0x70] sm:$0xff]
        %v544 = vld [vmem:[#allocation3 + $0x78] sm:$0xff]
        %v545 = vld [vmem:[#allocation3 + $0x80] sm:$0xff]
        %v546 = vld [vmem:[#allocation3 + $0x88] sm:$0xff]
        %v547 = vld [vmem:[#allocation3 + $0x90] sm:$0xff]
        %v548 = vld [vmem:[#allocation3 + $0x98] sm:$0xff]
        %v549 = vld [vmem:[#allocation3 + $0xa0] sm:$0xff]
        %v550 = vld [vmem:[#allocation3 + $0xa8] sm:$0xff]
        %v551 = vld [vmem:[#allocation3 + $0xb0] sm:$0xff]
        %v552 = vld [vmem:[#allocation3 + $0xb8] sm:$0xff]
        %v553 = vld [vmem:[#allocation3 + $0xc0] sm:$0x1]
        %v554 = vld [vmem:[#allocation3 + $0xc8] sm:$0x1]
        %v555 = vld [vmem:[#allocation3 + $0xd0] sm:$0x1]
        %v556 = vld [vmem:[#allocation3 + $0xd8] sm:$0x1]
        %v557 = vpack.c.bf16 %v537, %v533
        %v558 = vpack.c.bf16 %v538, %v534
        %v559 = vpack.c.bf16 %v539, %v535
        %v560 = vpack.c.bf16 %v540, %v536
        %v561 = vpack.c.bf16 %v545, %v541
        %v562 = vpack.c.bf16 %v546, %v542
        %v563 = vpack.c.bf16 %v547, %v543
        %v564 = vpack.c.bf16 %v548, %v544
        %v565 = vpack.c.bf16 %v553, %v549
        %v566 = vpack.c.bf16 %v554, %v550
        %v567 = vpack.c.bf16 %v555, %v551
        %v568 = vpack.c.bf16 %v556, %v552
        %v569 = vld [vmem:[%s333] sm:$0xff]
        %v570 = vld [vmem:[%s333 + $0x8] sm:$0xff]
        %v571 = vld [vmem:[%s333 + $0x10] sm:$0xff]
        %v572 = vld [vmem:[%s333 + $0x18] sm:$0xff]
        %v573 = vld [vmem:[%s333 + $0x20] sm:$0xff]
        %v574 = vld [vmem:[%s333 + $0x28] sm:$0xff]
        %v575 = vld [vmem:[%s333 + $0x30] sm:$0xff]
        %v576 = vld [vmem:[%s333 + $0x38] sm:$0xff]
        %v577 = vld [vmem:[%s333 + $0x40] sm:$0xff]
        %v578 = vld [vmem:[%s333 + $0x48] sm:$0xff]
        %v579 = vld [vmem:[%s333 + $0x50] sm:$0xff]
        %v580 = vld [vmem:[%s333 + $0x58] sm:$0xff]
        %v581 = vld [vmem:[%s333 + $0x60] sm:$0xff]
        %v582 = vld [vmem:[%s333 + $0x68] sm:$0xff]
        %v583 = vld [vmem:[%s333 + $0x70] sm:$0xff]
        %v584 = vld [vmem:[%s333 + $0x78] sm:$0xff]
        %v585 = vld [vmem:[%s333 + $0x80] sm:$0xff]
        %v586 = vld [vmem:[%s333 + $0x88] sm:$0xff]
        %v587 = vld [vmem:[%s333 + $0x90] sm:$0xff]
        %v588 = vld [vmem:[%s333 + $0x98] sm:$0xff]
        %v589 = vld [vmem:[%s333 + $0xa0] sm:$0xff]
        %v590 = vld [vmem:[%s333 + $0xa8] sm:$0xff]
        %v591 = vld [vmem:[%s333 + $0xb0] sm:$0xff]
        %v592 = vld [vmem:[%s333 + $0xb8] sm:$0xff]
        %v593 = vld [vmem:[%s333 + $0xc0] sm:$0xff]
        %v594 = vld [vmem:[%s333 + $0xc8] sm:$0xff]
        %v595 = vld [vmem:[%s333 + $0xd0] sm:$0xff]
        %v596 = vld [vmem:[%s333 + $0xd8] sm:$0xff]
        %v597 = vld [vmem:[%s333 + $0xe0] sm:$0xff]
        %v598 = vld [vmem:[%s333 + $0xe8] sm:$0xff]
        %v599 = vld [vmem:[%s333 + $0xf0] sm:$0xff]
        %v600 = vld [vmem:[%s333 + $0xf8] sm:$0xff]
        %v601 = vld [vmem:[%s333 + $0x100] sm:$0xff]
        %v602 = vld [vmem:[%s333 + $0x108] sm:$0xff]
        %v603 = vld [vmem:[%s333 + $0x110] sm:$0xff]
        %v604 = vld [vmem:[%s333 + $0x118] sm:$0xff]
        %v605 = vld [vmem:[%s333 + $0x120] sm:$0xff]
        %v606 = vld [vmem:[%s333 + $0x128] sm:$0xff]
        %v607 = vld [vmem:[%s333 + $0x130] sm:$0xff]
        %v608 = vld [vmem:[%s333 + $0x138] sm:$0xff]
        %v609 = vld [vmem:[%s333 + $0x140] sm:$0xff]
        %v610 = vld [vmem:[%s333 + $0x148] sm:$0xff]
        %v611 = vld [vmem:[%s333 + $0x150] sm:$0xff]
        %v612 = vld [vmem:[%s333 + $0x158] sm:$0xff]
        %v613 = vld [vmem:[%s333 + $0x160] sm:$0xff]
        %v614 = vld [vmem:[%s333 + $0x168] sm:$0xff]
        %v615 = vld [vmem:[%s333 + $0x170] sm:$0xff]
        %v616 = vld [vmem:[%s333 + $0x178] sm:$0xff]
        %v617 = vld [vmem:[%s333 + $0x180] sm:$0xff]
        %v618 = vld [vmem:[%s333 + $0x188] sm:$0xff]
        %v619 = vld [vmem:[%s333 + $0x190] sm:$0xff]
        %v620 = vld [vmem:[%s333 + $0x198] sm:$0xff]
        %v621 = vld [vmem:[%s333 + $0x1a0] sm:$0xff]
        %v622 = vld [vmem:[%s333 + $0x1a8] sm:$0xff]
        %v623 = vld [vmem:[%s333 + $0x1b0] sm:$0xff]
        %v624 = vld [vmem:[%s333 + $0x1b8] sm:$0xff]
        %v625 = vld [vmem:[%s333 + $0x1c0] sm:$0xff]
        %v626 = vld [vmem:[%s333 + $0x1c8] sm:$0xff]
        %v627 = vld [vmem:[%s333 + $0x1d0] sm:$0xff]
        %v628 = vld [vmem:[%s333 + $0x1d8] sm:$0xff]
        %v629 = vld [vmem:[%s333 + $0x1e0] sm:$0xff]
        %v630 = vld [vmem:[%s333 + $0x1e8] sm:$0xff]
        %v631 = vld [vmem:[%s333 + $0x1f0] sm:$0xff]
        %v632 = vld [vmem:[%s333 + $0x1f8] sm:$0xff]
        %v633 = vld [vmem:[%s333 + $0x200] sm:$0xff]
        %v634 = vld [vmem:[%s333 + $0x208] sm:$0xff]
        %v635 = vld [vmem:[%s333 + $0x210] sm:$0xff]
        %v636 = vld [vmem:[%s333 + $0x218] sm:$0xff]
        %v637 = vld [vmem:[%s333 + $0x220] sm:$0xff]
        %v638 = vld [vmem:[%s333 + $0x228] sm:$0xff]
        %v639 = vld [vmem:[%s333 + $0x230] sm:$0xff]
        %v640 = vld [vmem:[%s333 + $0x238] sm:$0xff]
        %v641 = vld [vmem:[%s333 + $0x240] sm:$0xff]
        %v642 = vld [vmem:[%s333 + $0x248] sm:$0xff]
        %v643 = vld [vmem:[%s333 + $0x250] sm:$0xff]
        %v644 = vld [vmem:[%s333 + $0x258] sm:$0xff]
        %v645 = vld [vmem:[%s333 + $0x260] sm:$0xff]
        %v646 = vld [vmem:[%s333 + $0x268] sm:$0xff]
        %v647 = vld [vmem:[%s333 + $0x270] sm:$0xff]
        %v648 = vld [vmem:[%s333 + $0x278] sm:$0xff]
        %v649 = vld [vmem:[%s333 + $0x280] sm:$0xff]
        %v650 = vld [vmem:[%s333 + $0x288] sm:$0xff]
        %v651 = vld [vmem:[%s333 + $0x290] sm:$0xff]
        %v652 = vld [vmem:[%s333 + $0x298] sm:$0xff]
        %v653 = vld [vmem:[%s333 + $0x2a0] sm:$0xff]
        %v654 = vld [vmem:[%s333 + $0x2a8] sm:$0xff]
        %v655 = vld [vmem:[%s333 + $0x2b0] sm:$0xff]
        %v656 = vld [vmem:[%s333 + $0x2b8] sm:$0xff]
        %v657 = vld [vmem:[%s333 + $0x2c0] sm:$0xff]
        %v658 = vld [vmem:[%s333 + $0x2c8] sm:$0xff]
        %v659 = vld [vmem:[%s333 + $0x2d0] sm:$0xff]
        %v660 = vld [vmem:[%s333 + $0x2d8] sm:$0xff]
        %v661 = vld [vmem:[%s333 + $0x2e0] sm:$0xff]
        %v662 = vld [vmem:[%s333 + $0x2e8] sm:$0xff]
        %v663 = vld [vmem:[%s333 + $0x2f0] sm:$0xff]
        %v664 = vld [vmem:[%s333 + $0x2f8] sm:$0xff]
        %v665 = vld [vmem:[%s333 + $0x300] sm:$0xff]
        %v666 = vld [vmem:[%s333 + $0x308] sm:$0xff]
        %v667 = vld [vmem:[%s333 + $0x310] sm:$0xff]
        %v668 = vld [vmem:[%s333 + $0x318] sm:$0xff]
        %v669 = vld [vmem:[%s333 + $0x320] sm:$0xff]
        %v670 = vld [vmem:[%s333 + $0x328] sm:$0xff]
        %v671 = vld [vmem:[%s333 + $0x330] sm:$0xff]
        %v672 = vld [vmem:[%s333 + $0x338] sm:$0xff]
        %v673 = vld [vmem:[%s333 + $0x340] sm:$0xff]
        %v674 = vld [vmem:[%s333 + $0x348] sm:$0xff]
        %v675 = vld [vmem:[%s333 + $0x350] sm:$0xff]
        %v676 = vld [vmem:[%s333 + $0x358] sm:$0xff]
        %v677 = vld [vmem:[%s333 + $0x360] sm:$0xff]
        %v678 = vld [vmem:[%s333 + $0x368] sm:$0xff]
        %v679 = vld [vmem:[%s333 + $0x370] sm:$0xff]
        %v680 = vld [vmem:[%s333 + $0x378] sm:$0xff]
        %v681 = vld [vmem:[%s333 + $0x380] sm:$0xff]
        %v682 = vld [vmem:[%s333 + $0x388] sm:$0xff]
        %v683 = vld [vmem:[%s333 + $0x390] sm:$0xff]
        %v684 = vld [vmem:[%s333 + $0x398] sm:$0xff]
        %v685 = vld [vmem:[%s333 + $0x3a0] sm:$0xff]
        %v686 = vld [vmem:[%s333 + $0x3a8] sm:$0xff]
        %v687 = vld [vmem:[%s333 + $0x3b0] sm:$0xff]
        %v688 = vld [vmem:[%s333 + $0x3b8] sm:$0xff]
        %v689 = vld [vmem:[%s333 + $0x3c0] sm:$0xff]
        %v690 = vld [vmem:[%s333 + $0x3c8] sm:$0xff]
        %v691 = vld [vmem:[%s333 + $0x3d0] sm:$0xff]
        %v692 = vld [vmem:[%s333 + $0x3d8] sm:$0xff]
        %v693 = vld [vmem:[%s333 + $0x3e0] sm:$0xff]
        %v694 = vld [vmem:[%s333 + $0x3e8] sm:$0xff]
        %v695 = vld [vmem:[%s333 + $0x3f0] sm:$0xff]
        %v696 = vld [vmem:[%s333 + $0x3f8] sm:$0xff]
        %v697 = vld [vmem:[%s333 + $0x400] sm:$0xff]
        %v698 = vld [vmem:[%s333 + $0x408] sm:$0xff]
        %v699 = vld [vmem:[%s333 + $0x410] sm:$0xff]
        %v700 = vld [vmem:[%s333 + $0x418] sm:$0xff]
        %v701 = vld [vmem:[%s333 + $0x420] sm:$0xff]
        %v702 = vld [vmem:[%s333 + $0x428] sm:$0xff]
        %v703 = vld [vmem:[%s333 + $0x430] sm:$0xff]
        %v704 = vld [vmem:[%s333 + $0x438] sm:$0xff]
        %v705 = vld [vmem:[%s333 + $0x440] sm:$0xff]
        %v706 = vld [vmem:[%s333 + $0x448] sm:$0xff]
        %v707 = vld [vmem:[%s333 + $0x450] sm:$0xff]
        %v708 = vld [vmem:[%s333 + $0x458] sm:$0xff]
        %v709 = vld [vmem:[%s333 + $0x460] sm:$0xff]
        %v710 = vld [vmem:[%s333 + $0x468] sm:$0xff]
        %v711 = vld [vmem:[%s333 + $0x470] sm:$0xff]
        %v712 = vld [vmem:[%s333 + $0x478] sm:$0xff]
        %v713 = vld [vmem:[%s333 + $0x480] sm:$0xff]
        %v714 = vld [vmem:[%s333 + $0x488] sm:$0xff]
        %v715 = vld [vmem:[%s333 + $0x490] sm:$0xff]
        %v716 = vld [vmem:[%s333 + $0x498] sm:$0xff]
        %v717 = vld [vmem:[%s333 + $0x4a0] sm:$0xff]
        %v718 = vld [vmem:[%s333 + $0x4a8] sm:$0xff]
        %v719 = vld [vmem:[%s333 + $0x4b0] sm:$0xff]
        %v720 = vld [vmem:[%s333 + $0x4b8] sm:$0xff]
        %v721 = vld [vmem:[%s333 + $0x4c0] sm:$0xff]
        %v722 = vld [vmem:[%s333 + $0x4c8] sm:$0xff]
        %v723 = vld [vmem:[%s333 + $0x4d0] sm:$0xff]
        %v724 = vld [vmem:[%s333 + $0x4d8] sm:$0xff]
        %v725 = vld [vmem:[%s333 + $0x4e0] sm:$0xff]
        %v726 = vld [vmem:[%s333 + $0x4e8] sm:$0xff]
        %v727 = vld [vmem:[%s333 + $0x4f0] sm:$0xff]
        %v728 = vld [vmem:[%s333 + $0x4f8] sm:$0xff]
        %v729 = vld [vmem:[%s333 + $0x500] sm:$0xff]
        %v730 = vld [vmem:[%s333 + $0x508] sm:$0xff]
        %v731 = vld [vmem:[%s333 + $0x510] sm:$0xff]
        %v732 = vld [vmem:[%s333 + $0x518] sm:$0xff]
        %v733 = vld [vmem:[%s333 + $0x520] sm:$0xff]
        %v734 = vld [vmem:[%s333 + $0x528] sm:$0xff]
        %v735 = vld [vmem:[%s333 + $0x530] sm:$0xff]
        %v736 = vld [vmem:[%s333 + $0x538] sm:$0xff]
        %v737 = vld [vmem:[%s333 + $0x540] sm:$0xff]
        %v738 = vld [vmem:[%s333 + $0x548] sm:$0xff]
        %v739 = vld [vmem:[%s333 + $0x550] sm:$0xff]
        %v740 = vld [vmem:[%s333 + $0x558] sm:$0xff]
        %v741 = vld [vmem:[%s333 + $0x560] sm:$0xff]
        %v742 = vld [vmem:[%s333 + $0x568] sm:$0xff]
        %v743 = vld [vmem:[%s333 + $0x570] sm:$0xff]
        %v744 = vld [vmem:[%s333 + $0x578] sm:$0xff]
        %v745 = vld [vmem:[%s333 + $0x580] sm:$0xff]
        %v746 = vld [vmem:[%s333 + $0x588] sm:$0xff]
        %v747 = vld [vmem:[%s333 + $0x590] sm:$0xff]
        %v748 = vld [vmem:[%s333 + $0x598] sm:$0xff]
        %v749 = vld [vmem:[%s333 + $0x5a0] sm:$0xff]
        %v750 = vld [vmem:[%s333 + $0x5a8] sm:$0xff]
        %v751 = vld [vmem:[%s333 + $0x5b0] sm:$0xff]
        %v752 = vld [vmem:[%s333 + $0x5b8] sm:$0xff]
        %v753 = vld [vmem:[%s333 + $0x5c0] sm:$0xff]
        %v754 = vld [vmem:[%s333 + $0x5c8] sm:$0xff]
        %v755 = vld [vmem:[%s333 + $0x5d0] sm:$0xff]
        %v756 = vld [vmem:[%s333 + $0x5d8] sm:$0xff]
        %v757 = vld [vmem:[%s333 + $0x5e0] sm:$0xff]
        %v758 = vld [vmem:[%s333 + $0x5e8] sm:$0xff]
        %v759 = vld [vmem:[%s333 + $0x5f0] sm:$0xff]
        %v760 = vld [vmem:[%s333 + $0x5f8] sm:$0xff]
        %v761 = vld [vmem:[%s333 + $0x600] sm:$0xff]
        %v762 = vld [vmem:[%s333 + $0x608] sm:$0xff]
        %v763 = vld [vmem:[%s333 + $0x610] sm:$0xff]
        %v764 = vld [vmem:[%s333 + $0x618] sm:$0xff]
        %v765 = vld [vmem:[%s333 + $0x620] sm:$0xff]
        %v766 = vld [vmem:[%s333 + $0x628] sm:$0xff]
        %v767 = vld [vmem:[%s333 + $0x630] sm:$0xff]
        %v768 = vld [vmem:[%s333 + $0x638] sm:$0xff]
        %v769 = vld [vmem:[%s333 + $0x640] sm:$0xff]
        %v770 = vld [vmem:[%s333 + $0x648] sm:$0xff]
        %v771 = vld [vmem:[%s333 + $0x650] sm:$0xff]
        %v772 = vld [vmem:[%s333 + $0x658] sm:$0xff]
        %v773 = vld [vmem:[%s333 + $0x660] sm:$0xff]
        %v774 = vld [vmem:[%s333 + $0x668] sm:$0xff]
        %v775 = vld [vmem:[%s333 + $0x670] sm:$0xff]
        %v776 = vld [vmem:[%s333 + $0x678] sm:$0xff]
        %v777 = vld [vmem:[%s333 + $0x680] sm:$0xff]
        %v778 = vld [vmem:[%s333 + $0x688] sm:$0xff]
        %v779 = vld [vmem:[%s333 + $0x690] sm:$0xff]
        %v780 = vld [vmem:[%s333 + $0x698] sm:$0xff]
        %v781 = vld [vmem:[%s333 + $0x6a0] sm:$0xff]
        %v782 = vld [vmem:[%s333 + $0x6a8] sm:$0xff]
        %v783 = vld [vmem:[%s333 + $0x6b0] sm:$0xff]
        %v784 = vld [vmem:[%s333 + $0x6b8] sm:$0xff]
        %v785 = vld [vmem:[%s333 + $0x6c0] sm:$0xff]
        %v786 = vld [vmem:[%s333 + $0x6c8] sm:$0xff]
        %v787 = vld [vmem:[%s333 + $0x6d0] sm:$0xff]
        %v788 = vld [vmem:[%s333 + $0x6d8] sm:$0xff]
        %v789 = vld [vmem:[%s333 + $0x6e0] sm:$0xff]
        %v790 = vld [vmem:[%s333 + $0x6e8] sm:$0xff]
        %v791 = vld [vmem:[%s333 + $0x6f0] sm:$0xff]
        %v792 = vld [vmem:[%s333 + $0x6f8] sm:$0xff]
        %v793 = vld [vmem:[%s333 + $0x700] sm:$0xff]
        %v794 = vld [vmem:[%s333 + $0x708] sm:$0xff]
        %v795 = vld [vmem:[%s333 + $0x710] sm:$0xff]
        %v796 = vld [vmem:[%s333 + $0x718] sm:$0xff]
        %v797 = vld [vmem:[%s333 + $0x720] sm:$0xff]
        %v798 = vld [vmem:[%s333 + $0x728] sm:$0xff]
        %v799 = vld [vmem:[%s333 + $0x730] sm:$0xff]
        %v800 = vld [vmem:[%s333 + $0x738] sm:$0xff]
        %v801 = vld [vmem:[%s333 + $0x740] sm:$0xff]
        %v802 = vld [vmem:[%s333 + $0x748] sm:$0xff]
        %v803 = vld [vmem:[%s333 + $0x750] sm:$0xff]
        %v804 = vld [vmem:[%s333 + $0x758] sm:$0xff]
        %v805 = vld [vmem:[%s333 + $0x760] sm:$0xff]
        %v806 = vld [vmem:[%s333 + $0x768] sm:$0xff]
        %v807 = vld [vmem:[%s333 + $0x770] sm:$0xff]
        %v808 = vld [vmem:[%s333 + $0x778] sm:$0xff]
        %v809 = vld [vmem:[%s333 + $0x780] sm:$0xff]
        %v810 = vld [vmem:[%s333 + $0x788] sm:$0xff]
        %v811 = vld [vmem:[%s333 + $0x790] sm:$0xff]
        %v812 = vld [vmem:[%s333 + $0x798] sm:$0xff]
        %v813 = vld [vmem:[%s333 + $0x7a0] sm:$0xff]
        %v814 = vld [vmem:[%s333 + $0x7a8] sm:$0xff]
        %v815 = vld [vmem:[%s333 + $0x7b0] sm:$0xff]
        %v816 = vld [vmem:[%s333 + $0x7b8] sm:$0xff]
        %v817 = vld [vmem:[%s333 + $0x7c0] sm:$0xff]
        %v818 = vld [vmem:[%s333 + $0x7c8] sm:$0xff]
        %v819 = vld [vmem:[%s333 + $0x7d0] sm:$0xff]
        %v820 = vld [vmem:[%s333 + $0x7d8] sm:$0xff]
        %v821 = vld [vmem:[%s333 + $0x7e0] sm:$0xff]
        %v822 = vld [vmem:[%s333 + $0x7e8] sm:$0xff]
        %v823 = vld [vmem:[%s333 + $0x7f0] sm:$0xff]
        %v824 = vld [vmem:[%s333 + $0x7f8] sm:$0xff]
        %v953 = vunpack.c.l.b16 %v697
        %v954 = vunpack.c.h.b16 %v697
        %v955 = vunpack.c.l.b16 %v698
        %v956 = vunpack.c.h.b16 %v698
        %v957 = vunpack.c.l.b16 %v699
        %v958 = vunpack.c.h.b16 %v699
        %v959 = vunpack.c.l.b16 %v700
        %v960 = vunpack.c.h.b16 %v700
        %v961 = vunpack.c.l.b16 %v701
        %v962 = vunpack.c.h.b16 %v701
        %v963 = vunpack.c.l.b16 %v702
        %v964 = vunpack.c.h.b16 %v702
        %v965 = vunpack.c.l.b16 %v703
        %v966 = vunpack.c.h.b16 %v703
        %v967 = vunpack.c.l.b16 %v704
        %v968 = vunpack.c.h.b16 %v704
        %v969 = vunpack.c.l.b16 %v705
        %v970 = vunpack.c.h.b16 %v705
        %v971 = vunpack.c.l.b16 %v706
        %v972 = vunpack.c.h.b16 %v706
        %v973 = vunpack.c.l.b16 %v707
        %v974 = vunpack.c.h.b16 %v707
        %v975 = vunpack.c.l.b16 %v708
        %v976 = vunpack.c.h.b16 %v708
        %v977 = vunpack.c.l.b16 %v709
        %v978 = vunpack.c.h.b16 %v709
        %v979 = vunpack.c.l.b16 %v710
        %v980 = vunpack.c.h.b16 %v710
        %v981 = vunpack.c.l.b16 %v711
        %v982 = vunpack.c.h.b16 %v711
        %v983 = vunpack.c.l.b16 %v712
        %v984 = vunpack.c.h.b16 %v712
        %v985 = vunpack.c.l.b16 %v713
        %v986 = vunpack.c.h.b16 %v713
        %v987 = vunpack.c.l.b16 %v714
        %v988 = vunpack.c.h.b16 %v714
        %v989 = vunpack.c.l.b16 %v715
        %v990 = vunpack.c.h.b16 %v715
        %v991 = vunpack.c.l.b16 %v716
        %v992 = vunpack.c.h.b16 %v716
        %v993 = vunpack.c.l.b16 %v717
        %v994 = vunpack.c.h.b16 %v717
        %v995 = vunpack.c.l.b16 %v718
        %v996 = vunpack.c.h.b16 %v718
        %v997 = vunpack.c.l.b16 %v719
        %v998 = vunpack.c.h.b16 %v719
        %v999 = vunpack.c.l.b16 %v720
        %v1000 = vunpack.c.h.b16 %v720
        %v1001 = vunpack.c.l.b16 %v721
        %v1002 = vunpack.c.h.b16 %v721
        %v1003 = vunpack.c.l.b16 %v722
        %v1004 = vunpack.c.h.b16 %v722
        %v1005 = vunpack.c.l.b16 %v723
        %v1006 = vunpack.c.h.b16 %v723
        %v1007 = vunpack.c.l.b16 %v724
        %v1008 = vunpack.c.h.b16 %v724
        %v1009 = vunpack.c.l.b16 %v725
        %v1010 = vunpack.c.h.b16 %v725
        %v1011 = vunpack.c.l.b16 %v726
        %v1012 = vunpack.c.h.b16 %v726
        %v1013 = vunpack.c.l.b16 %v727
        %v1014 = vunpack.c.h.b16 %v727
        %v1015 = vunpack.c.l.b16 %v728
        %v1016 = vunpack.c.h.b16 %v728
        %v1017 = vunpack.c.l.b16 %v729
        %v1018 = vunpack.c.h.b16 %v729
        %v1019 = vunpack.c.l.b16 %v730
        %v1020 = vunpack.c.h.b16 %v730
        %v1021 = vunpack.c.l.b16 %v731
        %v1022 = vunpack.c.h.b16 %v731
        %v1023 = vunpack.c.l.b16 %v732
        %v1024 = vunpack.c.h.b16 %v732
        %v1025 = vunpack.c.l.b16 %v733
        %v1026 = vunpack.c.h.b16 %v733
        %v1027 = vunpack.c.l.b16 %v734
        %v1028 = vunpack.c.h.b16 %v734
        %v1029 = vunpack.c.l.b16 %v735
        %v1030 = vunpack.c.h.b16 %v735
        %v1031 = vunpack.c.l.b16 %v736
        %v1032 = vunpack.c.h.b16 %v736
        %v1033 = vunpack.c.l.b16 %v737
        %v1034 = vunpack.c.h.b16 %v737
        %v1035 = vunpack.c.l.b16 %v738
        %v1036 = vunpack.c.h.b16 %v738
        %v1037 = vunpack.c.l.b16 %v739
        %v1038 = vunpack.c.h.b16 %v739
        %v1039 = vunpack.c.l.b16 %v740
        %v1040 = vunpack.c.h.b16 %v740
        %v1041 = vunpack.c.l.b16 %v741
        %v1042 = vunpack.c.h.b16 %v741
        %v1043 = vunpack.c.l.b16 %v742
        %v1044 = vunpack.c.h.b16 %v742
        %v1045 = vunpack.c.l.b16 %v743
        %v1046 = vunpack.c.h.b16 %v743
        %v1047 = vunpack.c.l.b16 %v744
        %v1048 = vunpack.c.h.b16 %v744
        %v1049 = vunpack.c.l.b16 %v745
        %v1050 = vunpack.c.h.b16 %v745
        %v1051 = vunpack.c.l.b16 %v746
        %v1052 = vunpack.c.h.b16 %v746
        %v1053 = vunpack.c.l.b16 %v747
        %v1054 = vunpack.c.h.b16 %v747
        %v1055 = vunpack.c.l.b16 %v748
        %v1056 = vunpack.c.h.b16 %v748
        %v1057 = vunpack.c.l.b16 %v749
        %v1058 = vunpack.c.h.b16 %v749
        %v1059 = vunpack.c.l.b16 %v750
        %v1060 = vunpack.c.h.b16 %v750
        %v1061 = vunpack.c.l.b16 %v751
        %v1062 = vunpack.c.h.b16 %v751
        %v1063 = vunpack.c.l.b16 %v752
        %v1064 = vunpack.c.h.b16 %v752
        %v1065 = vunpack.c.l.b16 %v753
        %v1066 = vunpack.c.h.b16 %v753
        %v1067 = vunpack.c.l.b16 %v754
        %v1068 = vunpack.c.h.b16 %v754
        %v1069 = vunpack.c.l.b16 %v755
        %v1070 = vunpack.c.h.b16 %v755
        %v1071 = vunpack.c.l.b16 %v756
        %v1072 = vunpack.c.h.b16 %v756
        %v1073 = vunpack.c.l.b16 %v757
        %v1074 = vunpack.c.h.b16 %v757
        %v1075 = vunpack.c.l.b16 %v758
        %v1076 = vunpack.c.h.b16 %v758
        %v1077 = vunpack.c.l.b16 %v759
        %v1078 = vunpack.c.h.b16 %v759
        %v1079 = vunpack.c.l.b16 %v760
        %v1080 = vunpack.c.h.b16 %v760
        %v1081 = vunpack.c.l.b16 %v761
        %v1082 = vunpack.c.h.b16 %v761
        %v1083 = vunpack.c.l.b16 %v762
        %v1084 = vunpack.c.h.b16 %v762
        %v1085 = vunpack.c.l.b16 %v763
        %v1086 = vunpack.c.h.b16 %v763
        %v1087 = vunpack.c.l.b16 %v764
        %v1088 = vunpack.c.h.b16 %v764
        %v1089 = vunpack.c.l.b16 %v765
        %v1090 = vunpack.c.h.b16 %v765
        %v1091 = vunpack.c.l.b16 %v766
        %v1092 = vunpack.c.h.b16 %v766
        %v1093 = vunpack.c.l.b16 %v767
        %v1094 = vunpack.c.h.b16 %v767
        %v1095 = vunpack.c.l.b16 %v768
        %v1096 = vunpack.c.h.b16 %v768
        %v1097 = vunpack.c.l.b16 %v769
        %v1098 = vunpack.c.h.b16 %v769
        %v1099 = vunpack.c.l.b16 %v770
        %v1100 = vunpack.c.h.b16 %v770
        %v1101 = vunpack.c.l.b16 %v771
        %v1102 = vunpack.c.h.b16 %v771
        %v1103 = vunpack.c.l.b16 %v772
        %v1104 = vunpack.c.h.b16 %v772
        %v1105 = vunpack.c.l.b16 %v773
        %v1106 = vunpack.c.h.b16 %v773
        %v1107 = vunpack.c.l.b16 %v774
        %v1108 = vunpack.c.h.b16 %v774
        %v1109 = vunpack.c.l.b16 %v775
        %v1110 = vunpack.c.h.b16 %v775
        %v1111 = vunpack.c.l.b16 %v776
        %v1112 = vunpack.c.h.b16 %v776
        %v1113 = vunpack.c.l.b16 %v777
        %v1114 = vunpack.c.h.b16 %v777
        %v1115 = vunpack.c.l.b16 %v778
        %v1116 = vunpack.c.h.b16 %v778
        %v1117 = vunpack.c.l.b16 %v779
        %v1118 = vunpack.c.h.b16 %v779
        %v1119 = vunpack.c.l.b16 %v780
        %v1120 = vunpack.c.h.b16 %v780
        %v1121 = vunpack.c.l.b16 %v781
        %v1122 = vunpack.c.h.b16 %v781
        %v1123 = vunpack.c.l.b16 %v782
        %v1124 = vunpack.c.h.b16 %v782
        %v1125 = vunpack.c.l.b16 %v783
        %v1126 = vunpack.c.h.b16 %v783
        %v1127 = vunpack.c.l.b16 %v784
        %v1128 = vunpack.c.h.b16 %v784
        %v1129 = vunpack.c.l.b16 %v785
        %v1130 = vunpack.c.h.b16 %v785
        %v1131 = vunpack.c.l.b16 %v786
        %v1132 = vunpack.c.h.b16 %v786
        %v1133 = vunpack.c.l.b16 %v787
        %v1134 = vunpack.c.h.b16 %v787
        %v1135 = vunpack.c.l.b16 %v788
        %v1136 = vunpack.c.h.b16 %v788
        %v1137 = vunpack.c.l.b16 %v789
        %v1138 = vunpack.c.h.b16 %v789
        %v1139 = vunpack.c.l.b16 %v790
        %v1140 = vunpack.c.h.b16 %v790
        %v1141 = vunpack.c.l.b16 %v791
        %v1142 = vunpack.c.h.b16 %v791
        %v1143 = vunpack.c.l.b16 %v792
        %v1144 = vunpack.c.h.b16 %v792
        %v1145 = vunpack.c.l.b16 %v793
        %v1146 = vunpack.c.h.b16 %v793
        %v1147 = vunpack.c.l.b16 %v794
        %v1148 = vunpack.c.h.b16 %v794
        %v1149 = vunpack.c.l.b16 %v795
        %v1150 = vunpack.c.h.b16 %v795
        %v1151 = vunpack.c.l.b16 %v796
        %v1152 = vunpack.c.h.b16 %v796
        %v1153 = vunpack.c.l.b16 %v797
        %v1154 = vunpack.c.h.b16 %v797
        %v1155 = vunpack.c.l.b16 %v798
        %v1156 = vunpack.c.h.b16 %v798
        %v1157 = vunpack.c.l.b16 %v799
        %v1158 = vunpack.c.h.b16 %v799
        %v1159 = vunpack.c.l.b16 %v800
        %v1160 = vunpack.c.h.b16 %v800
        %v1161 = vunpack.c.l.b16 %v801
        %v1162 = vunpack.c.h.b16 %v801
        %v1163 = vunpack.c.l.b16 %v802
        %v1164 = vunpack.c.h.b16 %v802
        %v1165 = vunpack.c.l.b16 %v803
        %v1166 = vunpack.c.h.b16 %v803
        %v1167 = vunpack.c.l.b16 %v804
        %v1168 = vunpack.c.h.b16 %v804
        %v1169 = vunpack.c.l.b16 %v805
        %v1170 = vunpack.c.h.b16 %v805
        %v1171 = vunpack.c.l.b16 %v806
        %v1172 = vunpack.c.h.b16 %v806
        %v1173 = vunpack.c.l.b16 %v807
        %v1174 = vunpack.c.h.b16 %v807
        %v1175 = vunpack.c.l.b16 %v808
        %v1176 = vunpack.c.h.b16 %v808
        %v1177 = vunpack.c.l.b16 %v809
        %v1178 = vunpack.c.h.b16 %v809
        %v1179 = vunpack.c.l.b16 %v810
        %v1180 = vunpack.c.h.b16 %v810
        %v1181 = vunpack.c.l.b16 %v811
        %v1182 = vunpack.c.h.b16 %v811
        %v1183 = vunpack.c.l.b16 %v812
        %v1184 = vunpack.c.h.b16 %v812
        %v1185 = vunpack.c.l.b16 %v813
        %v1186 = vunpack.c.h.b16 %v813
        %v1187 = vunpack.c.l.b16 %v814
        %v1188 = vunpack.c.h.b16 %v814
        %v1189 = vunpack.c.l.b16 %v815
        %v1190 = vunpack.c.h.b16 %v815
        %v1191 = vunpack.c.l.b16 %v816
        %v1192 = vunpack.c.h.b16 %v816
        %v1193 = vunpack.c.l.b16 %v817
        %v1194 = vunpack.c.h.b16 %v817
        %v1195 = vunpack.c.l.b16 %v818
        %v1196 = vunpack.c.h.b16 %v818
        %v1197 = vunpack.c.l.b16 %v819
        %v1198 = vunpack.c.h.b16 %v819
        %v1199 = vunpack.c.l.b16 %v820
        %v1200 = vunpack.c.h.b16 %v820
        %v1201 = vunpack.c.l.b16 %v821
        %v1202 = vunpack.c.h.b16 %v821
        %v1203 = vunpack.c.l.b16 %v822
        %v1204 = vunpack.c.h.b16 %v822
        %v1205 = vunpack.c.l.b16 %v823
        %v1206 = vunpack.c.h.b16 %v823
        %v1207 = vunpack.c.l.b16 %v824
        %v1208 = vunpack.c.h.b16 %v824
        %v1209 = vpack.c.b16 %v957, %v953
        %v1210 = vpack.c.b16 %v958, %v954
        %v1211 = vpack.c.b16 %v959, %v955
        %v1212 = vpack.c.b16 %v960, %v956
        %v1213 = vpack.c.b16 %v965, %v961
        %v1214 = vpack.c.b16 %v966, %v962
        %v1215 = vpack.c.b16 %v967, %v963
        %v1216 = vpack.c.b16 %v968, %v964
        %v1217 = vpack.c.b16 %v973, %v969
        %v1218 = vpack.c.b16 %v974, %v970
        %v1219 = vpack.c.b16 %v975, %v971
        %v1220 = vpack.c.b16 %v976, %v972
        %v1221 = vpack.c.b16 %v981, %v977
        %v1222 = vpack.c.b16 %v982, %v978
        %v1223 = vpack.c.b16 %v983, %v979
        %v1224 = vpack.c.b16 %v984, %v980
        %v1225 = vpack.c.b16 %v989, %v985
        %v1226 = vpack.c.b16 %v990, %v986
        %v1227 = vpack.c.b16 %v991, %v987
        %v1228 = vpack.c.b16 %v992, %v988
        %v1229 = vpack.c.b16 %v997, %v993
        %v1230 = vpack.c.b16 %v998, %v994
        %v1231 = vpack.c.b16 %v999, %v995
        %v1232 = vpack.c.b16 %v1000, %v996
        %v1233 = vpack.c.b16 %v1005, %v1001
        %v1234 = vpack.c.b16 %v1006, %v1002
        %v1235 = vpack.c.b16 %v1007, %v1003
        %v1236 = vpack.c.b16 %v1008, %v1004
        %v1237 = vpack.c.b16 %v1013, %v1009
        %v1238 = vpack.c.b16 %v1014, %v1010
        %v1239 = vpack.c.b16 %v1015, %v1011
        %v1240 = vpack.c.b16 %v1016, %v1012
        %v1241 = vpack.c.b16 %v1021, %v1017
        %v1242 = vpack.c.b16 %v1022, %v1018
        %v1243 = vpack.c.b16 %v1023, %v1019
        %v1244 = vpack.c.b16 %v1024, %v1020
        %v1245 = vpack.c.b16 %v1029, %v1025
        %v1246 = vpack.c.b16 %v1030, %v1026
        %v1247 = vpack.c.b16 %v1031, %v1027
        %v1248 = vpack.c.b16 %v1032, %v1028
        %v1249 = vpack.c.b16 %v1037, %v1033
        %v1250 = vpack.c.b16 %v1038, %v1034
        %v1251 = vpack.c.b16 %v1039, %v1035
        %v1252 = vpack.c.b16 %v1040, %v1036
        %v1253 = vpack.c.b16 %v1045, %v1041
        %v1254 = vpack.c.b16 %v1046, %v1042
        %v1255 = vpack.c.b16 %v1047, %v1043
        %v1256 = vpack.c.b16 %v1048, %v1044
        %v1257 = vpack.c.b16 %v1053, %v1049
        %v1258 = vpack.c.b16 %v1054, %v1050
        %v1259 = vpack.c.b16 %v1055, %v1051
        %v1260 = vpack.c.b16 %v1056, %v1052
        %v1261 = vpack.c.b16 %v1061, %v1057
        %v1262 = vpack.c.b16 %v1062, %v1058
        %v1263 = vpack.c.b16 %v1063, %v1059
        %v1264 = vpack.c.b16 %v1064, %v1060
        %v1265 = vpack.c.b16 %v1069, %v1065
        %v1266 = vpack.c.b16 %v1070, %v1066
        %v1267 = vpack.c.b16 %v1071, %v1067
        %v1268 = vpack.c.b16 %v1072, %v1068
        %v1269 = vpack.c.b16 %v1077, %v1073
        %v1270 = vpack.c.b16 %v1078, %v1074
        %v1271 = vpack.c.b16 %v1079, %v1075
        %v1272 = vpack.c.b16 %v1080, %v1076
        %v1273 = vpack.c.b16 %v1085, %v1081
        %v1274 = vpack.c.b16 %v1086, %v1082
        %v1275 = vpack.c.b16 %v1087, %v1083
        %v1276 = vpack.c.b16 %v1088, %v1084
        %v1277 = vpack.c.b16 %v1093, %v1089
        %v1278 = vpack.c.b16 %v1094, %v1090
        %v1279 = vpack.c.b16 %v1095, %v1091
        %v1280 = vpack.c.b16 %v1096, %v1092
        %v1281 = vpack.c.b16 %v1101, %v1097
        %v1282 = vpack.c.b16 %v1102, %v1098
        %v1283 = vpack.c.b16 %v1103, %v1099
        %v1284 = vpack.c.b16 %v1104, %v1100
        %v1285 = vpack.c.b16 %v1109, %v1105
        %v1286 = vpack.c.b16 %v1110, %v1106
        %v1287 = vpack.c.b16 %v1111, %v1107
        %v1288 = vpack.c.b16 %v1112, %v1108
        %v1289 = vpack.c.b16 %v1117, %v1113
        %v1290 = vpack.c.b16 %v1118, %v1114
        %v1291 = vpack.c.b16 %v1119, %v1115
        %v1292 = vpack.c.b16 %v1120, %v1116
        %v1293 = vpack.c.b16 %v1125, %v1121
        %v1294 = vpack.c.b16 %v1126, %v1122
        %v1295 = vpack.c.b16 %v1127, %v1123
        %v1296 = vpack.c.b16 %v1128, %v1124
        %v1297 = vpack.c.b16 %v1133, %v1129
        %v1298 = vpack.c.b16 %v1134, %v1130
        %v1299 = vpack.c.b16 %v1135, %v1131
        %v1300 = vpack.c.b16 %v1136, %v1132
        %v1301 = vpack.c.b16 %v1141, %v1137
        %v1302 = vpack.c.b16 %v1142, %v1138
        %v1303 = vpack.c.b16 %v1143, %v1139
        %v1304 = vpack.c.b16 %v1144, %v1140
        %v1305 = vpack.c.b16 %v1149, %v1145
        %v1306 = vpack.c.b16 %v1150, %v1146
        %v1307 = vpack.c.b16 %v1151, %v1147
        %v1308 = vpack.c.b16 %v1152, %v1148
        %v1309 = vpack.c.b16 %v1157, %v1153
        %v1310 = vpack.c.b16 %v1158, %v1154
        %v1311 = vpack.c.b16 %v1159, %v1155
        %v1312 = vpack.c.b16 %v1160, %v1156
        %v1313 = vpack.c.b16 %v1165, %v1161
        %v1314 = vpack.c.b16 %v1166, %v1162
        %v1315 = vpack.c.b16 %v1167, %v1163
        %v1316 = vpack.c.b16 %v1168, %v1164
        %v1317 = vpack.c.b16 %v1173, %v1169
        %v1318 = vpack.c.b16 %v1174, %v1170
        %v1319 = vpack.c.b16 %v1175, %v1171
        %v1320 = vpack.c.b16 %v1176, %v1172
        %v1321 = vpack.c.b16 %v1181, %v1177
        %v1322 = vpack.c.b16 %v1182, %v1178
        %v1323 = vpack.c.b16 %v1183, %v1179
        %v1324 = vpack.c.b16 %v1184, %v1180
        %v1325 = vpack.c.b16 %v1189, %v1185
        %v1326 = vpack.c.b16 %v1190, %v1186
        %v1327 = vpack.c.b16 %v1191, %v1187
        %v1328 = vpack.c.b16 %v1192, %v1188
        %v1329 = vpack.c.b16 %v1197, %v1193
        %v1330 = vpack.c.b16 %v1198, %v1194
        %v1331 = vpack.c.b16 %v1199, %v1195
        %v1332 = vpack.c.b16 %v1200, %v1196
        %v1333 = vpack.c.b16 %v1205, %v1201
        %v1334 = vpack.c.b16 %v1206, %v1202
        %v1335 = vpack.c.b16 %v1207, %v1203
        %v1336 = vpack.c.b16 %v1208, %v1204
        %1465 = vmatprep.subr.bf16.mxu0 %v1210
        %1466 = vmatpush1.bf16.msra.mxu0 %v1209
        %1467 = vmatprep.subr.bf16.mxu0 %v1214
        %1468 = vmatpush1.bf16.msra.mxu0 %v1213
        %1469 = vmatprep.subr.bf16.mxu0 %v1218
        %1470 = vmatpush1.bf16.msra.mxu0 %v1217
        %1471 = vmatprep.subr.bf16.mxu0 %v1222
        %1472 = vmatpush1.bf16.msra.mxu0 %v1221
        %1473 = vmatprep.subr.bf16.mxu0 %v1226
        %1474 = vmatpush1.bf16.msra.mxu0 %v1225
        %1475 = vmatprep.subr.bf16.mxu0 %v1230
        %1476 = vmatpush1.bf16.msra.mxu0 %v1229
        %1477 = vmatprep.subr.bf16.mxu0 %v1234
        %1478 = vmatpush1.bf16.msra.mxu0 %v1233
        %1479 = vmatprep.subr.bf16.mxu0 %v1238
        %1480 = vmatpush1.bf16.msra.mxu0 %v1237
        %1481 = vmatprep.subr.bf16.mxu0 %v1242
        %1482 = vmatpush1.bf16.msra.mxu0 %v1241
        %1483 = vmatprep.subr.bf16.mxu0 %v1246
        %1484 = vmatpush1.bf16.msra.mxu0 %v1245
        %1485 = vmatprep.subr.bf16.mxu0 %v1250
        %1486 = vmatpush1.bf16.msra.mxu0 %v1249
        %1487 = vmatprep.subr.bf16.mxu0 %v1254
        %1488 = vmatpush1.bf16.msra.mxu0 %v1253
        %1489 = vmatprep.subr.bf16.mxu0 %v1258
        %1490 = vmatpush1.bf16.msra.mxu0 %v1257
        %1491 = vmatprep.subr.bf16.mxu0 %v1262
        %1492 = vmatpush1.bf16.msra.mxu0 %v1261
        %1493 = vmatprep.subr.bf16.mxu0 %v1266
        %1494 = vmatpush1.bf16.msra.mxu0 %v1265
        %1495 = vmatprep.subr.bf16.mxu0 %v1270
        %1496 = vmatpush1.bf16.msra.mxu0 %v1269
        %1497 = vmatprep.mubr.bf16.mxu0 %v522
        %1498 = vmatmul.mubr.bf16.gmra.mrb[0].mxu0 %v521
        %v1499 = vpop.f32.mrb[0].mxu0
        %v1500 = vadd.f32 0.0, %v1499
        %v1501 = vpop.f32.mrb[0].mxu0
        %v1502 = vadd.f32 0.0, %v1501
        %v1503 = vpop.f32.mrb[0].mxu0
        %v1504 = vadd.f32 0.0, %v1503
        %v1505 = vpop.f32.mrb[0].mxu0
        %v1506 = vadd.f32 0.0, %v1505
        %1507 = vmatprep.mubr.bf16.mxu0 %v526
        %1508 = vmatmul.mubr.bf16.gmra.mrb[0].mxu0 %v525
        %v1509 = vpop.f32.mrb[0].mxu0
        %v1510 = vpop.f32.mrb[0].mxu0
        %v1511 = vpop.f32.mrb[0].mxu0
        %v1512 = vadd.f32 0.0, %v1511
        %v1513 = vpop.f32.mrb[0].mxu0
        %v1514 = vadd.f32 0.0, %v1513
        %1515 = vmatprep.mubr.bf16.mxu0 %v530
        %1516 = vmatmul.mubr.bf16.gmra.mrb[0].mxu0 %v529
        %v1517 = vpop.f32.mrb[0].mxu0
        %v1518 = vadd.f32 0.0, %v1517
        %v1519 = vpop.f32.mrb[0].mxu0
        %v1520 = vadd.f32 0.0, %v1519
        %v1521 = vpop.f32.mrb[0].mxu0
        %v1522 = vpop.f32.mrb[0].mxu0
        %1523 = vdwg.mxu0
        %1524 = vmatprep.subr.bf16.mxu0 %v1274
        %1525 = vmatpush1.bf16.msra.mxu0 %v1273
        %1526 = vmatprep.subr.bf16.mxu0 %v1278
        %1527 = vmatpush1.bf16.msra.mxu0 %v1277
        %1528 = vmatprep.subr.bf16.mxu0 %v1282
        %1529 = vmatpush1.bf16.msra.mxu0 %v1281
        %1530 = vmatprep.subr.bf16.mxu0 %v1286
        %1531 = vmatpush1.bf16.msra.mxu0 %v1285
        %1532 = vmatprep.subr.bf16.mxu0 %v1290
        %1533 = vmatpush1.bf16.msra.mxu0 %v1289
        %1534 = vmatprep.subr.bf16.mxu0 %v1294
        %1535 = vmatpush1.bf16.msra.mxu0 %v1293
        %1536 = vmatprep.subr.bf16.mxu0 %v1298
        %1537 = vmatpush1.bf16.msra.mxu0 %v1297
        %1538 = vmatprep.subr.bf16.mxu0 %v1302
        %1539 = vmatpush1.bf16.msra.mxu0 %v1301
        %1540 = vmatprep.subr.bf16.mxu0 %v1306
        %1541 = vmatpush1.bf16.msra.mxu0 %v1305
        %1542 = vmatprep.subr.bf16.mxu0 %v1310
        %1543 = vmatpush1.bf16.msra.mxu0 %v1309
        %1544 = vmatprep.subr.bf16.mxu0 %v1314
        %1545 = vmatpush1.bf16.msra.mxu0 %v1313
        %1546 = vmatprep.subr.bf16.mxu0 %v1318
        %1547 = vmatpush1.bf16.msra.mxu0 %v1317
        %1548 = vmatprep.subr.bf16.mxu0 %v1322
        %1549 = vmatpush1.bf16.msra.mxu0 %v1321
        %1550 = vmatprep.subr.bf16.mxu0 %v1326
        %1551 = vmatpush1.bf16.msra.mxu0 %v1325
        %1552 = vmatprep.subr.bf16.mxu0 %v1330
        %1553 = vmatpush1.bf16.msra.mxu0 %v1329
        %1554 = vmatprep.subr.bf16.mxu0 %v1334
        %1555 = vmatpush1.bf16.msra.mxu0 %v1333
        %1556 = vmatprep.mubr.bf16.mxu0 %v524
        %1557 = vmatmul.mubr.bf16.gmra.mrb[0].mxu0 %v523
        %v1558 = vpop.f32.mrb[0].mxu0
        %v1559 = vadd.f32 %v1500, %v1558
        %v1560 = vpop.f32.mrb[0].mxu0
        %v1561 = vadd.f32 %v1502, %v1560
        %v1562 = vpop.f32.mrb[0].mxu0
        %v1563 = vadd.f32 %v1504, %v1562
        %v1564 = vpop.f32.mrb[0].mxu0
        %v1565 = vadd.f32 %v1506, %v1564
        %1566 = vmatprep.mubr.bf16.mxu0 %v528
        %1567 = vmatmul.mubr.bf16.gmra.mrb[0].mxu0 %v527
        %v1568 = vpop.f32.mrb[0].mxu0
        %v1569 = vpop.f32.mrb[0].mxu0
        %v1570 = vpop.f32.mrb[0].mxu0
        %v1571 = vadd.f32 %v1512, %v1570
        %v1572 = vpop.f32.mrb[0].mxu0
        %v1573 = vadd.f32 %v1514, %v1572
        %1574 = vmatprep.mubr.bf16.mxu0 %v532
        %1575 = vmatmul.mubr.bf16.gmra.mrb[0].mxu0 %v531
        %v1576 = vpop.f32.mrb[0].mxu0
        %v1577 = vadd.f32 %v1518, %v1576
        %v1578 = vpop.f32.mrb[0].mxu0
        %v1579 = vadd.f32 %v1520, %v1578
        %v1580 = vpop.f32.mrb[0].mxu0
        %v1581 = vpop.f32.mrb[0].mxu0
        %1582 = vdwg.mxu0
        %1583 = vmatprep.subr.bf16.mxu0 %v1212
        %1584 = vmatpush1.bf16.msra.mxu0 %v1211
        %1585 = vmatprep.subr.bf16.mxu0 %v1216
        %1586 = vmatpush1.bf16.msra.mxu0 %v1215
        %1587 = vmatprep.subr.bf16.mxu0 %v1220
        %1588 = vmatpush1.bf16.msra.mxu0 %v1219
        %1589 = vmatprep.subr.bf16.mxu0 %v1224
        %1590 = vmatpush1.bf16.msra.mxu0 %v1223
        %1591 = vmatprep.subr.bf16.mxu0 %v1228
        %1592 = vmatpush1.bf16.msra.mxu0 %v1227
        %1593 = vmatprep.subr.bf16.mxu0 %v1232
        %1594 = vmatpush1.bf16.msra.mxu0 %v1231
        %1595 = vmatprep.subr.bf16.mxu0 %v1236
        %1596 = vmatpush1.bf16.msra.mxu0 %v1235
        %1597 = vmatprep.subr.bf16.mxu0 %v1240
        %1598 = vmatpush1.bf16.msra.mxu0 %v1239
        %1599 = vmatprep.subr.bf16.mxu0 %v1244
        %1600 = vmatpush1.bf16.msra.mxu0 %v1243
        %1601 = vmatprep.subr.bf16.mxu0 %v1248
        %1602 = vmatpush1.bf16.msra.mxu0 %v1247
        %1603 = vmatprep.subr.bf16.mxu0 %v1252
        %1604 = vmatpush1.bf16.msra.mxu0 %v1251
        %1605 = vmatprep.subr.bf16.mxu0 %v1256
        %1606 = vmatpush1.bf16.msra.mxu0 %v1255
        %1607 = vmatprep.subr.bf16.mxu0 %v1260
        %1608 = vmatpush1.bf16.msra.mxu0 %v1259
        %1609 = vmatprep.subr.bf16.mxu0 %v1264
        %1610 = vmatpush1.bf16.msra.mxu0 %v1263
        %1611 = vmatprep.subr.bf16.mxu0 %v1268
        %1612 = vmatpush1.bf16.msra.mxu0 %v1267
        %1613 = vmatprep.subr.bf16.mxu0 %v1272
        %1614 = vmatpush1.bf16.msra.mxu0 %v1271
        %1615 = vmatprep.mubr.bf16.mxu0 %v522
        %1616 = vmatmul.mubr.bf16.gmra.mrb[0].mxu0 %v521
        %v1617 = vpop.f32.mrb[0].mxu0
        %v1618 = vadd.f32 0.0, %v1617
        %v1619 = vpop.f32.mrb[0].mxu0
        %v1620 = vadd.f32 0.0, %v1619
        %v1621 = vpop.f32.mrb[0].mxu0
        %v1622 = vadd.f32 0.0, %v1621
        %v1623 = vpop.f32.mrb[0].mxu0
        %v1624 = vadd.f32 0.0, %v1623
        %1625 = vmatprep.mubr.bf16.mxu0 %v526
        %1626 = vmatmul.mubr.bf16.gmra.mrb[0].mxu0 %v525
        %v1627 = vpop.f32.mrb[0].mxu0
        %v1628 = vpop.f32.mrb[0].mxu0
        %v1629 = vpop.f32.mrb[0].mxu0
        %v1630 = vadd.f32 0.0, %v1629
        %v1631 = vpop.f32.mrb[0].mxu0
        %v1632 = vadd.f32 0.0, %v1631
        %1633 = vmatprep.mubr.bf16.mxu0 %v530
        %1634 = vmatmul.mubr.bf16.gmra.mrb[0].mxu0 %v529
        %v1635 = vpop.f32.mrb[0].mxu0
        %v1636 = vadd.f32 0.0, %v1635
        %v1637 = vpop.f32.mrb[0].mxu0
        %v1638 = vadd.f32 0.0, %v1637
        %v1639 = vpop.f32.mrb[0].mxu0
        %v1640 = vpop.f32.mrb[0].mxu0
        %1641 = vdwg.mxu0
        %1642 = vmatprep.subr.bf16.mxu0 %v1276
        %1643 = vmatpush1.bf16.msra.mxu0 %v1275
        %1644 = vmatprep.subr.bf16.mxu0 %v1280
        %1645 = vmatpush1.bf16.msra.mxu0 %v1279
        %1646 = vmatprep.subr.bf16.mxu0 %v1284
        %1647 = vmatpush1.bf16.msra.mxu0 %v1283
        %1648 = vmatprep.subr.bf16.mxu0 %v1288
        %1649 = vmatpush1.bf16.msra.mxu0 %v1287
        %1650 = vmatprep.subr.bf16.mxu0 %v1292
        %1651 = vmatpush1.bf16.msra.mxu0 %v1291
        %1652 = vmatprep.subr.bf16.mxu0 %v1296
        %1653 = vmatpush1.bf16.msra.mxu0 %v1295
        %1654 = vmatprep.subr.bf16.mxu0 %v1300
        %1655 = vmatpush1.bf16.msra.mxu0 %v1299
        %1656 = vmatprep.subr.bf16.mxu0 %v1304
        %1657 = vmatpush1.bf16.msra.mxu0 %v1303
        %1658 = vmatprep.subr.bf16.mxu0 %v1308
        %1659 = vmatpush1.bf16.msra.mxu0 %v1307
        %1660 = vmatprep.subr.bf16.mxu0 %v1312
        %1661 = vmatpush1.bf16.msra.mxu0 %v1311
        %1662 = vmatprep.subr.bf16.mxu0 %v1316
        %1663 = vmatpush1.bf16.msra.mxu0 %v1315
        %1664 = vmatprep.subr.bf16.mxu0 %v1320
        %1665 = vmatpush1.bf16.msra.mxu0 %v1319
        %1666 = vmatprep.subr.bf16.mxu0 %v1324
        %1667 = vmatpush1.bf16.msra.mxu0 %v1323
        %1668 = vmatprep.subr.bf16.mxu0 %v1328
        %1669 = vmatpush1.bf16.msra.mxu0 %v1327
        %1670 = vmatprep.subr.bf16.mxu0 %v1332
        %1671 = vmatpush1.bf16.msra.mxu0 %v1331
        %1672 = vmatprep.subr.bf16.mxu0 %v1336
        %1673 = vmatpush1.bf16.msra.mxu0 %v1335
        %1674 = vmatprep.mubr.bf16.mxu0 %v524
        %1675 = vmatmul.mubr.bf16.gmra.mrb[0].mxu0 %v523
        %v1676 = vpop.f32.mrb[0].mxu0
        %v1677 = vadd.f32 %v1618, %v1676
        %v1678 = vpop.f32.mrb[0].mxu0
        %v1679 = vadd.f32 %v1620, %v1678
        %v1680 = vpop.f32.mrb[0].mxu0
        %v1681 = vadd.f32 %v1622, %v1680
        %v1682 = vpop.f32.mrb[0].mxu0
        %v1683 = vadd.f32 %v1624, %v1682
        %1684 = vmatprep.mubr.bf16.mxu0 %v528
        %1685 = vmatmul.mubr.bf16.gmra.mrb[0].mxu0 %v527
        %v1686 = vpop.f32.mrb[0].mxu0
        %v1687 = vpop.f32.mrb[0].mxu0
        %v1688 = vpop.f32.mrb[0].mxu0
        %v1689 = vadd.f32 %v1630, %v1688
        %v1690 = vpop.f32.mrb[0].mxu0
        %v1691 = vadd.f32 %v1632, %v1690
        %1692 = vmatprep.mubr.bf16.mxu0 %v532
        %1693 = vmatmul.mubr.bf16.gmra.mrb[0].mxu0 %v531
        %v1694 = vpop.f32.mrb[0].mxu0
        %v1695 = vadd.f32 %v1636, %v1694
        %v1696 = vpop.f32.mrb[0].mxu0
        %v1697 = vadd.f32 %v1638, %v1696
        %v1698 = vpop.f32.mrb[0].mxu0
        %v1699 = vpop.f32.mrb[0].mxu0
        %1700 = vdwg.mxu0
        %vm1701 = vsmask.f32 4352
        %v1703 = vshrl.u32 %v505, 16
        %v1705 = vrot.slane %v1703, 3
        %v1706 = vshll.u32 %v505, 16
        %v1708 = vrot.slane %v1706, 4
        %v1709 = vor.u32 %v1705, %v1708
        %v1711 = vshrl.u32 %v509, 16
        %v1713 = vrot.slane %v1711, 3
        %v1714 = vshll.u32 %v509, 16
        %v1716 = vrot.slane %v1714, 4
        %v1717 = vor.u32 %v1713, %v1716
        %v1718 = vsel %vm1701, %v1709, %v1717
        %v1720 = vshrl.u32 %v506, 16
        %v1722 = vrot.slane %v1720, 3
        %v1723 = vshll.u32 %v506, 16
        %v1725 = vrot.slane %v1723, 4
        %v1726 = vor.u32 %v1722, %v1725
        %v1728 = vshrl.u32 %v510, 16
        %v1730 = vrot.slane %v1728, 3
        %v1731 = vshll.u32 %v510, 16
        %v1733 = vrot.slane %v1731, 4
        %v1734 = vor.u32 %v1730, %v1733
        %v1735 = vsel %vm1701, %v1726, %v1734
        %v1737 = vshrl.u32 %v507, 16
        %v1739 = vrot.slane %v1737, 3
        %v1740 = vshll.u32 %v507, 16
        %v1742 = vrot.slane %v1740, 4
        %v1743 = vor.u32 %v1739, %v1742
        %v1745 = vshrl.u32 %v511, 16
        %v1747 = vrot.slane %v1745, 3
        %v1748 = vshll.u32 %v511, 16
        %v1750 = vrot.slane %v1748, 4
        %v1751 = vor.u32 %v1747, %v1750
        %v1752 = vsel %vm1701, %v1743, %v1751
        %v1754 = vshrl.u32 %v508, 16
        %v1756 = vrot.slane %v1754, 3
        %v1757 = vshll.u32 %v508, 16
        %v1759 = vrot.slane %v1757, 4
        %v1760 = vor.u32 %v1756, %v1759
        %v1762 = vshrl.u32 %v512, 16
        %v1764 = vrot.slane %v1762, 3
        %v1765 = vshll.u32 %v512, 16
        %v1767 = vrot.slane %v1765, 4
        %v1768 = vor.u32 %v1764, %v1767
        %v1769 = vsel %vm1701, %v1760, %v1768
        %v1771 = vshrl.u32 %v513, 16
        %v1773 = vrot.slane %v1771, 3
        %v1774 = vshll.u32 %v513, 16
        %v1776 = vrot.slane %v1774, 4
        %v1777 = vor.u32 %v1773, %v1776
        %v1778 = vsel %vm1701, %v1717, %v1777
        %v1780 = vshrl.u32 %v514, 16
        %v1782 = vrot.slane %v1780, 3
        %v1783 = vshll.u32 %v514, 16
        %v1785 = vrot.slane %v1783, 4
        %v1786 = vor.u32 %v1782, %v1785
        %v1787 = vsel %vm1701, %v1734, %v1786
        %v1789 = vshrl.u32 %v515, 16
        %v1791 = vrot.slane %v1789, 3
        %v1792 = vshll.u32 %v515, 16
        %v1794 = vrot.slane %v1792, 4
        %v1795 = vor.u32 %v1791, %v1794
        %v1796 = vsel %vm1701, %v1751, %v1795
        %v1798 = vshrl.u32 %v516, 16
        %v1800 = vrot.slane %v1798, 3
        %v1801 = vshll.u32 %v516, 16
        %v1803 = vrot.slane %v1801, 4
        %v1804 = vor.u32 %v1800, %v1803
        %v1805 = vsel %vm1701, %v1768, %v1804
        %v1946 = vunpack.c.l.b16 %v569
        %v1947 = vunpack.c.h.b16 %v569
        %v1948 = vunpack.c.l.b16 %v570
        %v1949 = vunpack.c.h.b16 %v570
        %v1950 = vunpack.c.l.b16 %v571
        %v1951 = vunpack.c.h.b16 %v571
        %v1952 = vunpack.c.l.b16 %v572
        %v1953 = vunpack.c.h.b16 %v572
        %v1954 = vunpack.c.l.b16 %v573
        %v1955 = vunpack.c.h.b16 %v573
        %v1956 = vunpack.c.l.b16 %v574
        %v1957 = vunpack.c.h.b16 %v574
        %v1958 = vunpack.c.l.b16 %v575
        %v1959 = vunpack.c.h.b16 %v575
        %v1960 = vunpack.c.l.b16 %v576
        %v1961 = vunpack.c.h.b16 %v576
        %v1962 = vunpack.c.l.b16 %v577
        %v1963 = vunpack.c.h.b16 %v577
        %v1964 = vunpack.c.l.b16 %v578
        %v1965 = vunpack.c.h.b16 %v578
        %v1966 = vunpack.c.l.b16 %v579
        %v1967 = vunpack.c.h.b16 %v579
        %v1968 = vunpack.c.l.b16 %v580
        %v1969 = vunpack.c.h.b16 %v580
        %v1970 = vunpack.c.l.b16 %v581
        %v1971 = vunpack.c.h.b16 %v581
        %v1972 = vunpack.c.l.b16 %v582
        %v1973 = vunpack.c.h.b16 %v582
        %v1974 = vunpack.c.l.b16 %v583
        %v1975 = vunpack.c.h.b16 %v583
        %v1976 = vunpack.c.l.b16 %v584
        %v1977 = vunpack.c.h.b16 %v584
        %v1978 = vunpack.c.l.b16 %v585
        %v1979 = vunpack.c.h.b16 %v585
        %v1980 = vunpack.c.l.b16 %v586
        %v1981 = vunpack.c.h.b16 %v586
        %v1982 = vunpack.c.l.b16 %v587
        %v1983 = vunpack.c.h.b16 %v587
        %v1984 = vunpack.c.l.b16 %v588
        %v1985 = vunpack.c.h.b16 %v588
        %v1986 = vunpack.c.l.b16 %v589
        %v1987 = vunpack.c.h.b16 %v589
        %v1988 = vunpack.c.l.b16 %v590
        %v1989 = vunpack.c.h.b16 %v590
        %v1990 = vunpack.c.l.b16 %v591
        %v1991 = vunpack.c.h.b16 %v591
        %v1992 = vunpack.c.l.b16 %v592
        %v1993 = vunpack.c.h.b16 %v592
        %v1994 = vunpack.c.l.b16 %v593
        %v1995 = vunpack.c.h.b16 %v593
        %v1996 = vunpack.c.l.b16 %v594
        %v1997 = vunpack.c.h.b16 %v594
        %v1998 = vunpack.c.l.b16 %v595
        %v1999 = vunpack.c.h.b16 %v595
        %v2000 = vunpack.c.l.b16 %v596
        %v2001 = vunpack.c.h.b16 %v596
        %v2002 = vunpack.c.l.b16 %v597
        %v2003 = vunpack.c.h.b16 %v597
        %v2004 = vunpack.c.l.b16 %v598
        %v2005 = vunpack.c.h.b16 %v598
        %v2006 = vunpack.c.l.b16 %v599
        %v2007 = vunpack.c.h.b16 %v599
        %v2008 = vunpack.c.l.b16 %v600
        %v2009 = vunpack.c.h.b16 %v600
        %v2010 = vunpack.c.l.b16 %v601
        %v2011 = vunpack.c.h.b16 %v601
        %v2012 = vunpack.c.l.b16 %v602
        %v2013 = vunpack.c.h.b16 %v602
        %v2014 = vunpack.c.l.b16 %v603
        %v2015 = vunpack.c.h.b16 %v603
        %v2016 = vunpack.c.l.b16 %v604
        %v2017 = vunpack.c.h.b16 %v604
        %v2018 = vunpack.c.l.b16 %v605
        %v2019 = vunpack.c.h.b16 %v605
        %v2020 = vunpack.c.l.b16 %v606
        %v2021 = vunpack.c.h.b16 %v606
        %v2022 = vunpack.c.l.b16 %v607
        %v2023 = vunpack.c.h.b16 %v607
        %v2024 = vunpack.c.l.b16 %v608
        %v2025 = vunpack.c.h.b16 %v608
        %v2026 = vunpack.c.l.b16 %v609
        %v2027 = vunpack.c.h.b16 %v609
        %v2028 = vunpack.c.l.b16 %v610
        %v2029 = vunpack.c.h.b16 %v610
        %v2030 = vunpack.c.l.b16 %v611
        %v2031 = vunpack.c.h.b16 %v611
        %v2032 = vunpack.c.l.b16 %v612
        %v2033 = vunpack.c.h.b16 %v612
        %v2034 = vunpack.c.l.b16 %v613
        %v2035 = vunpack.c.h.b16 %v613
        %v2036 = vunpack.c.l.b16 %v614
        %v2037 = vunpack.c.h.b16 %v614
        %v2038 = vunpack.c.l.b16 %v615
        %v2039 = vunpack.c.h.b16 %v615
        %v2040 = vunpack.c.l.b16 %v616
        %v2041 = vunpack.c.h.b16 %v616
        %v2042 = vunpack.c.l.b16 %v617
        %v2043 = vunpack.c.h.b16 %v617
        %v2044 = vunpack.c.l.b16 %v618
        %v2045 = vunpack.c.h.b16 %v618
        %v2046 = vunpack.c.l.b16 %v619
        %v2047 = vunpack.c.h.b16 %v619
        %v2048 = vunpack.c.l.b16 %v620
        %v2049 = vunpack.c.h.b16 %v620
        %v2050 = vunpack.c.l.b16 %v621
        %v2051 = vunpack.c.h.b16 %v621
        %v2052 = vunpack.c.l.b16 %v622
        %v2053 = vunpack.c.h.b16 %v622
        %v2054 = vunpack.c.l.b16 %v623
        %v2055 = vunpack.c.h.b16 %v623
        %v2056 = vunpack.c.l.b16 %v624
        %v2057 = vunpack.c.h.b16 %v624
        %v2058 = vunpack.c.l.b16 %v625
        %v2059 = vunpack.c.h.b16 %v625
        %v2060 = vunpack.c.l.b16 %v626
        %v2061 = vunpack.c.h.b16 %v626
        %v2062 = vunpack.c.l.b16 %v627
        %v2063 = vunpack.c.h.b16 %v627
        %v2064 = vunpack.c.l.b16 %v628
        %v2065 = vunpack.c.h.b16 %v628
        %v2066 = vunpack.c.l.b16 %v629
        %v2067 = vunpack.c.h.b16 %v629
        %v2068 = vunpack.c.l.b16 %v630
        %v2069 = vunpack.c.h.b16 %v630
        %v2070 = vunpack.c.l.b16 %v631
        %v2071 = vunpack.c.h.b16 %v631
        %v2072 = vunpack.c.l.b16 %v632
        %v2073 = vunpack.c.h.b16 %v632
        %v2074 = vunpack.c.l.b16 %v633
        %v2075 = vunpack.c.h.b16 %v633
        %v2076 = vunpack.c.l.b16 %v634
        %v2077 = vunpack.c.h.b16 %v634
        %v2078 = vunpack.c.l.b16 %v635
        %v2079 = vunpack.c.h.b16 %v635
        %v2080 = vunpack.c.l.b16 %v636
        %v2081 = vunpack.c.h.b16 %v636
        %v2082 = vunpack.c.l.b16 %v637
        %v2083 = vunpack.c.h.b16 %v637
        %v2084 = vunpack.c.l.b16 %v638
        %v2085 = vunpack.c.h.b16 %v638
        %v2086 = vunpack.c.l.b16 %v639
        %v2087 = vunpack.c.h.b16 %v639
        %v2088 = vunpack.c.l.b16 %v640
        %v2089 = vunpack.c.h.b16 %v640
        %v2090 = vunpack.c.l.b16 %v641
        %v2091 = vunpack.c.h.b16 %v641
        %v2092 = vunpack.c.l.b16 %v642
        %v2093 = vunpack.c.h.b16 %v642
        %v2094 = vunpack.c.l.b16 %v643
        %v2095 = vunpack.c.h.b16 %v643
        %v2096 = vunpack.c.l.b16 %v644
        %v2097 = vunpack.c.h.b16 %v644
        %v2098 = vunpack.c.l.b16 %v645
        %v2099 = vunpack.c.h.b16 %v645
        %v2100 = vunpack.c.l.b16 %v646
        %v2101 = vunpack.c.h.b16 %v646
        %v2102 = vunpack.c.l.b16 %v647
        %v2103 = vunpack.c.h.b16 %v647
        %v2104 = vunpack.c.l.b16 %v648
        %v2105 = vunpack.c.h.b16 %v648
        %v2106 = vunpack.c.l.b16 %v649
        %v2107 = vunpack.c.h.b16 %v649
        %v2108 = vunpack.c.l.b16 %v650
        %v2109 = vunpack.c.h.b16 %v650
        %v2110 = vunpack.c.l.b16 %v651
        %v2111 = vunpack.c.h.b16 %v651
        %v2112 = vunpack.c.l.b16 %v652
        %v2113 = vunpack.c.h.b16 %v652
        %v2114 = vunpack.c.l.b16 %v653
        %v2115 = vunpack.c.h.b16 %v653
        %v2116 = vunpack.c.l.b16 %v654
        %v2117 = vunpack.c.h.b16 %v654
        %v2118 = vunpack.c.l.b16 %v655
        %v2119 = vunpack.c.h.b16 %v655
        %v2120 = vunpack.c.l.b16 %v656
        %v2121 = vunpack.c.h.b16 %v656
        %v2122 = vunpack.c.l.b16 %v657
        %v2123 = vunpack.c.h.b16 %v657
        %v2124 = vunpack.c.l.b16 %v658
        %v2125 = vunpack.c.h.b16 %v658
        %v2126 = vunpack.c.l.b16 %v659
        %v2127 = vunpack.c.h.b16 %v659
        %v2128 = vunpack.c.l.b16 %v660
        %v2129 = vunpack.c.h.b16 %v660
        %v2130 = vunpack.c.l.b16 %v661
        %v2131 = vunpack.c.h.b16 %v661
        %v2132 = vunpack.c.l.b16 %v662
        %v2133 = vunpack.c.h.b16 %v662
        %v2134 = vunpack.c.l.b16 %v663
        %v2135 = vunpack.c.h.b16 %v663
        %v2136 = vunpack.c.l.b16 %v664
        %v2137 = vunpack.c.h.b16 %v664
        %v2138 = vunpack.c.l.b16 %v665
        %v2139 = vunpack.c.h.b16 %v665
        %v2140 = vunpack.c.l.b16 %v666
        %v2141 = vunpack.c.h.b16 %v666
        %v2142 = vunpack.c.l.b16 %v667
        %v2143 = vunpack.c.h.b16 %v667
        %v2144 = vunpack.c.l.b16 %v668
        %v2145 = vunpack.c.h.b16 %v668
        %v2146 = vunpack.c.l.b16 %v669
        %v2147 = vunpack.c.h.b16 %v669
        %v2148 = vunpack.c.l.b16 %v670
        %v2149 = vunpack.c.h.b16 %v670
        %v2150 = vunpack.c.l.b16 %v671
        %v2151 = vunpack.c.h.b16 %v671
        %v2152 = vunpack.c.l.b16 %v672
        %v2153 = vunpack.c.h.b16 %v672
        %v2154 = vunpack.c.l.b16 %v673
        %v2155 = vunpack.c.h.b16 %v673
        %v2156 = vunpack.c.l.b16 %v674
        %v2157 = vunpack.c.h.b16 %v674
        %v2158 = vunpack.c.l.b16 %v675
        %v2159 = vunpack.c.h.b16 %v675
        %v2160 = vunpack.c.l.b16 %v676
        %v2161 = vunpack.c.h.b16 %v676
        %v2162 = vunpack.c.l.b16 %v677
        %v2163 = vunpack.c.h.b16 %v677
        %v2164 = vunpack.c.l.b16 %v678
        %v2165 = vunpack.c.h.b16 %v678
        %v2166 = vunpack.c.l.b16 %v679
        %v2167 = vunpack.c.h.b16 %v679
        %v2168 = vunpack.c.l.b16 %v680
        %v2169 = vunpack.c.h.b16 %v680
        %v2170 = vunpack.c.l.b16 %v681
        %v2171 = vunpack.c.h.b16 %v681
        %v2172 = vunpack.c.l.b16 %v682
        %v2173 = vunpack.c.h.b16 %v682
        %v2174 = vunpack.c.l.b16 %v683
        %v2175 = vunpack.c.h.b16 %v683
        %v2176 = vunpack.c.l.b16 %v684
        %v2177 = vunpack.c.h.b16 %v684
        %v2178 = vunpack.c.l.b16 %v685
        %v2179 = vunpack.c.h.b16 %v685
        %v2180 = vunpack.c.l.b16 %v686
        %v2181 = vunpack.c.h.b16 %v686
        %v2182 = vunpack.c.l.b16 %v687
        %v2183 = vunpack.c.h.b16 %v687
        %v2184 = vunpack.c.l.b16 %v688
        %v2185 = vunpack.c.h.b16 %v688
        %v2186 = vunpack.c.l.b16 %v689
        %v2187 = vunpack.c.h.b16 %v689
        %v2188 = vunpack.c.l.b16 %v690
        %v2189 = vunpack.c.h.b16 %v690
        %v2190 = vunpack.c.l.b16 %v691
        %v2191 = vunpack.c.h.b16 %v691
        %v2192 = vunpack.c.l.b16 %v692
        %v2193 = vunpack.c.h.b16 %v692
        %v2194 = vunpack.c.l.b16 %v693
        %v2195 = vunpack.c.h.b16 %v693
        %v2196 = vunpack.c.l.b16 %v694
        %v2197 = vunpack.c.h.b16 %v694
        %v2198 = vunpack.c.l.b16 %v695
        %v2199 = vunpack.c.h.b16 %v695
        %v2200 = vunpack.c.l.b16 %v696
        %v2201 = vunpack.c.h.b16 %v696
        %v2202 = vpack.c.b16 %v1950, %v1946
        %v2203 = vpack.c.b16 %v1951, %v1947
        %v2204 = vpack.c.b16 %v1952, %v1948
        %v2205 = vpack.c.b16 %v1953, %v1949
        %v2206 = vpack.c.b16 %v1958, %v1954
        %v2207 = vpack.c.b16 %v1959, %v1955
        %v2208 = vpack.c.b16 %v1960, %v1956
        %v2209 = vpack.c.b16 %v1961, %v1957
        %v2210 = vpack.c.b16 %v1966, %v1962
        %v2211 = vpack.c.b16 %v1967, %v1963
        %v2212 = vpack.c.b16 %v1968, %v1964
        %v2213 = vpack.c.b16 %v1969, %v1965
        %v2214 = vpack.c.b16 %v1974, %v1970
        %v2215 = vpack.c.b16 %v1975, %v1971
        %v2216 = vpack.c.b16 %v1976, %v1972
        %v2217 = vpack.c.b16 %v1977, %v1973
        %v2218 = vpack.c.b16 %v1982, %v1978
        %v2219 = vpack.c.b16 %v1983, %v1979
        %v2220 = vpack.c.b16 %v1984, %v1980
        %v2221 = vpack.c.b16 %v1985, %v1981
        %v2222 = vpack.c.b16 %v1990, %v1986
        %v2223 = vpack.c.b16 %v1991, %v1987
        %v2224 = vpack.c.b16 %v1992, %v1988
        %v2225 = vpack.c.b16 %v1993, %v1989
        %v2226 = vpack.c.b16 %v1998, %v1994
        %v2227 = vpack.c.b16 %v1999, %v1995
        %v2228 = vpack.c.b16 %v2000, %v1996
        %v2229 = vpack.c.b16 %v2001, %v1997
        %v2230 = vpack.c.b16 %v2006, %v2002
        %v2231 = vpack.c.b16 %v2007, %v2003
        %v2232 = vpack.c.b16 %v2008, %v2004
        %v2233 = vpack.c.b16 %v2009, %v2005
        %v2234 = vpack.c.b16 %v2014, %v2010
        %v2235 = vpack.c.b16 %v2015, %v2011
        %v2236 = vpack.c.b16 %v2016, %v2012
        %v2237 = vpack.c.b16 %v2017, %v2013
        %v2238 = vpack.c.b16 %v2022, %v2018
        %v2239 = vpack.c.b16 %v2023, %v2019
        %v2240 = vpack.c.b16 %v2024, %v2020
        %v2241 = vpack.c.b16 %v2025, %v2021
        %v2242 = vpack.c.b16 %v2030, %v2026
        %v2243 = vpack.c.b16 %v2031, %v2027
        %v2244 = vpack.c.b16 %v2032, %v2028
        %v2245 = vpack.c.b16 %v2033, %v2029
        %v2246 = vpack.c.b16 %v2038, %v2034
        %v2247 = vpack.c.b16 %v2039, %v2035
        %v2248 = vpack.c.b16 %v2040, %v2036
        %v2249 = vpack.c.b16 %v2041, %v2037
        %v2250 = vpack.c.b16 %v2046, %v2042
        %v2251 = vpack.c.b16 %v2047, %v2043
        %v2252 = vpack.c.b16 %v2048, %v2044
        %v2253 = vpack.c.b16 %v2049, %v2045
        %v2254 = vpack.c.b16 %v2054, %v2050
        %v2255 = vpack.c.b16 %v2055, %v2051
        %v2256 = vpack.c.b16 %v2056, %v2052
        %v2257 = vpack.c.b16 %v2057, %v2053
        %v2258 = vpack.c.b16 %v2062, %v2058
        %v2259 = vpack.c.b16 %v2063, %v2059
        %v2260 = vpack.c.b16 %v2064, %v2060
        %v2261 = vpack.c.b16 %v2065, %v2061
        %v2262 = vpack.c.b16 %v2070, %v2066
        %v2263 = vpack.c.b16 %v2071, %v2067
        %v2264 = vpack.c.b16 %v2072, %v2068
        %v2265 = vpack.c.b16 %v2073, %v2069
        %v2266 = vpack.c.b16 %v2078, %v2074
        %v2267 = vpack.c.b16 %v2079, %v2075
        %v2268 = vpack.c.b16 %v2080, %v2076
        %v2269 = vpack.c.b16 %v2081, %v2077
        %v2270 = vpack.c.b16 %v2086, %v2082
        %v2271 = vpack.c.b16 %v2087, %v2083
        %v2272 = vpack.c.b16 %v2088, %v2084
        %v2273 = vpack.c.b16 %v2089, %v2085
        %v2274 = vpack.c.b16 %v2094, %v2090
        %v2275 = vpack.c.b16 %v2095, %v2091
        %v2276 = vpack.c.b16 %v2096, %v2092
        %v2277 = vpack.c.b16 %v2097, %v2093
        %v2278 = vpack.c.b16 %v2102, %v2098
        %v2279 = vpack.c.b16 %v2103, %v2099
        %v2280 = vpack.c.b16 %v2104, %v2100
        %v2281 = vpack.c.b16 %v2105, %v2101
        %v2282 = vpack.c.b16 %v2110, %v2106
        %v2283 = vpack.c.b16 %v2111, %v2107
        %v2284 = vpack.c.b16 %v2112, %v2108
        %v2285 = vpack.c.b16 %v2113, %v2109
        %v2286 = vpack.c.b16 %v2118, %v2114
        %v2287 = vpack.c.b16 %v2119, %v2115
        %v2288 = vpack.c.b16 %v2120, %v2116
        %v2289 = vpack.c.b16 %v2121, %v2117
        %v2290 = vpack.c.b16 %v2126, %v2122
        %v2291 = vpack.c.b16 %v2127, %v2123
        %v2292 = vpack.c.b16 %v2128, %v2124
        %v2293 = vpack.c.b16 %v2129, %v2125
        %v2294 = vpack.c.b16 %v2134, %v2130
        %v2295 = vpack.c.b16 %v2135, %v2131
        %v2296 = vpack.c.b16 %v2136, %v2132
        %v2297 = vpack.c.b16 %v2137, %v2133
        %v2298 = vpack.c.b16 %v2142, %v2138
        %v2299 = vpack.c.b16 %v2143, %v2139
        %v2300 = vpack.c.b16 %v2144, %v2140
        %v2301 = vpack.c.b16 %v2145, %v2141
        %v2302 = vpack.c.b16 %v2150, %v2146
        %v2303 = vpack.c.b16 %v2151, %v2147
        %v2304 = vpack.c.b16 %v2152, %v2148
        %v2305 = vpack.c.b16 %v2153, %v2149
        %v2306 = vpack.c.b16 %v2158, %v2154
        %v2307 = vpack.c.b16 %v2159, %v2155
        %v2308 = vpack.c.b16 %v2160, %v2156
        %v2309 = vpack.c.b16 %v2161, %v2157
        %v2310 = vpack.c.b16 %v2166, %v2162
        %v2311 = vpack.c.b16 %v2167, %v2163
        %v2312 = vpack.c.b16 %v2168, %v2164
        %v2313 = vpack.c.b16 %v2169, %v2165
        %v2314 = vpack.c.b16 %v2174, %v2170
        %v2315 = vpack.c.b16 %v2175, %v2171
        %v2316 = vpack.c.b16 %v2176, %v2172
        %v2317 = vpack.c.b16 %v2177, %v2173
        %v2318 = vpack.c.b16 %v2182, %v2178
        %v2319 = vpack.c.b16 %v2183, %v2179
        %v2320 = vpack.c.b16 %v2184, %v2180
        %v2321 = vpack.c.b16 %v2185, %v2181
        %v2322 = vpack.c.b16 %v2190, %v2186
        %v2323 = vpack.c.b16 %v2191, %v2187
        %v2324 = vpack.c.b16 %v2192, %v2188
        %v2325 = vpack.c.b16 %v2193, %v2189
        %v2326 = vpack.c.b16 %v2198, %v2194
        %v2327 = vpack.c.b16 %v2199, %v2195
        %v2328 = vpack.c.b16 %v2200, %v2196
        %v2329 = vpack.c.b16 %v2201, %v2197
        %2458 = vmatprep.subr.bf16.mxu0 %v2203
        %2459 = vmatpush1.bf16.msra.mxu0 %v2202
        %2460 = vmatprep.subr.bf16.mxu0 %v2207
        %2461 = vmatpush1.bf16.msra.mxu0 %v2206
        %2462 = vmatprep.subr.bf16.mxu0 %v2211
        %2463 = vmatpush1.bf16.msra.mxu0 %v2210
        %2464 = vmatprep.subr.bf16.mxu0 %v2215
        %2465 = vmatpush1.bf16.msra.mxu0 %v2214
        %2466 = vmatprep.subr.bf16.mxu0 %v2219
        %2467 = vmatpush1.bf16.msra.mxu0 %v2218
        %2468 = vmatprep.subr.bf16.mxu0 %v2223
        %2469 = vmatpush1.bf16.msra.mxu0 %v2222
        %2470 = vmatprep.subr.bf16.mxu0 %v2227
        %2471 = vmatpush1.bf16.msra.mxu0 %v2226
        %2472 = vmatprep.subr.bf16.mxu0 %v2231
        %2473 = vmatpush1.bf16.msra.mxu0 %v2230
        %2474 = vmatprep.subr.bf16.mxu0 %v2235
        %2475 = vmatpush1.bf16.msra.mxu0 %v2234
        %2476 = vmatprep.subr.bf16.mxu0 %v2239
        %2477 = vmatpush1.bf16.msra.mxu0 %v2238
        %2478 = vmatprep.subr.bf16.mxu0 %v2243
        %2479 = vmatpush1.bf16.msra.mxu0 %v2242
        %2480 = vmatprep.subr.bf16.mxu0 %v2247
        %2481 = vmatpush1.bf16.msra.mxu0 %v2246
        %2482 = vmatprep.subr.bf16.mxu0 %v2251
        %2483 = vmatpush1.bf16.msra.mxu0 %v2250
        %2484 = vmatprep.subr.bf16.mxu0 %v2255
        %2485 = vmatpush1.bf16.msra.mxu0 %v2254
        %2486 = vmatprep.subr.bf16.mxu0 %v2259
        %2487 = vmatpush1.bf16.msra.mxu0 %v2258
        %2488 = vmatprep.subr.bf16.mxu0 %v2263
        %2489 = vmatpush1.bf16.msra.mxu0 %v2262
        %2490 = vmatprep.mubr.bf16.mxu0 %v1735
        %2491 = vmatmul.mubr.bf16.gmra.mrb[0].mxu0 %v1718
        %v2492 = vpop.f32.mrb[0].mxu0
        %v2493 = vadd.f32 %v1559, %v2492
        %v2494 = vpop.f32.mrb[0].mxu0
        %v2495 = vadd.f32 %v1561, %v2494
        %v2496 = vpop.f32.mrb[0].mxu0
        %v2497 = vadd.f32 %v1563, %v2496
        %v2498 = vpop.f32.mrb[0].mxu0
        %v2499 = vadd.f32 %v1565, %v2498
        %2500 = vmatprep.mubr.bf16.mxu0 %v1787
        %2501 = vmatmul.mubr.bf16.gmra.mrb[0].mxu0 %v1778
        %v2502 = vpop.f32.mrb[0].mxu0
        %v2503 = vpop.f32.mrb[0].mxu0
        %v2504 = vpop.f32.mrb[0].mxu0
        %v2505 = vadd.f32 %v1571, %v2504
        %v2506 = vpop.f32.mrb[0].mxu0
        %v2507 = vadd.f32 %v1573, %v2506
        %2508 = vmatprep.mubr.bf16.mxu0 %v1786
        %2509 = vmatmul.mubr.bf16.gmra.mrb[0].mxu0 %v1777
        %v2510 = vpop.f32.mrb[0].mxu0
        %v2511 = vadd.f32 %v1577, %v2510
        %v2512 = vpop.f32.mrb[0].mxu0
        %v2513 = vadd.f32 %v1579, %v2512
        %v2514 = vpop.f32.mrb[0].mxu0
        %v2515 = vpop.f32.mrb[0].mxu0
        %2516 = vdwg.mxu0
        %2517 = vmatprep.subr.bf16.mxu0 %v2267
        %2518 = vmatpush1.bf16.msra.mxu0 %v2266
        %2519 = vmatprep.subr.bf16.mxu0 %v2271
        %2520 = vmatpush1.bf16.msra.mxu0 %v2270
        %2521 = vmatprep.subr.bf16.mxu0 %v2275
        %2522 = vmatpush1.bf16.msra.mxu0 %v2274
        %2523 = vmatprep.subr.bf16.mxu0 %v2279
        %2524 = vmatpush1.bf16.msra.mxu0 %v2278
        %2525 = vmatprep.subr.bf16.mxu0 %v2283
        %2526 = vmatpush1.bf16.msra.mxu0 %v2282
        %2527 = vmatprep.subr.bf16.mxu0 %v2287
        %2528 = vmatpush1.bf16.msra.mxu0 %v2286
        %2529 = vmatprep.subr.bf16.mxu0 %v2291
        %2530 = vmatpush1.bf16.msra.mxu0 %v2290
        %2531 = vmatprep.subr.bf16.mxu0 %v2295
        %2532 = vmatpush1.bf16.msra.mxu0 %v2294
        %2533 = vmatprep.subr.bf16.mxu0 %v2299
        %2534 = vmatpush1.bf16.msra.mxu0 %v2298
        %2535 = vmatprep.subr.bf16.mxu0 %v2303
        %2536 = vmatpush1.bf16.msra.mxu0 %v2302
        %2537 = vmatprep.subr.bf16.mxu0 %v2307
        %2538 = vmatpush1.bf16.msra.mxu0 %v2306
        %2539 = vmatprep.subr.bf16.mxu0 %v2311
        %2540 = vmatpush1.bf16.msra.mxu0 %v2310
        %2541 = vmatprep.subr.bf16.mxu0 %v2315
        %2542 = vmatpush1.bf16.msra.mxu0 %v2314
        %2543 = vmatprep.subr.bf16.mxu0 %v2319
        %2544 = vmatpush1.bf16.msra.mxu0 %v2318
        %2545 = vmatprep.subr.bf16.mxu0 %v2323
        %2546 = vmatpush1.bf16.msra.mxu0 %v2322
        %2547 = vmatprep.subr.bf16.mxu0 %v2327
        %2548 = vmatpush1.bf16.msra.mxu0 %v2326
        %2549 = vmatprep.mubr.bf16.mxu0 %v1769
        %2550 = vmatmul.mubr.bf16.gmra.mrb[0].mxu0 %v1752
        %v2551 = vpop.f32.mrb[0].mxu0
        %v2552 = vadd.f32 %v2493, %v2551
        %v2553 = vpop.f32.mrb[0].mxu0
        %v2554 = vadd.f32 %v2495, %v2553
        %v2555 = vpop.f32.mrb[0].mxu0
        %v2556 = vadd.f32 %v2497, %v2555
        %v2557 = vpop.f32.mrb[0].mxu0
        %v2558 = vadd.f32 %v2499, %v2557
        %2559 = vmatprep.mubr.bf16.mxu0 %v1805
        %2560 = vmatmul.mubr.bf16.gmra.mrb[0].mxu0 %v1796
        %v2561 = vpop.f32.mrb[0].mxu0
        %v2562 = vpop.f32.mrb[0].mxu0
        %v2563 = vpop.f32.mrb[0].mxu0
        %v2564 = vadd.f32 %v2505, %v2563
        %v2565 = vpop.f32.mrb[0].mxu0
        %v2566 = vadd.f32 %v2507, %v2565
        %2567 = vmatprep.mubr.bf16.mxu0 %v1804
        %2568 = vmatmul.mubr.bf16.gmra.mrb[0].mxu0 %v1795
        %v2569 = vpop.f32.mrb[0].mxu0
        %v2570 = vadd.f32 %v2511, %v2569
        %v2571 = vpop.f32.mrb[0].mxu0
        %v2572 = vadd.f32 %v2513, %v2571
        %v2573 = vpop.f32.mrb[0].mxu0
        %v2574 = vpop.f32.mrb[0].mxu0
        %2575 = vdwg.mxu0
        %2576 = vmatprep.subr.bf16.mxu0 %v2205
        %2577 = vmatpush1.bf16.msra.mxu0 %v2204
        %2578 = vmatprep.subr.bf16.mxu0 %v2209
        %2579 = vmatpush1.bf16.msra.mxu0 %v2208
        %2580 = vmatprep.subr.bf16.mxu0 %v2213
        %2581 = vmatpush1.bf16.msra.mxu0 %v2212
        %2582 = vmatprep.subr.bf16.mxu0 %v2217
        %2583 = vmatpush1.bf16.msra.mxu0 %v2216
        %2584 = vmatprep.subr.bf16.mxu0 %v2221
        %2585 = vmatpush1.bf16.msra.mxu0 %v2220
        %2586 = vmatprep.subr.bf16.mxu0 %v2225
        %2587 = vmatpush1.bf16.msra.mxu0 %v2224
        %2588 = vmatprep.subr.bf16.mxu0 %v2229
        %2589 = vmatpush1.bf16.msra.mxu0 %v2228
        %2590 = vmatprep.subr.bf16.mxu0 %v2233
        %2591 = vmatpush1.bf16.msra.mxu0 %v2232
        %2592 = vmatprep.subr.bf16.mxu0 %v2237
        %2593 = vmatpush1.bf16.msra.mxu0 %v2236
        %2594 = vmatprep.subr.bf16.mxu0 %v2241
        %2595 = vmatpush1.bf16.msra.mxu0 %v2240
        %2596 = vmatprep.subr.bf16.mxu0 %v2245
        %2597 = vmatpush1.bf16.msra.mxu0 %v2244
        %2598 = vmatprep.subr.bf16.mxu0 %v2249
        %2599 = vmatpush1.bf16.msra.mxu0 %v2248
        %2600 = vmatprep.subr.bf16.mxu0 %v2253
        %2601 = vmatpush1.bf16.msra.mxu0 %v2252
        %2602 = vmatprep.subr.bf16.mxu0 %v2257
        %2603 = vmatpush1.bf16.msra.mxu0 %v2256
        %2604 = vmatprep.subr.bf16.mxu0 %v2261
        %2605 = vmatpush1.bf16.msra.mxu0 %v2260
        %2606 = vmatprep.subr.bf16.mxu0 %v2265
        %2607 = vmatpush1.bf16.msra.mxu0 %v2264
        %2608 = vmatprep.mubr.bf16.mxu0 %v1735
        %2609 = vmatmul.mubr.bf16.gmra.mrb[0].mxu0 %v1718
        %v2610 = vpop.f32.mrb[0].mxu0
        %v2611 = vadd.f32 %v1677, %v2610
        %v2612 = vpop.f32.mrb[0].mxu0
        %v2613 = vadd.f32 %v1679, %v2612
        %v2614 = vpop.f32.mrb[0].mxu0
        %v2615 = vadd.f32 %v1681, %v2614
        %v2616 = vpop.f32.mrb[0].mxu0
        %v2617 = vadd.f32 %v1683, %v2616
        %2618 = vmatprep.mubr.bf16.mxu0 %v1787
        %2619 = vmatmul.mubr.bf16.gmra.mrb[0].mxu0 %v1778
        %v2620 = vpop.f32.mrb[0].mxu0
        %v2621 = vpop.f32.mrb[0].mxu0
        %v2622 = vpop.f32.mrb[0].mxu0
        %v2623 = vadd.f32 %v1689, %v2622
        %v2624 = vpop.f32.mrb[0].mxu0
        %v2625 = vadd.f32 %v1691, %v2624
        %2626 = vmatprep.mubr.bf16.mxu0 %v1786
        %2627 = vmatmul.mubr.bf16.gmra.mrb[0].mxu0 %v1777
        %v2628 = vpop.f32.mrb[0].mxu0
        %v2629 = vadd.f32 %v1695, %v2628
        %v2630 = vpop.f32.mrb[0].mxu0
        %v2631 = vadd.f32 %v1697, %v2630
        %v2632 = vpop.f32.mrb[0].mxu0
        %v2633 = vpop.f32.mrb[0].mxu0
        %2634 = vdwg.mxu0
        %2635 = vmatprep.subr.bf16.mxu0 %v2269
        %2636 = vmatpush1.bf16.msra.mxu0 %v2268
        %2637 = vmatprep.subr.bf16.mxu0 %v2273
        %2638 = vmatpush1.bf16.msra.mxu0 %v2272
        %2639 = vmatprep.subr.bf16.mxu0 %v2277
        %2640 = vmatpush1.bf16.msra.mxu0 %v2276
        %2641 = vmatprep.subr.bf16.mxu0 %v2281
        %2642 = vmatpush1.bf16.msra.mxu0 %v2280
        %2643 = vmatprep.subr.bf16.mxu0 %v2285
        %2644 = vmatpush1.bf16.msra.mxu0 %v2284
        %2645 = vmatprep.subr.bf16.mxu0 %v2289
        %2646 = vmatpush1.bf16.msra.mxu0 %v2288
        %2647 = vmatprep.subr.bf16.mxu0 %v2293
        %2648 = vmatpush1.bf16.msra.mxu0 %v2292
        %2649 = vmatprep.subr.bf16.mxu0 %v2297
        %2650 = vmatpush1.bf16.msra.mxu0 %v2296
        %2651 = vmatprep.subr.bf16.mxu0 %v2301
        %2652 = vmatpush1.bf16.msra.mxu0 %v2300
        %2653 = vmatprep.subr.bf16.mxu0 %v2305
        %2654 = vmatpush1.bf16.msra.mxu0 %v2304
        %2655 = vmatprep.subr.bf16.mxu0 %v2309
        %2656 = vmatpush1.bf16.msra.mxu0 %v2308
        %2657 = vmatprep.subr.bf16.mxu0 %v2313
        %2658 = vmatpush1.bf16.msra.mxu0 %v2312
        %2659 = vmatprep.subr.bf16.mxu0 %v2317
        %2660 = vmatpush1.bf16.msra.mxu0 %v2316
        %2661 = vmatprep.subr.bf16.mxu0 %v2321
        %2662 = vmatpush1.bf16.msra.mxu0 %v2320
        %2663 = vmatprep.subr.bf16.mxu0 %v2325
        %2664 = vmatpush1.bf16.msra.mxu0 %v2324
        %2665 = vmatprep.subr.bf16.mxu0 %v2329
        %2666 = vmatpush1.bf16.msra.mxu0 %v2328
        %2667 = vmatprep.mubr.bf16.mxu0 %v1769
        %2668 = vmatmul.mubr.bf16.gmra.mrb[0].mxu0 %v1752
        %v2669 = vpop.f32.mrb[0].mxu0
        %v2670 = vadd.f32 %v2611, %v2669
        %v2671 = vpop.f32.mrb[0].mxu0
        %v2672 = vadd.f32 %v2613, %v2671
        %v2673 = vpop.f32.mrb[0].mxu0
        %v2674 = vadd.f32 %v2615, %v2673
        %v2675 = vpop.f32.mrb[0].mxu0
        %v2676 = vadd.f32 %v2617, %v2675
        %2677 = vmatprep.mubr.bf16.mxu0 %v1805
        %2678 = vmatmul.mubr.bf16.gmra.mrb[0].mxu0 %v1796
        %v2679 = vpop.f32.mrb[0].mxu0
        %v2680 = vpop.f32.mrb[0].mxu0
        %v2681 = vpop.f32.mrb[0].mxu0
        %v2682 = vadd.f32 %v2623, %v2681
        %v2683 = vpop.f32.mrb[0].mxu0
        %v2684 = vadd.f32 %v2625, %v2683
        %2685 = vmatprep.mubr.bf16.mxu0 %v1804
        %2686 = vmatmul.mubr.bf16.gmra.mrb[0].mxu0 %v1795
        %v2687 = vpop.f32.mrb[0].mxu0
        %v2688 = vadd.f32 %v2629, %v2687
        %v2689 = vpop.f32.mrb[0].mxu0
        %v2690 = vadd.f32 %v2631, %v2689
        %v2691 = vpop.f32.mrb[0].mxu0
        %v2692 = vpop.f32.mrb[0].mxu0
        %2693 = vdwg.mxu0
        %v2694 = vld [vmem:[%s333 + $0x800] sm:$0xff]
        %v2695 = vld [vmem:[%s333 + $0x808] sm:$0xff]
        %v2696 = vld [vmem:[%s333 + $0x810] sm:$0xff]
        %v2697 = vld [vmem:[%s333 + $0x818] sm:$0xff]
        %v2698 = vld [vmem:[%s333 + $0x820] sm:$0xff]
        %v2699 = vld [vmem:[%s333 + $0x828] sm:$0xff]
        %v2700 = vld [vmem:[%s333 + $0x830] sm:$0xff]
        %v2701 = vld [vmem:[%s333 + $0x838] sm:$0xff]
        %v2702 = vld [vmem:[%s333 + $0x840] sm:$0xff]
        %v2703 = vld [vmem:[%s333 + $0x848] sm:$0xff]
        %v2704 = vld [vmem:[%s333 + $0x850] sm:$0xff]
        %v2705 = vld [vmem:[%s333 + $0x858] sm:$0xff]
        %v2706 = vld [vmem:[%s333 + $0x860] sm:$0xff]
        %v2707 = vld [vmem:[%s333 + $0x868] sm:$0xff]
        %v2708 = vld [vmem:[%s333 + $0x870] sm:$0xff]
        %v2709 = vld [vmem:[%s333 + $0x878] sm:$0xff]
        %v2710 = vld [vmem:[%s333 + $0x880] sm:$0xff]
        %v2711 = vld [vmem:[%s333 + $0x888] sm:$0xff]
        %v2712 = vld [vmem:[%s333 + $0x890] sm:$0xff]
        %v2713 = vld [vmem:[%s333 + $0x898] sm:$0xff]
        %v2714 = vld [vmem:[%s333 + $0x8a0] sm:$0xff]
        %v2715 = vld [vmem:[%s333 + $0x8a8] sm:$0xff]
        %v2716 = vld [vmem:[%s333 + $0x8b0] sm:$0xff]
        %v2717 = vld [vmem:[%s333 + $0x8b8] sm:$0xff]
        %v2718 = vld [vmem:[%s333 + $0x8c0] sm:$0xff]
        %v2719 = vld [vmem:[%s333 + $0x8c8] sm:$0xff]
        %v2720 = vld [vmem:[%s333 + $0x8d0] sm:$0xff]
        %v2721 = vld [vmem:[%s333 + $0x8d8] sm:$0xff]
        %v2722 = vld [vmem:[%s333 + $0x8e0] sm:$0xff]
        %v2723 = vld [vmem:[%s333 + $0x8e8] sm:$0xff]
        %v2724 = vld [vmem:[%s333 + $0x8f0] sm:$0xff]
        %v2725 = vld [vmem:[%s333 + $0x8f8] sm:$0xff]
        %v2726 = vld [vmem:[%s333 + $0x900] sm:$0xff]
        %v2727 = vld [vmem:[%s333 + $0x908] sm:$0xff]
        %v2728 = vld [vmem:[%s333 + $0x910] sm:$0xff]
        %v2729 = vld [vmem:[%s333 + $0x918] sm:$0xff]
        %v2730 = vld [vmem:[%s333 + $0x920] sm:$0xff]
        %v2731 = vld [vmem:[%s333 + $0x928] sm:$0xff]
        %v2732 = vld [vmem:[%s333 + $0x930] sm:$0xff]
        %v2733 = vld [vmem:[%s333 + $0x938] sm:$0xff]
        %v2734 = vld [vmem:[%s333 + $0x940] sm:$0xff]
        %v2735 = vld [vmem:[%s333 + $0x948] sm:$0xff]
        %v2736 = vld [vmem:[%s333 + $0x950] sm:$0xff]
        %v2737 = vld [vmem:[%s333 + $0x958] sm:$0xff]
        %v2738 = vld [vmem:[%s333 + $0x960] sm:$0xff]
        %v2739 = vld [vmem:[%s333 + $0x968] sm:$0xff]
        %v2740 = vld [vmem:[%s333 + $0x970] sm:$0xff]
        %v2741 = vld [vmem:[%s333 + $0x978] sm:$0xff]
        %v2742 = vld [vmem:[%s333 + $0x980] sm:$0xff]
        %v2743 = vld [vmem:[%s333 + $0x988] sm:$0xff]
        %v2744 = vld [vmem:[%s333 + $0x990] sm:$0xff]
        %v2745 = vld [vmem:[%s333 + $0x998] sm:$0xff]
        %v2746 = vld [vmem:[%s333 + $0x9a0] sm:$0xff]
        %v2747 = vld [vmem:[%s333 + $0x9a8] sm:$0xff]
        %v2748 = vld [vmem:[%s333 + $0x9b0] sm:$0xff]
        %v2749 = vld [vmem:[%s333 + $0x9b8] sm:$0xff]
        %v2750 = vld [vmem:[%s333 + $0x9c0] sm:$0xff]
        %v2751 = vld [vmem:[%s333 + $0x9c8] sm:$0xff]
        %v2752 = vld [vmem:[%s333 + $0x9d0] sm:$0xff]
        %v2753 = vld [vmem:[%s333 + $0x9d8] sm:$0xff]
        %v2754 = vld [vmem:[%s333 + $0x9e0] sm:$0xff]
        %v2755 = vld [vmem:[%s333 + $0x9e8] sm:$0xff]
        %v2756 = vld [vmem:[%s333 + $0x9f0] sm:$0xff]
        %v2757 = vld [vmem:[%s333 + $0x9f8] sm:$0xff]
        %v2758 = vld [vmem:[%s333 + $0xa00] sm:$0xff]
        %v2759 = vld [vmem:[%s333 + $0xa08] sm:$0xff]
        %v2760 = vld [vmem:[%s333 + $0xa10] sm:$0xff]
        %v2761 = vld [vmem:[%s333 + $0xa18] sm:$0xff]
        %v2762 = vld [vmem:[%s333 + $0xa20] sm:$0xff]
        %v2763 = vld [vmem:[%s333 + $0xa28] sm:$0xff]
        %v2764 = vld [vmem:[%s333 + $0xa30] sm:$0xff]
        %v2765 = vld [vmem:[%s333 + $0xa38] sm:$0xff]
        %v2766 = vld [vmem:[%s333 + $0xa40] sm:$0xff]
        %v2767 = vld [vmem:[%s333 + $0xa48] sm:$0xff]
        %v2768 = vld [vmem:[%s333 + $0xa50] sm:$0xff]
        %v2769 = vld [vmem:[%s333 + $0xa58] sm:$0xff]
        %v2770 = vld [vmem:[%s333 + $0xa60] sm:$0xff]
        %v2771 = vld [vmem:[%s333 + $0xa68] sm:$0xff]
        %v2772 = vld [vmem:[%s333 + $0xa70] sm:$0xff]
        %v2773 = vld [vmem:[%s333 + $0xa78] sm:$0xff]
        %v2774 = vld [vmem:[%s333 + $0xa80] sm:$0xff]
        %v2775 = vld [vmem:[%s333 + $0xa88] sm:$0xff]
        %v2776 = vld [vmem:[%s333 + $0xa90] sm:$0xff]
        %v2777 = vld [vmem:[%s333 + $0xa98] sm:$0xff]
        %v2778 = vld [vmem:[%s333 + $0xaa0] sm:$0xff]
        %v2779 = vld [vmem:[%s333 + $0xaa8] sm:$0xff]
        %v2780 = vld [vmem:[%s333 + $0xab0] sm:$0xff]
        %v2781 = vld [vmem:[%s333 + $0xab8] sm:$0xff]
        %v2782 = vld [vmem:[%s333 + $0xac0] sm:$0xff]
        %v2783 = vld [vmem:[%s333 + $0xac8] sm:$0xff]
        %v2784 = vld [vmem:[%s333 + $0xad0] sm:$0xff]
        %v2785 = vld [vmem:[%s333 + $0xad8] sm:$0xff]
        %v2786 = vld [vmem:[%s333 + $0xae0] sm:$0xff]
        %v2787 = vld [vmem:[%s333 + $0xae8] sm:$0xff]
        %v2788 = vld [vmem:[%s333 + $0xaf0] sm:$0xff]
        %v2789 = vld [vmem:[%s333 + $0xaf8] sm:$0xff]
        %v2790 = vld [vmem:[%s333 + $0xb00] sm:$0xff]
        %v2791 = vld [vmem:[%s333 + $0xb08] sm:$0xff]
        %v2792 = vld [vmem:[%s333 + $0xb10] sm:$0xff]
        %v2793 = vld [vmem:[%s333 + $0xb18] sm:$0xff]
        %v2794 = vld [vmem:[%s333 + $0xb20] sm:$0xff]
        %v2795 = vld [vmem:[%s333 + $0xb28] sm:$0xff]
        %v2796 = vld [vmem:[%s333 + $0xb30] sm:$0xff]
        %v2797 = vld [vmem:[%s333 + $0xb38] sm:$0xff]
        %v2798 = vld [vmem:[%s333 + $0xb40] sm:$0xff]
        %v2799 = vld [vmem:[%s333 + $0xb48] sm:$0xff]
        %v2800 = vld [vmem:[%s333 + $0xb50] sm:$0xff]
        %v2801 = vld [vmem:[%s333 + $0xb58] sm:$0xff]
        %v2802 = vld [vmem:[%s333 + $0xb60] sm:$0xff]
        %v2803 = vld [vmem:[%s333 + $0xb68] sm:$0xff]
        %v2804 = vld [vmem:[%s333 + $0xb70] sm:$0xff]
        %v2805 = vld [vmem:[%s333 + $0xb78] sm:$0xff]
        %v2806 = vld [vmem:[%s333 + $0xb80] sm:$0xff]
        %v2807 = vld [vmem:[%s333 + $0xb88] sm:$0xff]
        %v2808 = vld [vmem:[%s333 + $0xb90] sm:$0xff]
        %v2809 = vld [vmem:[%s333 + $0xb98] sm:$0xff]
        %v2810 = vld [vmem:[%s333 + $0xba0] sm:$0xff]
        %v2811 = vld [vmem:[%s333 + $0xba8] sm:$0xff]
        %v2812 = vld [vmem:[%s333 + $0xbb0] sm:$0xff]
        %v2813 = vld [vmem:[%s333 + $0xbb8] sm:$0xff]
        %v2814 = vld [vmem:[%s333 + $0xbc0] sm:$0xff]
        %v2815 = vld [vmem:[%s333 + $0xbc8] sm:$0xff]
        %v2816 = vld [vmem:[%s333 + $0xbd0] sm:$0xff]
        %v2817 = vld [vmem:[%s333 + $0xbd8] sm:$0xff]
        %v2818 = vld [vmem:[%s333 + $0xbe0] sm:$0xff]
        %v2819 = vld [vmem:[%s333 + $0xbe8] sm:$0xff]
        %v2820 = vld [vmem:[%s333 + $0xbf0] sm:$0xff]
        %v2821 = vld [vmem:[%s333 + $0xbf8] sm:$0xff]
        %vm2822 = vsmask.f32 7424
        %v2824 = vshrl.u32 %v557, 16
        %v2826 = vshll.u32 %v557, 16
        %v2828 = vrot.slane %v2826, 1
        %v2829 = vor.u32 %v2824, %v2828
        %v2831 = vshll.u32 %v561, 16
        %v2833 = vrot.slane %v2831, 1
        %v2834 = vsel %vm2822, %v2829, %v2833
        %v2836 = vshrl.u32 %v558, 16
        %v2838 = vshll.u32 %v558, 16
        %v2840 = vrot.slane %v2838, 1
        %v2841 = vor.u32 %v2836, %v2840
        %v2843 = vshll.u32 %v562, 16
        %v2845 = vrot.slane %v2843, 1
        %v2846 = vsel %vm2822, %v2841, %v2845
        %v2848 = vshrl.u32 %v559, 16
        %v2850 = vshll.u32 %v559, 16
        %v2852 = vrot.slane %v2850, 1
        %v2853 = vor.u32 %v2848, %v2852
        %v2855 = vshll.u32 %v563, 16
        %v2857 = vrot.slane %v2855, 1
        %v2858 = vsel %vm2822, %v2853, %v2857
        %v2860 = vshrl.u32 %v560, 16
        %v2862 = vshll.u32 %v560, 16
        %v2864 = vrot.slane %v2862, 1
        %v2865 = vor.u32 %v2860, %v2864
        %v2867 = vshll.u32 %v564, 16
        %v2869 = vrot.slane %v2867, 1
        %v2870 = vsel %vm2822, %v2865, %v2869
        %v2871 = vshrl.u32 %v561, 16
        %v2873 = vor.u32 %v2871, %v2833
        %v2875 = vshll.u32 %v565, 16
        %v2877 = vrot.slane %v2875, 1
        %v2878 = vsel %vm2822, %v2873, %v2877
        %v2879 = vshrl.u32 %v562, 16
        %v2881 = vor.u32 %v2879, %v2845
        %v2883 = vshll.u32 %v566, 16
        %v2885 = vrot.slane %v2883, 1
        %v2886 = vsel %vm2822, %v2881, %v2885
        %v2887 = vshrl.u32 %v563, 16
        %v2889 = vor.u32 %v2887, %v2857
        %v2891 = vshll.u32 %v567, 16
        %v2893 = vrot.slane %v2891, 1
        %v2894 = vsel %vm2822, %v2889, %v2893
        %v2895 = vshrl.u32 %v564, 16
        %v2897 = vor.u32 %v2895, %v2869
        %v2899 = vshll.u32 %v568, 16
        %v2901 = vrot.slane %v2899, 1
        %v2902 = vsel %vm2822, %v2897, %v2901
        %v2903 = vshrl.u32 %v565, 16
        %v2905 = vor.u32 %v2903, %v2877
        %v2906 = vshrl.u32 %v566, 16
        %v2908 = vor.u32 %v2906, %v2885
        %v2909 = vshrl.u32 %v567, 16
        %v2911 = vor.u32 %v2909, %v2893
        %v2912 = vshrl.u32 %v568, 16
        %v2914 = vor.u32 %v2912, %v2901
        %v3055 = vunpack.c.l.b16 %v2694
        %v3056 = vunpack.c.h.b16 %v2694
        %v3057 = vunpack.c.l.b16 %v2695
        %v3058 = vunpack.c.h.b16 %v2695
        %v3059 = vunpack.c.l.b16 %v2696
        %v3060 = vunpack.c.h.b16 %v2696
        %v3061 = vunpack.c.l.b16 %v2697
        %v3062 = vunpack.c.h.b16 %v2697
        %v3063 = vunpack.c.l.b16 %v2698
        %v3064 = vunpack.c.h.b16 %v2698
        %v3065 = vunpack.c.l.b16 %v2699
        %v3066 = vunpack.c.h.b16 %v2699
        %v3067 = vunpack.c.l.b16 %v2700
        %v3068 = vunpack.c.h.b16 %v2700
        %v3069 = vunpack.c.l.b16 %v2701
        %v3070 = vunpack.c.h.b16 %v2701
        %v3071 = vunpack.c.l.b16 %v2702
        %v3072 = vunpack.c.h.b16 %v2702
        %v3073 = vunpack.c.l.b16 %v2703
        %v3074 = vunpack.c.h.b16 %v2703
        %v3075 = vunpack.c.l.b16 %v2704
        %v3076 = vunpack.c.h.b16 %v2704
        %v3077 = vunpack.c.l.b16 %v2705
        %v3078 = vunpack.c.h.b16 %v2705
        %v3079 = vunpack.c.l.b16 %v2706
        %v3080 = vunpack.c.h.b16 %v2706
        %v3081 = vunpack.c.l.b16 %v2707
        %v3082 = vunpack.c.h.b16 %v2707
        %v3083 = vunpack.c.l.b16 %v2708
        %v3084 = vunpack.c.h.b16 %v2708
        %v3085 = vunpack.c.l.b16 %v2709
        %v3086 = vunpack.c.h.b16 %v2709
        %v3087 = vunpack.c.l.b16 %v2710
        %v3088 = vunpack.c.h.b16 %v2710
        %v3089 = vunpack.c.l.b16 %v2711
        %v3090 = vunpack.c.h.b16 %v2711
        %v3091 = vunpack.c.l.b16 %v2712
        %v3092 = vunpack.c.h.b16 %v2712
        %v3093 = vunpack.c.l.b16 %v2713
        %v3094 = vunpack.c.h.b16 %v2713
        %v3095 = vunpack.c.l.b16 %v2714
        %v3096 = vunpack.c.h.b16 %v2714
        %v3097 = vunpack.c.l.b16 %v2715
        %v3098 = vunpack.c.h.b16 %v2715
        %v3099 = vunpack.c.l.b16 %v2716
        %v3100 = vunpack.c.h.b16 %v2716
        %v3101 = vunpack.c.l.b16 %v2717
        %v3102 = vunpack.c.h.b16 %v2717
        %v3103 = vunpack.c.l.b16 %v2718
        %v3104 = vunpack.c.h.b16 %v2718
        %v3105 = vunpack.c.l.b16 %v2719
        %v3106 = vunpack.c.h.b16 %v2719
        %v3107 = vunpack.c.l.b16 %v2720
        %v3108 = vunpack.c.h.b16 %v2720
        %v3109 = vunpack.c.l.b16 %v2721
        %v3110 = vunpack.c.h.b16 %v2721
        %v3111 = vunpack.c.l.b16 %v2722
        %v3112 = vunpack.c.h.b16 %v2722
        %v3113 = vunpack.c.l.b16 %v2723
        %v3114 = vunpack.c.h.b16 %v2723
        %v3115 = vunpack.c.l.b16 %v2724
        %v3116 = vunpack.c.h.b16 %v2724
        %v3117 = vunpack.c.l.b16 %v2725
        %v3118 = vunpack.c.h.b16 %v2725
        %v3119 = vunpack.c.l.b16 %v2726
        %v3120 = vunpack.c.h.b16 %v2726
        %v3121 = vunpack.c.l.b16 %v2727
        %v3122 = vunpack.c.h.b16 %v2727
        %v3123 = vunpack.c.l.b16 %v2728
        %v3124 = vunpack.c.h.b16 %v2728
        %v3125 = vunpack.c.l.b16 %v2729
        %v3126 = vunpack.c.h.b16 %v2729
        %v3127 = vunpack.c.l.b16 %v2730
        %v3128 = vunpack.c.h.b16 %v2730
        %v3129 = vunpack.c.l.b16 %v2731
        %v3130 = vunpack.c.h.b16 %v2731
        %v3131 = vunpack.c.l.b16 %v2732
        %v3132 = vunpack.c.h.b16 %v2732
        %v3133 = vunpack.c.l.b16 %v2733
        %v3134 = vunpack.c.h.b16 %v2733
        %v3135 = vunpack.c.l.b16 %v2734
        %v3136 = vunpack.c.h.b16 %v2734
        %v3137 = vunpack.c.l.b16 %v2735
        %v3138 = vunpack.c.h.b16 %v2735
        %v3139 = vunpack.c.l.b16 %v2736
        %v3140 = vunpack.c.h.b16 %v2736
        %v3141 = vunpack.c.l.b16 %v2737
        %v3142 = vunpack.c.h.b16 %v2737
        %v3143 = vunpack.c.l.b16 %v2738
        %v3144 = vunpack.c.h.b16 %v2738
        %v3145 = vunpack.c.l.b16 %v2739
        %v3146 = vunpack.c.h.b16 %v2739
        %v3147 = vunpack.c.l.b16 %v2740
        %v3148 = vunpack.c.h.b16 %v2740
        %v3149 = vunpack.c.l.b16 %v2741
        %v3150 = vunpack.c.h.b16 %v2741
        %v3151 = vunpack.c.l.b16 %v2742
        %v3152 = vunpack.c.h.b16 %v2742
        %v3153 = vunpack.c.l.b16 %v2743
        %v3154 = vunpack.c.h.b16 %v2743
        %v3155 = vunpack.c.l.b16 %v2744
        %v3156 = vunpack.c.h.b16 %v2744
        %v3157 = vunpack.c.l.b16 %v2745
        %v3158 = vunpack.c.h.b16 %v2745
        %v3159 = vunpack.c.l.b16 %v2746
        %v3160 = vunpack.c.h.b16 %v2746
        %v3161 = vunpack.c.l.b16 %v2747
        %v3162 = vunpack.c.h.b16 %v2747
        %v3163 = vunpack.c.l.b16 %v2748
        %v3164 = vunpack.c.h.b16 %v2748
        %v3165 = vunpack.c.l.b16 %v2749
        %v3166 = vunpack.c.h.b16 %v2749
        %v3167 = vunpack.c.l.b16 %v2750
        %v3168 = vunpack.c.h.b16 %v2750
        %v3169 = vunpack.c.l.b16 %v2751
        %v3170 = vunpack.c.h.b16 %v2751
        %v3171 = vunpack.c.l.b16 %v2752
        %v3172 = vunpack.c.h.b16 %v2752
        %v3173 = vunpack.c.l.b16 %v2753
        %v3174 = vunpack.c.h.b16 %v2753
        %v3175 = vunpack.c.l.b16 %v2754
        %v3176 = vunpack.c.h.b16 %v2754
        %v3177 = vunpack.c.l.b16 %v2755
        %v3178 = vunpack.c.h.b16 %v2755
        %v3179 = vunpack.c.l.b16 %v2756
        %v3180 = vunpack.c.h.b16 %v2756
        %v3181 = vunpack.c.l.b16 %v2757
        %v3182 = vunpack.c.h.b16 %v2757
        %v3183 = vunpack.c.l.b16 %v2758
        %v3184 = vunpack.c.h.b16 %v2758
        %v3185 = vunpack.c.l.b16 %v2759
        %v3186 = vunpack.c.h.b16 %v2759
        %v3187 = vunpack.c.l.b16 %v2760
        %v3188 = vunpack.c.h.b16 %v2760
        %v3189 = vunpack.c.l.b16 %v2761
        %v3190 = vunpack.c.h.b16 %v2761
        %v3191 = vunpack.c.l.b16 %v2762
        %v3192 = vunpack.c.h.b16 %v2762
        %v3193 = vunpack.c.l.b16 %v2763
        %v3194 = vunpack.c.h.b16 %v2763
        %v3195 = vunpack.c.l.b16 %v2764
        %v3196 = vunpack.c.h.b16 %v2764
        %v3197 = vunpack.c.l.b16 %v2765
        %v3198 = vunpack.c.h.b16 %v2765
        %v3199 = vunpack.c.l.b16 %v2766
        %v3200 = vunpack.c.h.b16 %v2766
        %v3201 = vunpack.c.l.b16 %v2767
        %v3202 = vunpack.c.h.b16 %v2767
        %v3203 = vunpack.c.l.b16 %v2768
        %v3204 = vunpack.c.h.b16 %v2768
        %v3205 = vunpack.c.l.b16 %v2769
        %v3206 = vunpack.c.h.b16 %v2769
        %v3207 = vunpack.c.l.b16 %v2770
        %v3208 = vunpack.c.h.b16 %v2770
        %v3209 = vunpack.c.l.b16 %v2771
        %v3210 = vunpack.c.h.b16 %v2771
        %v3211 = vunpack.c.l.b16 %v2772
        %v3212 = vunpack.c.h.b16 %v2772
        %v3213 = vunpack.c.l.b16 %v2773
        %v3214 = vunpack.c.h.b16 %v2773
        %v3215 = vunpack.c.l.b16 %v2774
        %v3216 = vunpack.c.h.b16 %v2774
        %v3217 = vunpack.c.l.b16 %v2775
        %v3218 = vunpack.c.h.b16 %v2775
        %v3219 = vunpack.c.l.b16 %v2776
        %v3220 = vunpack.c.h.b16 %v2776
        %v3221 = vunpack.c.l.b16 %v2777
        %v3222 = vunpack.c.h.b16 %v2777
        %v3223 = vunpack.c.l.b16 %v2778
        %v3224 = vunpack.c.h.b16 %v2778
        %v3225 = vunpack.c.l.b16 %v2779
        %v3226 = vunpack.c.h.b16 %v2779
        %v3227 = vunpack.c.l.b16 %v2780
        %v3228 = vunpack.c.h.b16 %v2780
        %v3229 = vunpack.c.l.b16 %v2781
        %v3230 = vunpack.c.h.b16 %v2781
        %v3231 = vunpack.c.l.b16 %v2782
        %v3232 = vunpack.c.h.b16 %v2782
        %v3233 = vunpack.c.l.b16 %v2783
        %v3234 = vunpack.c.h.b16 %v2783
        %v3235 = vunpack.c.l.b16 %v2784
        %v3236 = vunpack.c.h.b16 %v2784
        %v3237 = vunpack.c.l.b16 %v2785
        %v3238 = vunpack.c.h.b16 %v2785
        %v3239 = vunpack.c.l.b16 %v2786
        %v3240 = vunpack.c.h.b16 %v2786
        %v3241 = vunpack.c.l.b16 %v2787
        %v3242 = vunpack.c.h.b16 %v2787
        %v3243 = vunpack.c.l.b16 %v2788
        %v3244 = vunpack.c.h.b16 %v2788
        %v3245 = vunpack.c.l.b16 %v2789
        %v3246 = vunpack.c.h.b16 %v2789
        %v3247 = vunpack.c.l.b16 %v2790
        %v3248 = vunpack.c.h.b16 %v2790
        %v3249 = vunpack.c.l.b16 %v2791
        %v3250 = vunpack.c.h.b16 %v2791
        %v3251 = vunpack.c.l.b16 %v2792
        %v3252 = vunpack.c.h.b16 %v2792
        %v3253 = vunpack.c.l.b16 %v2793
        %v3254 = vunpack.c.h.b16 %v2793
        %v3255 = vunpack.c.l.b16 %v2794
        %v3256 = vunpack.c.h.b16 %v2794
        %v3257 = vunpack.c.l.b16 %v2795
        %v3258 = vunpack.c.h.b16 %v2795
        %v3259 = vunpack.c.l.b16 %v2796
        %v3260 = vunpack.c.h.b16 %v2796
        %v3261 = vunpack.c.l.b16 %v2797
        %v3262 = vunpack.c.h.b16 %v2797
        %v3263 = vunpack.c.l.b16 %v2798
        %v3264 = vunpack.c.h.b16 %v2798
        %v3265 = vunpack.c.l.b16 %v2799
        %v3266 = vunpack.c.h.b16 %v2799
        %v3267 = vunpack.c.l.b16 %v2800
        %v3268 = vunpack.c.h.b16 %v2800
        %v3269 = vunpack.c.l.b16 %v2801
        %v3270 = vunpack.c.h.b16 %v2801
        %v3271 = vunpack.c.l.b16 %v2802
        %v3272 = vunpack.c.h.b16 %v2802
        %v3273 = vunpack.c.l.b16 %v2803
        %v3274 = vunpack.c.h.b16 %v2803
        %v3275 = vunpack.c.l.b16 %v2804
        %v3276 = vunpack.c.h.b16 %v2804
        %v3277 = vunpack.c.l.b16 %v2805
        %v3278 = vunpack.c.h.b16 %v2805
        %v3279 = vunpack.c.l.b16 %v2806
        %v3280 = vunpack.c.h.b16 %v2806
        %v3281 = vunpack.c.l.b16 %v2807
        %v3282 = vunpack.c.h.b16 %v2807
        %v3283 = vunpack.c.l.b16 %v2808
        %v3284 = vunpack.c.h.b16 %v2808
        %v3285 = vunpack.c.l.b16 %v2809
        %v3286 = vunpack.c.h.b16 %v2809
        %v3287 = vunpack.c.l.b16 %v2810
        %v3288 = vunpack.c.h.b16 %v2810
        %v3289 = vunpack.c.l.b16 %v2811
        %v3290 = vunpack.c.h.b16 %v2811
        %v3291 = vunpack.c.l.b16 %v2812
        %v3292 = vunpack.c.h.b16 %v2812
        %v3293 = vunpack.c.l.b16 %v2813
        %v3294 = vunpack.c.h.b16 %v2813
        %v3295 = vunpack.c.l.b16 %v2814
        %v3296 = vunpack.c.h.b16 %v2814
        %v3297 = vunpack.c.l.b16 %v2815
        %v3298 = vunpack.c.h.b16 %v2815
        %v3299 = vunpack.c.l.b16 %v2816
        %v3300 = vunpack.c.h.b16 %v2816
        %v3301 = vunpack.c.l.b16 %v2817
        %v3302 = vunpack.c.h.b16 %v2817
        %v3303 = vunpack.c.l.b16 %v2818
        %v3304 = vunpack.c.h.b16 %v2818
        %v3305 = vunpack.c.l.b16 %v2819
        %v3306 = vunpack.c.h.b16 %v2819
        %v3307 = vunpack.c.l.b16 %v2820
        %v3308 = vunpack.c.h.b16 %v2820
        %v3309 = vunpack.c.l.b16 %v2821
        %v3310 = vunpack.c.h.b16 %v2821
        %v3311 = vpack.c.b16 %v3059, %v3055
        %v3312 = vpack.c.b16 %v3060, %v3056
        %v3313 = vpack.c.b16 %v3061, %v3057
        %v3314 = vpack.c.b16 %v3062, %v3058
        %v3315 = vpack.c.b16 %v3067, %v3063
        %v3316 = vpack.c.b16 %v3068, %v3064
        %v3317 = vpack.c.b16 %v3069, %v3065
        %v3318 = vpack.c.b16 %v3070, %v3066
        %v3319 = vpack.c.b16 %v3075, %v3071
        %v3320 = vpack.c.b16 %v3076, %v3072
        %v3321 = vpack.c.b16 %v3077, %v3073
        %v3322 = vpack.c.b16 %v3078, %v3074
        %v3323 = vpack.c.b16 %v3083, %v3079
        %v3324 = vpack.c.b16 %v3084, %v3080
        %v3325 = vpack.c.b16 %v3085, %v3081
        %v3326 = vpack.c.b16 %v3086, %v3082
        %v3327 = vpack.c.b16 %v3091, %v3087
        %v3328 = vpack.c.b16 %v3092, %v3088
        %v3329 = vpack.c.b16 %v3093, %v3089
        %v3330 = vpack.c.b16 %v3094, %v3090
        %v3331 = vpack.c.b16 %v3099, %v3095
        %v3332 = vpack.c.b16 %v3100, %v3096
        %v3333 = vpack.c.b16 %v3101, %v3097
        %v3334 = vpack.c.b16 %v3102, %v3098
        %v3335 = vpack.c.b16 %v3107, %v3103
        %v3336 = vpack.c.b16 %v3108, %v3104
        %v3337 = vpack.c.b16 %v3109, %v3105
        %v3338 = vpack.c.b16 %v3110, %v3106
        %v3339 = vpack.c.b16 %v3115, %v3111
        %v3340 = vpack.c.b16 %v3116, %v3112
        %v3341 = vpack.c.b16 %v3117, %v3113
        %v3342 = vpack.c.b16 %v3118, %v3114
        %v3343 = vpack.c.b16 %v3123, %v3119
        %v3344 = vpack.c.b16 %v3124, %v3120
        %v3345 = vpack.c.b16 %v3125, %v3121
        %v3346 = vpack.c.b16 %v3126, %v3122
        %v3347 = vpack.c.b16 %v3131, %v3127
        %v3348 = vpack.c.b16 %v3132, %v3128
        %v3349 = vpack.c.b16 %v3133, %v3129
        %v3350 = vpack.c.b16 %v3134, %v3130
        %v3351 = vpack.c.b16 %v3139, %v3135
        %v3352 = vpack.c.b16 %v3140, %v3136
        %v3353 = vpack.c.b16 %v3141, %v3137
        %v3354 = vpack.c.b16 %v3142, %v3138
        %v3355 = vpack.c.b16 %v3147, %v3143
        %v3356 = vpack.c.b16 %v3148, %v3144
        %v3357 = vpack.c.b16 %v3149, %v3145
        %v3358 = vpack.c.b16 %v3150, %v3146
        %v3359 = vpack.c.b16 %v3155, %v3151
        %v3360 = vpack.c.b16 %v3156, %v3152
        %v3361 = vpack.c.b16 %v3157, %v3153
        %v3362 = vpack.c.b16 %v3158, %v3154
        %v3363 = vpack.c.b16 %v3163, %v3159
        %v3364 = vpack.c.b16 %v3164, %v3160
        %v3365 = vpack.c.b16 %v3165, %v3161
        %v3366 = vpack.c.b16 %v3166, %v3162
        %v3367 = vpack.c.b16 %v3171, %v3167
        %v3368 = vpack.c.b16 %v3172, %v3168
        %v3369 = vpack.c.b16 %v3173, %v3169
        %v3370 = vpack.c.b16 %v3174, %v3170
        %v3371 = vpack.c.b16 %v3179, %v3175
        %v3372 = vpack.c.b16 %v3180, %v3176
        %v3373 = vpack.c.b16 %v3181, %v3177
        %v3374 = vpack.c.b16 %v3182, %v3178
        %v3375 = vpack.c.b16 %v3187, %v3183
        %v3376 = vpack.c.b16 %v3188, %v3184
        %v3377 = vpack.c.b16 %v3189, %v3185
        %v3378 = vpack.c.b16 %v3190, %v3186
        %v3379 = vpack.c.b16 %v3195, %v3191
        %v3380 = vpack.c.b16 %v3196, %v3192
        %v3381 = vpack.c.b16 %v3197, %v3193
        %v3382 = vpack.c.b16 %v3198, %v3194
        %v3383 = vpack.c.b16 %v3203, %v3199
        %v3384 = vpack.c.b16 %v3204, %v3200
        %v3385 = vpack.c.b16 %v3205, %v3201
        %v3386 = vpack.c.b16 %v3206, %v3202
        %v3387 = vpack.c.b16 %v3211, %v3207
        %v3388 = vpack.c.b16 %v3212, %v3208
        %v3389 = vpack.c.b16 %v3213, %v3209
        %v3390 = vpack.c.b16 %v3214, %v3210
        %v3391 = vpack.c.b16 %v3219, %v3215
        %v3392 = vpack.c.b16 %v3220, %v3216
        %v3393 = vpack.c.b16 %v3221, %v3217
        %v3394 = vpack.c.b16 %v3222, %v3218
        %v3395 = vpack.c.b16 %v3227, %v3223
        %v3396 = vpack.c.b16 %v3228, %v3224
        %v3397 = vpack.c.b16 %v3229, %v3225
        %v3398 = vpack.c.b16 %v3230, %v3226
        %v3399 = vpack.c.b16 %v3235, %v3231
        %v3400 = vpack.c.b16 %v3236, %v3232
        %v3401 = vpack.c.b16 %v3237, %v3233
        %v3402 = vpack.c.b16 %v3238, %v3234
        %v3403 = vpack.c.b16 %v3243, %v3239
        %v3404 = vpack.c.b16 %v3244, %v3240
        %v3405 = vpack.c.b16 %v3245, %v3241
        %v3406 = vpack.c.b16 %v3246, %v3242
        %v3407 = vpack.c.b16 %v3251, %v3247
        %v3408 = vpack.c.b16 %v3252, %v3248
        %v3409 = vpack.c.b16 %v3253, %v3249
        %v3410 = vpack.c.b16 %v3254, %v3250
        %v3411 = vpack.c.b16 %v3259, %v3255
        %v3412 = vpack.c.b16 %v3260, %v3256
        %v3413 = vpack.c.b16 %v3261, %v3257
        %v3414 = vpack.c.b16 %v3262, %v3258
        %v3415 = vpack.c.b16 %v3267, %v3263
        %v3416 = vpack.c.b16 %v3268, %v3264
        %v3417 = vpack.c.b16 %v3269, %v3265
        %v3418 = vpack.c.b16 %v3270, %v3266
        %v3419 = vpack.c.b16 %v3275, %v3271
        %v3420 = vpack.c.b16 %v3276, %v3272
        %v3421 = vpack.c.b16 %v3277, %v3273
        %v3422 = vpack.c.b16 %v3278, %v3274
        %v3423 = vpack.c.b16 %v3283, %v3279
        %v3424 = vpack.c.b16 %v3284, %v3280
        %v3425 = vpack.c.b16 %v3285, %v3281
        %v3426 = vpack.c.b16 %v3286, %v3282
        %v3427 = vpack.c.b16 %v3291, %v3287
        %v3428 = vpack.c.b16 %v3292, %v3288
        %v3429 = vpack.c.b16 %v3293, %v3289
        %v3430 = vpack.c.b16 %v3294, %v3290
        %v3431 = vpack.c.b16 %v3299, %v3295
        %v3432 = vpack.c.b16 %v3300, %v3296
        %v3433 = vpack.c.b16 %v3301, %v3297
        %v3434 = vpack.c.b16 %v3302, %v3298
        %v3435 = vpack.c.b16 %v3307, %v3303
        %v3436 = vpack.c.b16 %v3308, %v3304
        %v3437 = vpack.c.b16 %v3309, %v3305
        %v3438 = vpack.c.b16 %v3310, %v3306
        %3567 = vmatprep.subr.bf16.mxu0 %v3312
        %3568 = vmatpush1.bf16.msra.mxu0 %v3311
        %3569 = vmatprep.subr.bf16.mxu0 %v3316
        %3570 = vmatpush1.bf16.msra.mxu0 %v3315
        %3571 = vmatprep.subr.bf16.mxu0 %v3320
        %3572 = vmatpush1.bf16.msra.mxu0 %v3319
        %3573 = vmatprep.subr.bf16.mxu0 %v3324
        %3574 = vmatpush1.bf16.msra.mxu0 %v3323
        %3575 = vmatprep.subr.bf16.mxu0 %v3328
        %3576 = vmatpush1.bf16.msra.mxu0 %v3327
        %3577 = vmatprep.subr.bf16.mxu0 %v3332
        %3578 = vmatpush1.bf16.msra.mxu0 %v3331
        %3579 = vmatprep.subr.bf16.mxu0 %v3336
        %3580 = vmatpush1.bf16.msra.mxu0 %v3335
        %3581 = vmatprep.subr.bf16.mxu0 %v3340
        %3582 = vmatpush1.bf16.msra.mxu0 %v3339
        %3583 = vmatprep.subr.bf16.mxu0 %v3344
        %3584 = vmatpush1.bf16.msra.mxu0 %v3343
        %3585 = vmatprep.subr.bf16.mxu0 %v3348
        %3586 = vmatpush1.bf16.msra.mxu0 %v3347
        %3587 = vmatprep.subr.bf16.mxu0 %v3352
        %3588 = vmatpush1.bf16.msra.mxu0 %v3351
        %3589 = vmatprep.subr.bf16.mxu0 %v3356
        %3590 = vmatpush1.bf16.msra.mxu0 %v3355
        %3591 = vmatprep.subr.bf16.mxu0 %v3360
        %3592 = vmatpush1.bf16.msra.mxu0 %v3359
        %3593 = vmatprep.subr.bf16.mxu0 %v3364
        %3594 = vmatpush1.bf16.msra.mxu0 %v3363
        %3595 = vmatprep.subr.bf16.mxu0 %v3368
        %3596 = vmatpush1.bf16.msra.mxu0 %v3367
        %3597 = vmatprep.subr.bf16.mxu0 %v3372
        %3598 = vmatpush1.bf16.msra.mxu0 %v3371
        %3599 = vmatprep.mubr.bf16.mxu0 %v2846
        %3600 = vmatmul.mubr.bf16.gmra.mrb[0].mxu0 %v2834
        %v3601 = vpop.f32.mrb[0].mxu0
        %v3602 = vadd.f32 0.0, %v3601
        %v3603 = vpop.f32.mrb[0].mxu0
        %v3604 = vadd.f32 0.0, %v3603
        %v3605 = vpop.f32.mrb[0].mxu0
        %v3606 = vadd.f32 0.0, %v3605
        %v3607 = vpop.f32.mrb[0].mxu0
        %v3608 = vadd.f32 0.0, %v3607
        %3609 = vmatprep.mubr.bf16.mxu0 %v2886
        %3610 = vmatmul.mubr.bf16.gmra.mrb[0].mxu0 %v2878
        %v3611 = vpop.f32.mrb[0].mxu0
        %v3612 = vpop.f32.mrb[0].mxu0
        %v3613 = vpop.f32.mrb[0].mxu0
        %v3614 = vadd.f32 0.0, %v3613
        %v3615 = vpop.f32.mrb[0].mxu0
        %v3616 = vadd.f32 0.0, %v3615
        %3617 = vmatprep.mubr.bf16.mxu0 %v2908
        %3618 = vmatmul.mubr.bf16.gmra.mrb[0].mxu0 %v2905
        %v3619 = vpop.f32.mrb[0].mxu0
        %v3620 = vadd.f32 0.0, %v3619
        %v3621 = vpop.f32.mrb[0].mxu0
        %v3622 = vadd.f32 0.0, %v3621
        %v3623 = vpop.f32.mrb[0].mxu0
        %v3624 = vpop.f32.mrb[0].mxu0
        %3625 = vdwg.mxu0
        %3626 = vmatprep.subr.bf16.mxu0 %v3376
        %3627 = vmatpush1.bf16.msra.mxu0 %v3375
        %3628 = vmatprep.subr.bf16.mxu0 %v3380
        %3629 = vmatpush1.bf16.msra.mxu0 %v3379
        %3630 = vmatprep.subr.bf16.mxu0 %v3384
        %3631 = vmatpush1.bf16.msra.mxu0 %v3383
        %3632 = vmatprep.subr.bf16.mxu0 %v3388
        %3633 = vmatpush1.bf16.msra.mxu0 %v3387
        %3634 = vmatprep.subr.bf16.mxu0 %v3392
        %3635 = vmatpush1.bf16.msra.mxu0 %v3391
        %3636 = vmatprep.subr.bf16.mxu0 %v3396
        %3637 = vmatpush1.bf16.msra.mxu0 %v3395
        %3638 = vmatprep.subr.bf16.mxu0 %v3400
        %3639 = vmatpush1.bf16.msra.mxu0 %v3399
        %3640 = vmatprep.subr.bf16.mxu0 %v3404
        %3641 = vmatpush1.bf16.msra.mxu0 %v3403
        %3642 = vmatprep.subr.bf16.mxu0 %v3408
        %3643 = vmatpush1.bf16.msra.mxu0 %v3407
        %3644 = vmatprep.subr.bf16.mxu0 %v3412
        %3645 = vmatpush1.bf16.msra.mxu0 %v3411
        %3646 = vmatprep.subr.bf16.mxu0 %v3416
        %3647 = vmatpush1.bf16.msra.mxu0 %v3415
        %3648 = vmatprep.subr.bf16.mxu0 %v3420
        %3649 = vmatpush1.bf16.msra.mxu0 %v3419
        %3650 = vmatprep.subr.bf16.mxu0 %v3424
        %3651 = vmatpush1.bf16.msra.mxu0 %v3423
        %3652 = vmatprep.subr.bf16.mxu0 %v3428
        %3653 = vmatpush1.bf16.msra.mxu0 %v3427
        %3654 = vmatprep.subr.bf16.mxu0 %v3432
        %3655 = vmatpush1.bf16.msra.mxu0 %v3431
        %3656 = vmatprep.subr.bf16.mxu0 %v3436
        %3657 = vmatpush1.bf16.msra.mxu0 %v3435
        %3658 = vmatprep.mubr.bf16.mxu0 %v2870
        %3659 = vmatmul.mubr.bf16.gmra.mrb[0].mxu0 %v2858
        %v3660 = vpop.f32.mrb[0].mxu0
        %v3661 = vadd.f32 %v3602, %v3660
        %v3662 = vpop.f32.mrb[0].mxu0
        %v3663 = vadd.f32 %v3604, %v3662
        %v3664 = vpop.f32.mrb[0].mxu0
        %v3665 = vadd.f32 %v3606, %v3664
        %v3666 = vpop.f32.mrb[0].mxu0
        %v3667 = vadd.f32 %v3608, %v3666
        %3668 = vmatprep.mubr.bf16.mxu0 %v2902
        %3669 = vmatmul.mubr.bf16.gmra.mrb[0].mxu0 %v2894
        %v3670 = vpop.f32.mrb[0].mxu0
        %v3671 = vpop.f32.mrb[0].mxu0
        %v3672 = vpop.f32.mrb[0].mxu0
        %v3673 = vadd.f32 %v3614, %v3672
        %v3674 = vpop.f32.mrb[0].mxu0
        %v3675 = vadd.f32 %v3616, %v3674
        %3676 = vmatprep.mubr.bf16.mxu0 %v2914
        %3677 = vmatmul.mubr.bf16.gmra.mrb[0].mxu0 %v2911
        %v3678 = vpop.f32.mrb[0].mxu0
        %v3679 = vadd.f32 %v3620, %v3678
        %v3680 = vpop.f32.mrb[0].mxu0
        %v3681 = vadd.f32 %v3622, %v3680
        %v3682 = vpop.f32.mrb[0].mxu0
        %v3683 = vpop.f32.mrb[0].mxu0
        %3684 = vdwg.mxu0
        %3685 = vmatprep.subr.bf16.mxu0 %v3314
        %3686 = vmatpush1.bf16.msra.mxu0 %v3313
        %3687 = vmatprep.subr.bf16.mxu0 %v3318
        %3688 = vmatpush1.bf16.msra.mxu0 %v3317
        %3689 = vmatprep.subr.bf16.mxu0 %v3322
        %3690 = vmatpush1.bf16.msra.mxu0 %v3321
        %3691 = vmatprep.subr.bf16.mxu0 %v3326
        %3692 = vmatpush1.bf16.msra.mxu0 %v3325
        %3693 = vmatprep.subr.bf16.mxu0 %v3330
        %3694 = vmatpush1.bf16.msra.mxu0 %v3329
        %3695 = vmatprep.subr.bf16.mxu0 %v3334
        %3696 = vmatpush1.bf16.msra.mxu0 %v3333
        %3697 = vmatprep.subr.bf16.mxu0 %v3338
        %3698 = vmatpush1.bf16.msra.mxu0 %v3337
        %3699 = vmatprep.subr.bf16.mxu0 %v3342
        %3700 = vmatpush1.bf16.msra.mxu0 %v3341
        %3701 = vmatprep.subr.bf16.mxu0 %v3346
        %3702 = vmatpush1.bf16.msra.mxu0 %v3345
        %3703 = vmatprep.subr.bf16.mxu0 %v3350
        %3704 = vmatpush1.bf16.msra.mxu0 %v3349
        %3705 = vmatprep.subr.bf16.mxu0 %v3354
        %3706 = vmatpush1.bf16.msra.mxu0 %v3353
        %3707 = vmatprep.subr.bf16.mxu0 %v3358
        %3708 = vmatpush1.bf16.msra.mxu0 %v3357
        %3709 = vmatprep.subr.bf16.mxu0 %v3362
        %3710 = vmatpush1.bf16.msra.mxu0 %v3361
        %3711 = vmatprep.subr.bf16.mxu0 %v3366
        %3712 = vmatpush1.bf16.msra.mxu0 %v3365
        %3713 = vmatprep.subr.bf16.mxu0 %v3370
        %3714 = vmatpush1.bf16.msra.mxu0 %v3369
        %3715 = vmatprep.subr.bf16.mxu0 %v3374
        %3716 = vmatpush1.bf16.msra.mxu0 %v3373
        %3717 = vmatprep.mubr.bf16.mxu0 %v2846
        %3718 = vmatmul.mubr.bf16.gmra.mrb[0].mxu0 %v2834
        %v3719 = vpop.f32.mrb[0].mxu0
        %v3720 = vadd.f32 0.0, %v3719
        %v3721 = vpop.f32.mrb[0].mxu0
        %v3722 = vadd.f32 0.0, %v3721
        %v3723 = vpop.f32.mrb[0].mxu0
        %v3724 = vadd.f32 0.0, %v3723
        %v3725 = vpop.f32.mrb[0].mxu0
        %v3726 = vadd.f32 0.0, %v3725
        %3727 = vmatprep.mubr.bf16.mxu0 %v2886
        %3728 = vmatmul.mubr.bf16.gmra.mrb[0].mxu0 %v2878
        %v3729 = vpop.f32.mrb[0].mxu0
        %v3730 = vpop.f32.mrb[0].mxu0
        %v3731 = vpop.f32.mrb[0].mxu0
        %v3732 = vadd.f32 0.0, %v3731
        %v3733 = vpop.f32.mrb[0].mxu0
        %v3734 = vadd.f32 0.0, %v3733
        %3735 = vmatprep.mubr.bf16.mxu0 %v2908
        %3736 = vmatmul.mubr.bf16.gmra.mrb[0].mxu0 %v2905
        %v3737 = vpop.f32.mrb[0].mxu0
        %v3738 = vadd.f32 0.0, %v3737
        %v3739 = vpop.f32.mrb[0].mxu0
        %v3740 = vadd.f32 0.0, %v3739
        %v3741 = vpop.f32.mrb[0].mxu0
        %v3742 = vpop.f32.mrb[0].mxu0
        %3743 = vdwg.mxu0
        %3744 = vmatprep.subr.bf16.mxu0 %v3378
        %3745 = vmatpush1.bf16.msra.mxu0 %v3377
        %3746 = vmatprep.subr.bf16.mxu0 %v3382
        %3747 = vmatpush1.bf16.msra.mxu0 %v3381
        %3748 = vmatprep.subr.bf16.mxu0 %v3386
        %3749 = vmatpush1.bf16.msra.mxu0 %v3385
        %3750 = vmatprep.subr.bf16.mxu0 %v3390
        %3751 = vmatpush1.bf16.msra.mxu0 %v3389
        %3752 = vmatprep.subr.bf16.mxu0 %v3394
        %3753 = vmatpush1.bf16.msra.mxu0 %v3393
        %3754 = vmatprep.subr.bf16.mxu0 %v3398
        %3755 = vmatpush1.bf16.msra.mxu0 %v3397
        %3756 = vmatprep.subr.bf16.mxu0 %v3402
        %3757 = vmatpush1.bf16.msra.mxu0 %v3401
        %3758 = vmatprep.subr.bf16.mxu0 %v3406
        %3759 = vmatpush1.bf16.msra.mxu0 %v3405
        %3760 = vmatprep.subr.bf16.mxu0 %v3410
        %3761 = vmatpush1.bf16.msra.mxu0 %v3409
        %3762 = vmatprep.subr.bf16.mxu0 %v3414
        %3763 = vmatpush1.bf16.msra.mxu0 %v3413
        %3764 = vmatprep.subr.bf16.mxu0 %v3418
        %3765 = vmatpush1.bf16.msra.mxu0 %v3417
        %3766 = vmatprep.subr.bf16.mxu0 %v3422
        %3767 = vmatpush1.bf16.msra.mxu0 %v3421
        %3768 = vmatprep.subr.bf16.mxu0 %v3426
        %3769 = vmatpush1.bf16.msra.mxu0 %v3425
        %3770 = vmatprep.subr.bf16.mxu0 %v3430
        %3771 = vmatpush1.bf16.msra.mxu0 %v3429
        %3772 = vmatprep.subr.bf16.mxu0 %v3434
        %3773 = vmatpush1.bf16.msra.mxu0 %v3433
        %3774 = vmatprep.subr.bf16.mxu0 %v3438
        %3775 = vmatpush1.bf16.msra.mxu0 %v3437
        %3776 = vmatprep.mubr.bf16.mxu0 %v2870
        %3777 = vmatmul.mubr.bf16.gmra.mrb[0].mxu0 %v2858
        %v3778 = vpop.f32.mrb[0].mxu0
        %v3779 = vadd.f32 %v3720, %v3778
        %v3780 = vpop.f32.mrb[0].mxu0
        %v3781 = vadd.f32 %v3722, %v3780
        %v3782 = vpop.f32.mrb[0].mxu0
        %v3783 = vadd.f32 %v3724, %v3782
        %v3784 = vpop.f32.mrb[0].mxu0
        %v3785 = vadd.f32 %v3726, %v3784
        %3786 = vmatprep.mubr.bf16.mxu0 %v2902
        %3787 = vmatmul.mubr.bf16.gmra.mrb[0].mxu0 %v2894
        %v3788 = vpop.f32.mrb[0].mxu0
        %v3789 = vpop.f32.mrb[0].mxu0
        %v3790 = vpop.f32.mrb[0].mxu0
        %v3791 = vadd.f32 %v3732, %v3790
        %v3792 = vpop.f32.mrb[0].mxu0
        %v3793 = vadd.f32 %v3734, %v3792
        %3794 = vmatprep.mubr.bf16.mxu0 %v2914
        %3795 = vmatmul.mubr.bf16.gmra.mrb[0].mxu0 %v2911
        %v3796 = vpop.f32.mrb[0].mxu0
        %v3797 = vadd.f32 %v3738, %v3796
        %v3798 = vpop.f32.mrb[0].mxu0
        %v3799 = vadd.f32 %v3740, %v3798
        %v3800 = vpop.f32.mrb[0].mxu0
        %v3801 = vpop.f32.mrb[0].mxu0
        %3802 = vdwg.mxu0
        %v3803 = vadd.f32 %v2552, %v3661
        %v3804 = vadd.f32 %v2554, %v3663
        %v3805 = vadd.f32 %v2670, %v3779
        %v3806 = vadd.f32 %v2672, %v3781
        %v3807 = vadd.f32 %v2556, %v3665
        %v3808 = vadd.f32 %v2558, %v3667
        %v3809 = vadd.f32 %v2674, %v3783
        %v3810 = vadd.f32 %v2676, %v3785
        %v3811 = vadd.f32 %v2564, %v3673
        %v3812 = vadd.f32 %v2566, %v3675
        %v3813 = vadd.f32 %v2682, %v3791
        %v3814 = vadd.f32 %v2684, %v3793
        %v3815 = vadd.f32 %v2570, %v3679
        %v3816 = vadd.f32 %v2572, %v3681
        %v3817 = vadd.f32 %v2688, %v3797
        %v3818 = vadd.f32 %v2690, %v3799
        %v3819 = vld [vmem:[%s342] sm:$0xf]
        %v3821 = vlaneseq
        %v3822 = vshrl.u32 %v3821, 7
        %v3823 = vsub.s32 0, %v3822
        %v3824 = vrot.slane %v3819, %v3823
        %v3825 = vlaneseq
        %v3826 = vshrl.u32 %v3825, 7
        %v3827 = vsub.s32 1, %v3826
        %v3828 = vrot.slane %v3819, %v3827
        %v3829 = vlaneseq
        %v3830 = vshrl.u32 %v3829, 7
        %v3831 = vsub.s32 2, %v3830
        %v3832 = vrot.slane %v3819, %v3831
        %v3833 = vlaneseq
        %v3834 = vshrl.u32 %v3833, 7
        %v3835 = vsub.s32 3, %v3834
        %v3836 = vrot.slane %v3819, %v3835
        %v3841 = vadd.f32 %v3803, %v3824
        %v3842 = vadd.f32 %v3804, %v3828
        %v3843 = vadd.f32 %v3805, %v3832
        %v3844 = vadd.f32 %v3806, %v3836
        %v3845 = vadd.f32 %v3807, %v3824
        %v3846 = vadd.f32 %v3808, %v3828
        %v3847 = vadd.f32 %v3809, %v3832
        %v3848 = vadd.f32 %v3810, %v3836
        %v3849 = vadd.f32 %v3811, %v3824
        %v3850 = vadd.f32 %v3812, %v3828
        %v3851 = vadd.f32 %v3813, %v3832
        %v3852 = vadd.f32 %v3814, %v3836
        %v3853 = vadd.f32 %v3815, %v3824
        %v3854 = vadd.f32 %v3816, %v3828
        %v3855 = vadd.f32 %v3817, %v3832
        %v3856 = vadd.f32 %v3818, %v3836
        %v3857 = vadd.f32 %v3841, %v3845
        %v3858 = vadd.f32 %v3857, %v3849
        %v3859 = vadd.f32 %v3858, %v3853
        %v3860 = vrot.slane %v3859, 4
        %v3861 = vadd.f32 %v3859, %v3860
        %v3862 = vrot.slane %v3861, 2
        %v3863 = vadd.f32 %v3861, %v3862
        %v3864 = vrot.slane %v3863, 1
        %v3865 = vadd.f32 %v3863, %v3864
        %v3866 = vadd.f32 %v3842, %v3846
        %v3867 = vadd.f32 %v3866, %v3850
        %v3868 = vadd.f32 %v3867, %v3854
        %v3869 = vrot.slane %v3868, 4
        %v3870 = vadd.f32 %v3868, %v3869
        %v3871 = vrot.slane %v3870, 2
        %v3872 = vadd.f32 %v3870, %v3871
        %v3873 = vrot.slane %v3872, 1
        %v3874 = vadd.f32 %v3872, %v3873
        %v3875 = vadd.f32 %v3843, %v3847
        %v3876 = vadd.f32 %v3875, %v3851
        %v3877 = vadd.f32 %v3876, %v3855
        %v3878 = vrot.slane %v3877, 4
        %v3879 = vadd.f32 %v3877, %v3878
        %v3880 = vrot.slane %v3879, 2
        %v3881 = vadd.f32 %v3879, %v3880
        %v3882 = vrot.slane %v3881, 1
        %v3883 = vadd.f32 %v3881, %v3882
        %v3884 = vadd.f32 %v3844, %v3848
        %v3885 = vadd.f32 %v3884, %v3852
        %v3886 = vadd.f32 %v3885, %v3856
        %v3887 = vrot.slane %v3886, 4
        %v3888 = vadd.f32 %v3886, %v3887
        %v3889 = vrot.slane %v3888, 2
        %v3890 = vadd.f32 %v3888, %v3889
        %v3891 = vrot.slane %v3890, 1
        %v3892 = vadd.f32 %v3890, %v3891
        %v3893 = vmul.f32 %v3841, %v3841
        %v3894 = vmul.f32 %v3842, %v3842
        %v3895 = vmul.f32 %v3843, %v3843
        %v3896 = vmul.f32 %v3844, %v3844
        %v3897 = vmul.f32 %v3845, %v3845
        %v3898 = vmul.f32 %v3846, %v3846
        %v3899 = vmul.f32 %v3847, %v3847
        %v3900 = vmul.f32 %v3848, %v3848
        %v3901 = vmul.f32 %v3849, %v3849
        %v3902 = vmul.f32 %v3850, %v3850
        %v3903 = vmul.f32 %v3851, %v3851
        %v3904 = vmul.f32 %v3852, %v3852
        %v3905 = vmul.f32 %v3853, %v3853
        %v3906 = vmul.f32 %v3854, %v3854
        %v3907 = vmul.f32 %v3855, %v3855
        %v3908 = vmul.f32 %v3856, %v3856
        %v3909 = vadd.f32 %v3893, %v3897
        %v3910 = vadd.f32 %v3909, %v3901
        %v3911 = vadd.f32 %v3910, %v3905
        %v3912 = vrot.slane %v3911, 4
        %v3913 = vadd.f32 %v3911, %v3912
        %v3914 = vrot.slane %v3913, 2
        %v3915 = vadd.f32 %v3913, %v3914
        %v3916 = vrot.slane %v3915, 1
        %v3917 = vadd.f32 %v3915, %v3916
        %v3918 = vadd.f32 %v3894, %v3898
        %v3919 = vadd.f32 %v3918, %v3902
        %v3920 = vadd.f32 %v3919, %v3906
        %v3921 = vrot.slane %v3920, 4
        %v3922 = vadd.f32 %v3920, %v3921
        %v3923 = vrot.slane %v3922, 2
        %v3924 = vadd.f32 %v3922, %v3923
        %v3925 = vrot.slane %v3924, 1
        %v3926 = vadd.f32 %v3924, %v3925
        %v3927 = vadd.f32 %v3895, %v3899
        %v3928 = vadd.f32 %v3927, %v3903
        %v3929 = vadd.f32 %v3928, %v3907
        %v3930 = vrot.slane %v3929, 4
        %v3931 = vadd.f32 %v3929, %v3930
        %v3932 = vrot.slane %v3931, 2
        %v3933 = vadd.f32 %v3931, %v3932
        %v3934 = vrot.slane %v3933, 1
        %v3935 = vadd.f32 %v3933, %v3934
        %v3936 = vadd.f32 %v3896, %v3900
        %v3937 = vadd.f32 %v3936, %v3904
        %v3938 = vadd.f32 %v3937, %v3908
        %v3939 = vrot.slane %v3938, 4
        %v3940 = vadd.f32 %v3938, %v3939
        %v3941 = vrot.slane %v3940, 2
        %v3942 = vadd.f32 %v3940, %v3941
        %v3943 = vrot.slane %v3942, 1
        %v3944 = vadd.f32 %v3942, %v3943
        %vm3945 = vcmask 1040384
        %v3946 = vsel %vm3945, %v3865, %v3917
        %v3947 = vsel %vm3945, %v3874, %v3926
        %v3948 = vsel %vm3945, %v3883, %v3935
        %v3949 = vsel %vm3945, %v3892, %v3944
        %v3950 = vld [vmem:[%s5] sm:$0xff]
        %v3951 = vld [vmem:[%s5 + $0x8] sm:$0xff]
        %v3952 = vld [vmem:[%s5 + $0x10] sm:$0xff]
        %v3953 = vld [vmem:[%s5 + $0x18] sm:$0xff]
        %v3954 = vld [vmem:[%s5 + $0x20] sm:$0xff]
        %v3955 = vld [vmem:[%s5 + $0x28] sm:$0xff]
        %v3956 = vld [vmem:[%s5 + $0x30] sm:$0xff]
        %v3957 = vld [vmem:[%s5 + $0x38] sm:$0xff]
        %v3958 = vld [vmem:[%s5 + $0x40] sm:$0xff]
        %v3959 = vld [vmem:[%s5 + $0x48] sm:$0xff]
        %v3960 = vld [vmem:[%s5 + $0x50] sm:$0xff]
        %v3961 = vld [vmem:[%s5 + $0x58] sm:$0xff]
        %v3962 = vld [vmem:[%s5 + $0x60] sm:$0xff]
        %v3963 = vld [vmem:[%s5 + $0x68] sm:$0xff]
        %v3964 = vld [vmem:[%s5 + $0x70] sm:$0xff]
        %v3965 = vld [vmem:[%s5 + $0x78] sm:$0xff]
        %v3966 = vld [vmem:[%s5 + $0x80] sm:$0xff]
        %v3967 = vld [vmem:[%s5 + $0x88] sm:$0xff]
        %v3968 = vld [vmem:[%s5 + $0x90] sm:$0xff]
        %v3969 = vld [vmem:[%s5 + $0x98] sm:$0xff]
        %v3970 = vld [vmem:[%s5 + $0xa0] sm:$0xff]
        %v3971 = vld [vmem:[%s5 + $0xa8] sm:$0xff]
        %v3972 = vld [vmem:[%s5 + $0xb0] sm:$0xff]
        %v3973 = vld [vmem:[%s5 + $0xb8] sm:$0xff]
        %v3974 = vld [vmem:[%s5 + $0xc0] sm:$0xff]
        %v3975 = vld [vmem:[%s5 + $0xc8] sm:$0xff]
        %v3976 = vld [vmem:[%s5 + $0xd0] sm:$0xff]
        %v3977 = vld [vmem:[%s5 + $0xd8] sm:$0xff]
        %v3978 = vld [vmem:[%s5 + $0xe0] sm:$0xff]
        %v3979 = vld [vmem:[%s5 + $0xe8] sm:$0xff]
        %v3980 = vld [vmem:[%s5 + $0xf0] sm:$0xff]
        %v3981 = vld [vmem:[%s5 + $0xf8] sm:$0xff]
        %v3982 = vld [vmem:[%s5 + $0x100] sm:$0xff]
        %v3983 = vld [vmem:[%s5 + $0x108] sm:$0xff]
        %v3984 = vld [vmem:[%s5 + $0x110] sm:$0xff]
        %v3985 = vld [vmem:[%s5 + $0x118] sm:$0xff]
        %v3986 = vld [vmem:[%s5 + $0x120] sm:$0xff]
        %v3987 = vld [vmem:[%s5 + $0x128] sm:$0xff]
        %v3988 = vld [vmem:[%s5 + $0x130] sm:$0xff]
        %v3989 = vld [vmem:[%s5 + $0x138] sm:$0xff]
        %v3990 = vld [vmem:[%s5 + $0x140] sm:$0xff]
        %v3991 = vld [vmem:[%s5 + $0x148] sm:$0xff]
        %v3992 = vld [vmem:[%s5 + $0x150] sm:$0xff]
        %v3993 = vld [vmem:[%s5 + $0x158] sm:$0xff]
        %v3994 = vld [vmem:[%s5 + $0x160] sm:$0xff]
        %v3995 = vld [vmem:[%s5 + $0x168] sm:$0xff]
        %v3996 = vld [vmem:[%s5 + $0x170] sm:$0xff]
        %v3997 = vld [vmem:[%s5 + $0x178] sm:$0xff]
        %v3998 = vld [vmem:[%s5 + $0x180] sm:$0xff]
        %v3999 = vld [vmem:[%s5 + $0x188] sm:$0xff]
        %v4000 = vld [vmem:[%s5 + $0x190] sm:$0xff]
        %v4001 = vld [vmem:[%s5 + $0x198] sm:$0xff]
        %v4002 = vld [vmem:[%s5 + $0x1a0] sm:$0xff]
        %v4003 = vld [vmem:[%s5 + $0x1a8] sm:$0xff]
        %v4004 = vld [vmem:[%s5 + $0x1b0] sm:$0xff]
        %v4005 = vld [vmem:[%s5 + $0x1b8] sm:$0xff]
        %v4006 = vld [vmem:[%s5 + $0x1c0] sm:$0xff]
        %v4007 = vld [vmem:[%s5 + $0x1c8] sm:$0xff]
        %v4008 = vld [vmem:[%s5 + $0x1d0] sm:$0xff]
        %v4009 = vld [vmem:[%s5 + $0x1d8] sm:$0xff]
        %v4010 = vld [vmem:[%s5 + $0x1e0] sm:$0xff]
        %v4011 = vld [vmem:[%s5 + $0x1e8] sm:$0xff]
        %v4012 = vld [vmem:[%s5 + $0x1f0] sm:$0xff]
        %v4013 = vld [vmem:[%s5 + $0x1f8] sm:$0xff]
        %4014 = vmatprep.subr.mxu0 0.0
        %4015 = vmatpush1.msra.mxu0 %v3950
        %4016 = vmatprep.subr.mxu0 0.0
        %4017 = vmatpush1.msra.mxu0 %v3951
        %4018 = vmatprep.subr.mxu0 0.0
        %4019 = vmatpush1.msra.mxu0 %v3952
        %4020 = vmatprep.subr.mxu0 0.0
        %4021 = vmatpush1.msra.mxu0 %v3953
        %4022 = vmatprep.subr.mxu0 0.0
        %4023 = vmatpush1.msra.mxu0 %v3954
        %4024 = vmatprep.subr.mxu0 0.0
        %4025 = vmatpush1.msra.mxu0 %v3955
        %4026 = vmatprep.subr.mxu0 0.0
        %4027 = vmatpush1.msra.mxu0 %v3956
        %4028 = vmatprep.subr.mxu0 0.0
        %4029 = vmatpush1.msra.mxu0 %v3957
        %4030 = vmatprep.subr.mxu0 0.0
        %4031 = vmatpush1.msra.mxu0 %v3958
        %4032 = vmatprep.subr.mxu0 0.0
        %4033 = vmatpush1.msra.mxu0 %v3959
        %4034 = vmatprep.subr.mxu0 0.0
        %4035 = vmatpush1.msra.mxu0 %v3960
        %4036 = vmatprep.subr.mxu0 0.0
        %4037 = vmatpush1.msra.mxu0 %v3961
        %4038 = vmatprep.subr.mxu0 0.0
        %4039 = vmatpush1.msra.mxu0 %v3962
        %4040 = vmatprep.subr.mxu0 0.0
        %4041 = vmatpush1.msra.mxu0 %v3963
        %4042 = vmatprep.subr.mxu0 0.0
        %4043 = vmatpush1.msra.mxu0 %v3964
        %4044 = vmatprep.subr.mxu0 0.0
        %4045 = vmatpush1.msra.mxu0 %v3965
        %4046 = vmatprep.subr.mxu0 0.0
        %4047 = vmatpush1.msra.mxu0 %v3966
        %4048 = vmatprep.subr.mxu0 0.0
        %4049 = vmatpush1.msra.mxu0 %v3967
        %4050 = vmatprep.subr.mxu0 0.0
        %4051 = vmatpush1.msra.mxu0 %v3968
        %4052 = vmatprep.subr.mxu0 0.0
        %4053 = vmatpush1.msra.mxu0 %v3969
        %4054 = vmatprep.subr.mxu0 0.0
        %4055 = vmatpush1.msra.mxu0 %v3970
        %4056 = vmatprep.subr.mxu0 0.0
        %4057 = vmatpush1.msra.mxu0 %v3971
        %4058 = vmatprep.subr.mxu0 0.0
        %4059 = vmatpush1.msra.mxu0 %v3972
        %4060 = vmatprep.subr.mxu0 0.0
        %4061 = vmatpush1.msra.mxu0 %v3973
        %4062 = vmatprep.subr.mxu0 0.0
        %4063 = vmatpush1.msra.mxu0 %v3974
        %4064 = vmatprep.subr.mxu0 0.0
        %4065 = vmatpush1.msra.mxu0 %v3975
        %4066 = vmatprep.subr.mxu0 0.0
        %4067 = vmatpush1.msra.mxu0 %v3976
        %4068 = vmatprep.subr.mxu0 0.0
        %4069 = vmatpush1.msra.mxu0 %v3977
        %4070 = vmatprep.subr.mxu0 0.0
        %4071 = vmatpush1.msra.mxu0 %v3978
        %4072 = vmatprep.subr.mxu0 0.0
        %4073 = vmatpush1.msra.mxu0 %v3979
        %4074 = vmatprep.subr.mxu0 0.0
        %4075 = vmatpush1.msra.mxu0 %v3980
        %4076 = vmatprep.subr.mxu0 0.0
        %4077 = vmatpush1.msra.mxu0 %v3981
        %4078 = vmatprep.mubr.f32.mxu0 %v3947
        %4079 = vmatmul.mubr.f32.gmra.mrb[0].mxu0 %v3946
        %v4080 = vpop.f32.mrb[0].mxu0
        %v4081 = vadd.f32 0.0, %v4080
        %v4082 = vpop.f32.mrb[0].mxu0
        %4083 = vdwg.mxu0
        %4084 = vmatprep.subr.mxu0 0.0
        %4085 = vmatpush1.msra.mxu0 %v3982
        %4086 = vmatprep.subr.mxu0 0.0
        %4087 = vmatpush1.msra.mxu0 %v3983
        %4088 = vmatprep.subr.mxu0 0.0
        %4089 = vmatpush1.msra.mxu0 %v3984
        %4090 = vmatprep.subr.mxu0 0.0
        %4091 = vmatpush1.msra.mxu0 %v3985
        %4092 = vmatprep.subr.mxu0 0.0
        %4093 = vmatpush1.msra.mxu0 %v3986
        %4094 = vmatprep.subr.mxu0 0.0
        %4095 = vmatpush1.msra.mxu0 %v3987
        %4096 = vmatprep.subr.mxu0 0.0
        %4097 = vmatpush1.msra.mxu0 %v3988
        %4098 = vmatprep.subr.mxu0 0.0
        %4099 = vmatpush1.msra.mxu0 %v3989
        %4100 = vmatprep.subr.mxu0 0.0
        %4101 = vmatpush1.msra.mxu0 %v3990
        %4102 = vmatprep.subr.mxu0 0.0
        %4103 = vmatpush1.msra.mxu0 %v3991
        %4104 = vmatprep.subr.mxu0 0.0
        %4105 = vmatpush1.msra.mxu0 %v3992
        %4106 = vmatprep.subr.mxu0 0.0
        %4107 = vmatpush1.msra.mxu0 %v3993
        %4108 = vmatprep.subr.mxu0 0.0
        %4109 = vmatpush1.msra.mxu0 %v3994
        %4110 = vmatprep.subr.mxu0 0.0
        %4111 = vmatpush1.msra.mxu0 %v3995
        %4112 = vmatprep.subr.mxu0 0.0
        %4113 = vmatpush1.msra.mxu0 %v3996
        %4114 = vmatprep.subr.mxu0 0.0
        %4115 = vmatpush1.msra.mxu0 %v3997
        %4116 = vmatprep.subr.mxu0 0.0
        %4117 = vmatpush1.msra.mxu0 %v3998
        %4118 = vmatprep.subr.mxu0 0.0
        %4119 = vmatpush1.msra.mxu0 %v3999
        %4120 = vmatprep.subr.mxu0 0.0
        %4121 = vmatpush1.msra.mxu0 %v4000
        %4122 = vmatprep.subr.mxu0 0.0
        %4123 = vmatpush1.msra.mxu0 %v4001
        %4124 = vmatprep.subr.mxu0 0.0
        %4125 = vmatpush1.msra.mxu0 %v4002
        %4126 = vmatprep.subr.mxu0 0.0
        %4127 = vmatpush1.msra.mxu0 %v4003
        %4128 = vmatprep.subr.mxu0 0.0
        %4129 = vmatpush1.msra.mxu0 %v4004
        %4130 = vmatprep.subr.mxu0 0.0
        %4131 = vmatpush1.msra.mxu0 %v4005
        %4132 = vmatprep.subr.mxu0 0.0
        %4133 = vmatpush1.msra.mxu0 %v4006
        %4134 = vmatprep.subr.mxu0 0.0
        %4135 = vmatpush1.msra.mxu0 %v4007
        %4136 = vmatprep.subr.mxu0 0.0
        %4137 = vmatpush1.msra.mxu0 %v4008
        %4138 = vmatprep.subr.mxu0 0.0
        %4139 = vmatpush1.msra.mxu0 %v4009
        %4140 = vmatprep.subr.mxu0 0.0
        %4141 = vmatpush1.msra.mxu0 %v4010
        %4142 = vmatprep.subr.mxu0 0.0
        %4143 = vmatpush1.msra.mxu0 %v4011
        %4144 = vmatprep.subr.mxu0 0.0
        %4145 = vmatpush1.msra.mxu0 %v4012
        %4146 = vmatprep.subr.mxu0 0.0
        %4147 = vmatpush1.msra.mxu0 %v4013
        %4148 = vmatprep.mubr.f32.mxu0 %v3949
        %4149 = vmatmul.mubr.f32.gmra.mrb[0].mxu0 %v3948
        %v4150 = vpop.f32.mrb[0].mxu0
        %v4151 = vadd.f32 %v4081, %v4150
        %v4152 = vpop.f32.mrb[0].mxu0
        %4153 = vdwg.mxu0
        %v4154 = vmul.f32 %v4151, 0.001953125
        %v4155 = vmul.f32 %v4154, %v4154
        %v4157 = vrot.slane %v4155, 7
        %v4159 = vsub.f32 %v4154, %v4157
        %v4160 = vld [vmem:[%s350] sm:$0x1]
        %v4161 = vadd.f32 %v4159, 1e-05
        %v4162 = vrsqrt.pop %v4161
        %v4165 = vunpack.c.l.s4 1966171168
        %v4166 = vunpack.c.0.s8 %v4165
        %v4167 = vlaneseq
        %v4168 = vshrl.u32 %v4167, 7
        %v4169 = vsub.s32 %v4166, %v4168
        %v4170 = vrot.slane %v4162, %v4169
        %v4171 = vcombine.high %v4170, %v4170
        %v4173 = vunpack.c.l.s4 1966171168
        %v4174 = vunpack.c.0.s8 %v4173
        %v4175 = vlaneseq
        %v4176 = vshrl.u32 %v4175, 7
        %v4177 = vsub.s32 %v4174, %v4176
        %v4178 = vrot.slane %v4171, %v4177
        %v4180 = vmul.f32 %v4160, %v4178
        %v4181 = vld [vmem:[%s358] sm:$0x1]
        %v4182 = vmul.f32 %v4154, %v4180
        %v4183 = vsub.f32 %v4181, %v4182
        %v4185 = vlaneseq
        %v4186 = vshrl.u32 %v4185, 7
        %v4187 = vsub.s32 0, %v4186
        %v4188 = vrot.slane %v4183, %v4187
        %v4190 = vsel %vm3945, %v4180, %v4188
        %v4191 = vld [vmem:[#allocation11] sm:$0xff]
        %v4192 = vld [vmem:[#allocation11 + $0x8] sm:$0xff]
        %v4193 = vld [vmem:[#allocation11 + $0x10] sm:$0xff]
        %v4194 = vld [vmem:[#allocation11 + $0x18] sm:$0xff]
        %v4195 = vld [vmem:[#allocation11 + $0x20] sm:$0xff]
        %v4196 = vld [vmem:[#allocation11 + $0x28] sm:$0xff]
        %v4197 = vld [vmem:[#allocation11 + $0x30] sm:$0xff]
        %v4198 = vld [vmem:[#allocation11 + $0x38] sm:$0xff]
        %v4199 = vld [vmem:[#allocation11 + $0x40] sm:$0xff]
        %v4200 = vld [vmem:[#allocation11 + $0x48] sm:$0xff]
        %v4201 = vld [vmem:[#allocation11 + $0x50] sm:$0xff]
        %v4202 = vld [vmem:[#allocation11 + $0x58] sm:$0xff]
        %v4203 = vld [vmem:[#allocation11 + $0x60] sm:$0xff]
        %v4204 = vld [vmem:[#allocation11 + $0x68] sm:$0xff]
        %v4205 = vld [vmem:[#allocation11 + $0x70] sm:$0xff]
        %v4206 = vld [vmem:[#allocation11 + $0x78] sm:$0xff]
        %vm4207 = vcmask 261120
        %v4209 = vsel %vm4207, %v4190, 0
        %4211 = vmatprep.subr.mxu0 %v4192
        %4212 = vmatpush1.msra.mxu0 %v4191
        %4213 = vmatprep.subr.mxu0 %v4196
        %4214 = vmatpush1.msra.mxu0 %v4195
        %4215 = vmatprep.subr.mxu0 %v4200
        %4216 = vmatpush1.msra.mxu0 %v4199
        %4217 = vmatprep.subr.mxu0 %v4204
        %4218 = vmatpush1.msra.mxu0 %v4203
        %4219 = vmatprep.subr.mxu0 0.0
        %4220 = vmatpush1.msra.mxu0 0.0
        %4221 = vmatprep.subr.mxu0 0.0
        %4222 = vmatpush1.msra.mxu0 0.0
        %4223 = vmatprep.subr.mxu0 0.0
        %4224 = vmatpush1.msra.mxu0 0.0
        %4225 = vmatprep.subr.mxu0 0.0
        %4226 = vmatpush1.msra.mxu0 0.0
        %4227 = vmatprep.subr.mxu0 0.0
        %4228 = vmatpush1.msra.mxu0 0.0
        %4229 = vmatprep.subr.mxu0 0.0
        %4230 = vmatpush1.msra.mxu0 0.0
        %4231 = vmatprep.subr.mxu0 0.0
        %4232 = vmatpush1.msra.mxu0 0.0
        %4233 = vmatprep.subr.mxu0 0.0
        %4234 = vmatpush1.msra.mxu0 0.0
        %4235 = vmatprep.subr.mxu0 0.0
        %4236 = vmatpush1.msra.mxu0 0.0
        %4237 = vmatprep.subr.mxu0 0.0
        %4238 = vmatpush1.msra.mxu0 0.0
        %4239 = vmatprep.subr.mxu0 0.0
        %4240 = vmatpush1.msra.mxu0 0.0
        %4241 = vmatprep.subr.mxu0 0.0
        %4242 = vmatpush1.msra.mxu0 0.0
        %4243 = vmatprep.subr.mxu0 0.0
        %4244 = vmatpush1.msra.mxu0 0.0
        %4245 = vmatprep.subr.mxu0 0.0
        %4246 = vmatpush1.msra.mxu0 0.0
        %4247 = vmatprep.subr.mxu0 0.0
        %4248 = vmatpush1.msra.mxu0 0.0
        %4249 = vmatprep.subr.mxu0 0.0
        %4250 = vmatpush1.msra.mxu0 0.0
        %4251 = vmatprep.subr.mxu0 0.0
        %4252 = vmatpush1.msra.mxu0 0.0
        %4253 = vmatprep.subr.mxu0 0.0
        %4254 = vmatpush1.msra.mxu0 0.0
        %4255 = vmatprep.subr.mxu0 0.0
        %4256 = vmatpush1.msra.mxu0 0.0
        %4257 = vmatprep.subr.mxu0 0.0
        %4258 = vmatpush1.msra.mxu0 0.0
        %4259 = vmatprep.subr.mxu0 0.0
        %4260 = vmatpush1.msra.mxu0 0.0
        %4261 = vmatprep.subr.mxu0 0.0
        %4262 = vmatpush1.msra.mxu0 0.0
        %4263 = vmatprep.subr.mxu0 0.0
        %4264 = vmatpush1.msra.mxu0 0.0
        %4265 = vmatprep.subr.mxu0 0.0
        %4266 = vmatpush1.msra.mxu0 0.0
        %4267 = vmatprep.subr.mxu0 0.0
        %4268 = vmatpush1.msra.mxu0 0.0
        %4269 = vmatprep.subr.mxu0 0.0
        %4270 = vmatpush1.msra.mxu0 0.0
        %4271 = vmatprep.subr.mxu0 0.0
        %4272 = vmatpush1.msra.mxu0 0.0
        %4273 = vmatprep.subr.mxu0 0.0
        %4274 = vmatpush1.msra.mxu0 0.0
        %4275 = vmatprep.mubr.f32.mxu0 0.0
        %4276 = vmatmul.mubr.f32.gmra.mrb[0].mxu0 %v4209
        %v4277 = vpop.f32.mrb[0].mxu0
        %v4278 = vadd.f32 0.0, %v4277
        %v4279 = vpop.f32.mrb[0].mxu0
        %v4280 = vadd.f32 0.0, %v4279
        %4281 = vdwg.mxu0
        %4282 = vmatprep.subr.mxu0 %v4194
        %4283 = vmatpush1.msra.mxu0 %v4193
        %4284 = vmatprep.subr.mxu0 %v4198
        %4285 = vmatpush1.msra.mxu0 %v4197
        %4286 = vmatprep.subr.mxu0 %v4202
        %4287 = vmatpush1.msra.mxu0 %v4201
        %4288 = vmatprep.subr.mxu0 %v4206
        %4289 = vmatpush1.msra.mxu0 %v4205
        %4290 = vmatprep.subr.mxu0 0.0
        %4291 = vmatpush1.msra.mxu0 0.0
        %4292 = vmatprep.subr.mxu0 0.0
        %4293 = vmatpush1.msra.mxu0 0.0
        %4294 = vmatprep.subr.mxu0 0.0
        %4295 = vmatpush1.msra.mxu0 0.0
        %4296 = vmatprep.subr.mxu0 0.0
        %4297 = vmatpush1.msra.mxu0 0.0
        %4298 = vmatprep.subr.mxu0 0.0
        %4299 = vmatpush1.msra.mxu0 0.0
        %4300 = vmatprep.subr.mxu0 0.0
        %4301 = vmatpush1.msra.mxu0 0.0
        %4302 = vmatprep.subr.mxu0 0.0
        %4303 = vmatpush1.msra.mxu0 0.0
        %4304 = vmatprep.subr.mxu0 0.0
        %4305 = vmatpush1.msra.mxu0 0.0
        %4306 = vmatprep.subr.mxu0 0.0
        %4307 = vmatpush1.msra.mxu0 0.0
        %4308 = vmatprep.subr.mxu0 0.0
        %4309 = vmatpush1.msra.mxu0 0.0
        %4310 = vmatprep.subr.mxu0 0.0
        %4311 = vmatpush1.msra.mxu0 0.0
        %4312 = vmatprep.subr.mxu0 0.0
        %4313 = vmatpush1.msra.mxu0 0.0
        %4314 = vmatprep.subr.mxu0 0.0
        %4315 = vmatpush1.msra.mxu0 0.0
        %4316 = vmatprep.subr.mxu0 0.0
        %4317 = vmatpush1.msra.mxu0 0.0
        %4318 = vmatprep.subr.mxu0 0.0
        %4319 = vmatpush1.msra.mxu0 0.0
        %4320 = vmatprep.subr.mxu0 0.0
        %4321 = vmatpush1.msra.mxu0 0.0
        %4322 = vmatprep.subr.mxu0 0.0
        %4323 = vmatpush1.msra.mxu0 0.0
        %4324 = vmatprep.subr.mxu0 0.0
        %4325 = vmatpush1.msra.mxu0 0.0
        %4326 = vmatprep.subr.mxu0 0.0
        %4327 = vmatpush1.msra.mxu0 0.0
        %4328 = vmatprep.subr.mxu0 0.0
        %4329 = vmatpush1.msra.mxu0 0.0
        %4330 = vmatprep.subr.mxu0 0.0
        %4331 = vmatpush1.msra.mxu0 0.0
        %4332 = vmatprep.subr.mxu0 0.0
        %4333 = vmatpush1.msra.mxu0 0.0
        %4334 = vmatprep.subr.mxu0 0.0
        %4335 = vmatpush1.msra.mxu0 0.0
        %4336 = vmatprep.subr.mxu0 0.0
        %4337 = vmatpush1.msra.mxu0 0.0
        %4338 = vmatprep.subr.mxu0 0.0
        %4339 = vmatpush1.msra.mxu0 0.0
        %4340 = vmatprep.subr.mxu0 0.0
        %4341 = vmatpush1.msra.mxu0 0.0
        %4342 = vmatprep.subr.mxu0 0.0
        %4343 = vmatpush1.msra.mxu0 0.0
        %4344 = vmatprep.subr.mxu0 0.0
        %4345 = vmatpush1.msra.mxu0 0.0
        %4346 = vmatprep.mubr.f32.mxu0 0.0
        %4347 = vmatmul.mubr.f32.gmra.mrb[0].mxu0 %v4209
        %v4348 = vpop.f32.mrb[0].mxu0
        %v4349 = vadd.f32 0.0, %v4348
        %v4350 = vpop.f32.mrb[0].mxu0
        %v4351 = vadd.f32 0.0, %v4350
        %4352 = vdwg.mxu0
        %v4353 = vlaneseq
        %v4354 = vshrl.u32 %v4353, 7
        %v4355 = vsub.s32 0, %v4354
        %v4356 = vrot.slane %v4278, %v4355
        %v4357 = vlaneseq
        %v4358 = vshrl.u32 %v4357, 7
        %v4359 = vsub.s32 0, %v4358
        %v4360 = vrot.slane %v4280, %v4359
        %v4361 = vlaneseq
        %v4362 = vshrl.u32 %v4361, 7
        %v4363 = vsub.s32 0, %v4362
        %v4364 = vrot.slane %v4349, %v4363
        %v4365 = vlaneseq
        %v4366 = vshrl.u32 %v4365, 7
        %v4367 = vsub.s32 0, %v4366
        %v4368 = vrot.slane %v4351, %v4367
        %v4369 = vmul.f32 %v3841, %v4356
        %v4370 = vmul.f32 %v3842, %v4360
        %v4371 = vmul.f32 %v3843, %v4364
        %v4372 = vmul.f32 %v3844, %v4368
        %v4373 = vmul.f32 %v3845, %v4356
        %v4374 = vmul.f32 %v3846, %v4360
        %v4375 = vmul.f32 %v3847, %v4364
        %v4376 = vmul.f32 %v3848, %v4368
        %v4377 = vmul.f32 %v3849, %v4356
        %v4378 = vmul.f32 %v3850, %v4360
        %v4379 = vmul.f32 %v3851, %v4364
        %v4380 = vmul.f32 %v3852, %v4368
        %v4381 = vmul.f32 %v3853, %v4356
        %v4382 = vmul.f32 %v3854, %v4360
        %v4383 = vmul.f32 %v3855, %v4364
        %v4384 = vmul.f32 %v3856, %v4368
        %v4385 = vlaneseq
        %v4386 = vshrl.u32 %v4385, 7
        %v4387 = vsub.s32 1, %v4386
        %v4388 = vrot.slane %v4278, %v4387
        %v4389 = vlaneseq
        %v4390 = vshrl.u32 %v4389, 7
        %v4391 = vsub.s32 1, %v4390
        %v4392 = vrot.slane %v4280, %v4391
        %v4393 = vlaneseq
        %v4394 = vshrl.u32 %v4393, 7
        %v4395 = vsub.s32 1, %v4394
        %v4396 = vrot.slane %v4349, %v4395
        %v4397 = vlaneseq
        %v4398 = vshrl.u32 %v4397, 7
        %v4399 = vsub.s32 1, %v4398
        %v4400 = vrot.slane %v4351, %v4399
        %v4401 = vadd.f32 %v4369, %v4388
        %v4402 = vadd.f32 %v4370, %v4392
        %v4403 = vadd.f32 %v4371, %v4396
        %v4404 = vadd.f32 %v4372, %v4400
        %v4405 = vadd.f32 %v4373, %v4388
        %v4406 = vadd.f32 %v4374, %v4392
        %v4407 = vadd.f32 %v4375, %v4396
        %v4408 = vadd.f32 %v4376, %v4400
        %v4409 = vadd.f32 %v4377, %v4388
        %v4410 = vadd.f32 %v4378, %v4392
        %v4411 = vadd.f32 %v4379, %v4396
        %v4412 = vadd.f32 %v4380, %v4400
        %v4413 = vadd.f32 %v4381, %v4388
        %v4414 = vadd.f32 %v4382, %v4392
        %v4415 = vadd.f32 %v4383, %v4396
        %v4416 = vadd.f32 %v4384, %v4400
        %v4417 = vmax.f32 %v4401, 0.0
        %v4418 = vmax.f32 %v4402, 0.0
        %v4419 = vmax.f32 %v4403, 0.0
        %v4420 = vmax.f32 %v4404, 0.0
        %v4421 = vmax.f32 %v4405, 0.0
        %v4422 = vmax.f32 %v4406, 0.0
        %v4423 = vmax.f32 %v4407, 0.0
        %v4424 = vmax.f32 %v4408, 0.0
        %v4425 = vmax.f32 %v4409, 0.0
        %v4426 = vmax.f32 %v4410, 0.0
        %v4427 = vmax.f32 %v4411, 0.0
        %v4428 = vmax.f32 %v4412, 0.0
        %v4429 = vmax.f32 %v4413, 0.0
        %v4430 = vmax.f32 %v4414, 0.0
        %v4431 = vmax.f32 %v4415, 0.0
        %v4432 = vmax.f32 %v4416, 0.0
        %p4433 = scmp.ne.s32.totalorder %s27, 1
        // Predicated region
        $region73: #{residual_block.1} parent=47 // pred_check
          %p4434 = pneg %p4433
        $region74: #{residual_block.1} parent=47 // pred_check_branch
          %4436 = sbr.rel (%p4434) target = $region76
        $region75: #{residual_block.1} parent=47 // pred_region
          %4437 = vst [vmem:[#allocation2] sm:$0xff] %v4417
          %4438 = vst [vmem:[#allocation2 + $0x8] sm:$0xff] %v4418
          %4439 = vst [vmem:[#allocation2 + $0x10] sm:$0xff] %v4419
          %4440 = vst [vmem:[#allocation2 + $0x18] sm:$0xff] %v4420
          %4441 = vst [vmem:[#allocation2 + $0x20] sm:$0xff] %v4421
          %4442 = vst [vmem:[#allocation2 + $0x28] sm:$0xff] %v4422
          %4443 = vst [vmem:[#allocation2 + $0x30] sm:$0xff] %v4423
          %4444 = vst [vmem:[#allocation2 + $0x38] sm:$0xff] %v4424
          %4445 = vst [vmem:[#allocation2 + $0x40] sm:$0xff] %v4425
          %4446 = vst [vmem:[#allocation2 + $0x48] sm:$0xff] %v4426
          %4447 = vst [vmem:[#allocation2 + $0x50] sm:$0xff] %v4427
          %4448 = vst [vmem:[#allocation2 + $0x58] sm:$0xff] %v4428
          %4449 = vst [vmem:[#allocation2 + $0x60] sm:$0xff] %v4429
          %4450 = vst [vmem:[#allocation2 + $0x68] sm:$0xff] %v4430
          %4451 = vst [vmem:[#allocation2 + $0x70] sm:$0xff] %v4431
          %4452 = vst [vmem:[#allocation2 + $0x78] sm:$0xff] %v4432
        $region76: #{residual_block.1} parent=47 // pred_fallthru
          _
        %p4453 = scmp.eq.s32.totalorder %s27, 1
        // Predicated region
        $region77: #{residual_block.1} parent=47 // pred_check
          %p4454 = pneg %p4453
        $region78: #{residual_block.1} parent=47 // pred_check_branch
          %4456 = sbr.rel (%p4454) target = $region80
        $region79: #{residual_block.1} parent=47 // pred_region
          %v4457 = vld [vmem:[%s0] sm:$0xff]
          %v4458 = vld [vmem:[%s0 + $0x8] sm:$0xff]
          %v4459 = vld [vmem:[%s0 + $0x10] sm:$0xff]
          %v4460 = vld [vmem:[%s0 + $0x18] sm:$0xff]
          %v4461 = vld [vmem:[%s0 + $0x20] sm:$0xff]
          %v4462 = vld [vmem:[%s0 + $0x28] sm:$0xff]
          %v4463 = vld [vmem:[%s0 + $0x30] sm:$0xff]
          %v4464 = vld [vmem:[%s0 + $0x38] sm:$0xff]
          %v4465 = vld [vmem:[%s0 + $0x40] sm:$0xff]
          %v4466 = vld [vmem:[%s0 + $0x48] sm:$0xff]
          %v4467 = vld [vmem:[%s0 + $0x50] sm:$0xff]
          %v4468 = vld [vmem:[%s0 + $0x58] sm:$0xff]
          %v4469 = vld [vmem:[%s0 + $0x60] sm:$0xff]
          %v4470 = vld [vmem:[%s0 + $0x68] sm:$0xff]
          %v4471 = vld [vmem:[%s0 + $0x70] sm:$0xff]
          %v4472 = vld [vmem:[%s0 + $0x78] sm:$0xff]
          %v4473 = vadd.f32 %v4417, %v4457
          %v4474 = vadd.f32 %v4418, %v4458
          %v4475 = vadd.f32 %v4419, %v4459
          %v4476 = vadd.f32 %v4420, %v4460
          %v4477 = vadd.f32 %v4421, %v4461
          %v4478 = vadd.f32 %v4422, %v4462
          %v4479 = vadd.f32 %v4423, %v4463
          %v4480 = vadd.f32 %v4424, %v4464
          %v4481 = vadd.f32 %v4425, %v4465
          %v4482 = vadd.f32 %v4426, %v4466
          %v4483 = vadd.f32 %v4427, %v4467
          %v4484 = vadd.f32 %v4428, %v4468
          %v4485 = vadd.f32 %v4429, %v4469
          %v4486 = vadd.f32 %v4430, %v4470
          %v4487 = vadd.f32 %v4431, %v4471
          %v4488 = vadd.f32 %v4432, %v4472
          %4489 = vst [vmem:[%s7] sm:$0xff] %v4473
          %4490 = vst [vmem:[%s7 + $0x8] sm:$0xff] %v4474
          %4491 = vst [vmem:[%s7 + $0x10] sm:$0xff] %v4475
          %4492 = vst [vmem:[%s7 + $0x18] sm:$0xff] %v4476
          %4493 = vst [vmem:[%s7 + $0x20] sm:$0xff] %v4477
          %4494 = vst [vmem:[%s7 + $0x28] sm:$0xff] %v4478
          %4495 = vst [vmem:[%s7 + $0x30] sm:$0xff] %v4479
          %4496 = vst [vmem:[%s7 + $0x38] sm:$0xff] %v4480
          %4497 = vst [vmem:[%s7 + $0x40] sm:$0xff] %v4481
          %4498 = vst [vmem:[%s7 + $0x48] sm:$0xff] %v4482
          %4499 = vst [vmem:[%s7 + $0x50] sm:$0xff] %v4483
          %4500 = vst [vmem:[%s7 + $0x58] sm:$0xff] %v4484
          %4501 = vst [vmem:[%s7 + $0x60] sm:$0xff] %v4485
          %4502 = vst [vmem:[%s7 + $0x68] sm:$0xff] %v4486
          %4503 = vst [vmem:[%s7 + $0x70] sm:$0xff] %v4487
          %4504 = vst [vmem:[%s7 + $0x78] sm:$0xff] %v4488
        $region80: #{residual_block.1} parent=47 // pred_fallthru
          _
        // Predicated region
        $region81: #{residual_block.1} parent=47 // pred_check
          %p4505 = pneg %p207
        $region82: #{residual_block.1} parent=47 // pred_check_branch
          %4507 = sbr.rel (%p4505) target = $region84
        $region83: #{residual_block.1} parent=47 // pred_region
          _
        $region84: #{residual_block.1} parent=47 // pred_fallthru
          _
        // Predicated region
        $region85: #{residual_block.1} parent=47 // pred_check
          %p4508 = pneg %p207
        $region86: #{residual_block.1} parent=47 // pred_check_branch
          %4510 = sbr.rel (%p4508) target = $region88
        $region87: #{residual_block.1} parent=47 // pred_region
          _
        $region88: #{residual_block.1} parent=47 // pred_fallthru
          _
      $region48: #{residual_block.1} parent=5 // pred_fallthru
        _
      %p4511 = scmp.le.s32.totalorder 2, %s22
      // Predicated region
      $region89: #{residual_block.1} parent=5 // pred_check
        %p4512 = pneg %p4511
      $region90: #{residual_block.1} parent=5 // pred_check_branch
        %4514 = sbr.rel (%p4512) target = $region92
      $region91: #{residual_block.1} parent=5 // pred_region
        %s4515 = ssub.s32 %s22, 2
      $region92: #{residual_block.1} parent=5 // pred_fallthru
        _
    $region6: #{residual_block.1} parent=1 // loop_footer
      %s26 = sadd.s32 1, %s22
    $region7: #{residual_block.1} parent=1 // loop_footer_branch
      %21 = sbr.rel target = $region3
    $region8: #{residual_block.1} parent=1 // loop_exit
      _
    %4516 = vsyncpa [#allocation5], 1
    %s4517 = scalar_lea.sflag [#allocation5], 1
    %4518 = vsyncpa %s4517, 1
    %4519 = vsyncpa [#allocation7], 1
    %s4520 = scalar_lea.sflag [#allocation7], 1
    %4521 = vsyncpa %s4520, 1
    %4522 = vsyncpa [#allocation10], 1
    %s4523 = scalar_lea.sflag [#allocation10], 1
    %4524 = vsyncpa %s4523, 1

</llo_original>
